<compile_context>
chip_gen: v7x
topology: tpu7x:2x2x1
jax: 0.10.0
libtpu: 0.0.40
codegen_flags: <defaults>
</compile_context>

<pallas_src>
import jax
import jax.numpy as jnp
from jax import lax
from jax.experimental import pallas as pl
from jax.experimental.pallas import tpu as pltpu


# ------------------------------ Pallas kernel -------------------------------

def _alphazero_kernel(xin_ref, stem_w_ref, stem_b_ref,
                      bw1_ref, bb1_ref, bw2_ref, bb2_ref,
                      hcw_ref, hcb_ref,
                      pfc_w0_ref, pfc_w1_ref, pfc_b_ref,
                      vfc1_w_ref, vfc1_b_ref, vfc2_w_ref, vfc2_b_ref,
                      plogit_ref, policy_ref, value_ref,
                      xpad_ref, slab_in_ref, slab_ref):
    f32, bf16 = jnp.float32, jnp.bfloat16
    BT, hp2, wp2, Cin = xin_ref.shape
    H, W = hp2 - 2, wp2 - 2
    R = H * W
    M = BT * R
    C = xpad_ref.shape[-1]
    nblk = bw1_ref.shape[0]

    def fill_slab(dst_ref, src_ref, csz):
        # Write the 9 shifted 3x3 windows of src_ref (BT, H+2, W+2, csz) into
        # the im2col slab dst_ref (M, 9*csz) as bf16 (one contiguous column
        # range per tap) so the whole conv is a single MXU matmul.
        for dy in range(3):
            for dx in range(3):
                t = dy * 3 + dx
                win = src_ref[:, dy:dy + H, dx:dx + W, :]
                dst_ref[:, t * csz:(t + 1) * csz] = win.reshape(M, csz).astype(bf16)

    # Zero only the padded BORDER (SAME-conv padding).  The interior is fully
    # rewritten every step before it is read, so it never needs zeroing.  This
    # is unconditional so it stays correct even when the 'parallel' grid axis
    # is split across TensorCores (program_id 0 may never run on a core).
    xpad_ref[:, 0:1, :, :] = jnp.zeros((BT, 1, W + 2, C), f32)
    xpad_ref[:, H + 1:H + 2, :, :] = jnp.zeros((BT, 1, W + 2, C), f32)
    xpad_ref[:, :, 0:1, :] = jnp.zeros((BT, H + 2, 1, C), f32)
    xpad_ref[:, :, W + 1:W + 2, :] = jnp.zeros((BT, H + 2, 1, C), f32)

    # ---- stem: conv3x3 (BN scale folded into w) + shift + ReLU -------------
    fill_slab(slab_in_ref, xin_ref, Cin)
    x_flat = jnp.maximum(
        jnp.dot(slab_in_ref[...], stem_w_ref[...], preferred_element_type=f32)
        + stem_b_ref[...], 0.0)
    xpad_ref[:, 1:H + 1, 1:W + 1, :] = x_flat.reshape(BT, H, W, C)

    # ---- residual tower (activation stays resident in VMEM) ---------------
    def block_body(b, x_prev):
        fill_slab(slab_ref, xpad_ref, C)
        h = jnp.maximum(
            jnp.dot(slab_ref[...], bw1_ref[b], preferred_element_type=f32)
            + bb1_ref[b], 0.0)
        xpad_ref[:, 1:H + 1, 1:W + 1, :] = h.reshape(BT, H, W, C)
        fill_slab(slab_ref, xpad_ref, C)
        y = jnp.maximum(
            jnp.dot(slab_ref[...], bw2_ref[b], preferred_element_type=f32)
            + bb2_ref[b] + x_prev, 0.0)
        xpad_ref[:, 1:H + 1, 1:W + 1, :] = y.reshape(BT, H, W, C)
        return y

    x_flat = lax.fori_loop(0, nblk, block_body, x_flat)

    # ---- heads: 1x1 convs (policy || value fused into one dot) ------------
    y3 = jnp.maximum(
        jnp.dot(x_flat.astype(bf16), hcw_ref[...], preferred_element_type=f32)
        + hcb_ref[...], 0.0)                 # (M, 3): [policy c0, policy c1, value]
    y3 = y3.astype(bf16).astype(f32)         # match the reference FC input rounding

    # Policy FC + value FC1: torch's NCHW-flatten Linear computed as a VPU
    # multiply against pre-tiled (M, *) weights plus a per-sample row sum.
    zp = (y3[:, 0:1] * pfc_w0_ref[...].astype(f32)
          + y3[:, 1:2] * pfc_w1_ref[...].astype(f32))   # (M, Ap) f32
    zv = y3[:, 2:3] * vfc1_w_ref[...].astype(f32)       # (M, V)  f32
    logit_rows, h1_rows = [], []
    for n in range(BT):
        sl = slice(n * R, (n + 1) * R)
        logit_rows.append(jnp.sum(zp[sl, :], axis=0, keepdims=True))
        h1_rows.append(jnp.sum(zv[sl, :], axis=0, keepdims=True))

    logits = jnp.concatenate(logit_rows, axis=0) + pfc_b_ref[...]   # (BT, Ap)
    plogit_ref[0] = logits
    mx = jnp.max(logits, axis=-1, keepdims=True)
    e = jnp.exp(logits - mx)
    policy_ref[0] = e / jnp.sum(e, axis=-1, keepdims=True)          # exact softmax

    h1 = jnp.maximum(jnp.concatenate(h1_rows, axis=0) + vfc1_b_ref[...], 0.0)
    val = jnp.dot(h1.astype(bf16), vfc2_w_ref[...],
                  preferred_element_type=f32) + vfc2_b_ref[...]
    value_ref[0] = jnp.tanh(val)


# ------------------------------ forward wrapper ------------------------------

def _pick_batch_tile(N, R, target_rows=256):
    # Largest divisor of N with BT*R <= max(target_rows, R): fill the MXU row
    # dimension without blowing up the per-step working set.
    cap = max(target_rows, R)
    bt = 1
    for d in range(1, N + 1):
        if N % d == 0 and d * R <= cap:
            bt = d
    return bt


def _tile_bytes(shape, dtype):
    s = list(shape)
    if len(s) == 0:
        s = [1, 1]
    if len(s) == 1:
        s = [1] + s
    s[-1] = -(-s[-1] // 128) * 128
    s[-2] = -(-s[-2] // 8) * 8
    n = 1
    for d in s:
        n *= int(d)
    return n * jnp.dtype(dtype).itemsize


def _resident_spec(arr):
    zeros = (0,) * arr.ndim
    return pl.BlockSpec(arr.shape, lambda n, _z=zeros: _z)


def alphazero_forward(params, state_nchw, cfg):
    N = state_nchw.shape[0]
    H, W, Cin, Chid = cfg['H'], cfg['W'], cfg['Cin'], cfg['Chid']
    A = cfg['A']
    R = H * W
    BT = _pick_batch_tile(N, R)
    M = BT * R
    f32, bf16 = jnp.float32, jnp.bfloat16

    st, blk, hc = params['stem'], params['blocks'], params['heads_conv']
    p, v = params['policy'], params['value']
    Ap = p['fc_w0'].shape[1]
    V = v['fc1_w'].shape[1]

    # NCHW -> NHWC + spatial zero-pad of the network input (tiny, one-time glue).
    x = jnp.transpose(state_nchw, (0, 2, 3, 1))
    xin = jnp.pad(x, ((0, 0), (1, 1), (1, 1), (0, 0)))

    # Pre-tile the flatten-FC weights along the fused (batch, position) rows so
    # the kernel never needs a lane-changing reshape.
    pfc_w0_t = jnp.tile(p['fc_w0'], (BT, 1))        # (M, Ap) bf16
    pfc_w1_t = jnp.tile(p['fc_w1'], (BT, 1))        # (M, Ap) bf16
    vfc1_w_t = jnp.tile(v['fc1_w'], (BT, 1))        # (M, V)  bf16

    inputs = (xin, st['w'], st['shift'],
              blk['w1'], blk['shift1'], blk['w2'], blk['shift2'],
              hc['w'], hc['shift'],
              pfc_w0_t, pfc_w1_t, p['fc_b_pad'],
              vfc1_w_t, v['fc1_b'], v['fc2_w'], v['fc2_b'])

    in_specs = [pl.BlockSpec((BT, H + 2, W + 2, Cin), lambda n: (n, 0, 0, 0))]
    in_specs += [_resident_spec(a) for a in inputs[1:]]

    out_specs = [pl.BlockSpec((1, BT, Ap), lambda n: (n, 0, 0)),
                 pl.BlockSpec((1, BT, Ap), lambda n: (n, 0, 0)),
                 pl.BlockSpec((1, BT, 1), lambda n: (n, 0, 0))]
    out_shape = (jax.ShapeDtypeStruct((N // BT, BT, Ap), f32),
                 jax.ShapeDtypeStruct((N // BT, BT, Ap), f32),
                 jax.ShapeDtypeStruct((N // BT, BT, 1), f32))

    scratch_shapes = [pltpu.VMEM((BT, H + 2, W + 2, Chid), f32),   # padded activation
                      pltpu.VMEM((M, 9 * Cin), bf16),              # stem im2col slab
                      pltpu.VMEM((M, 9 * Chid), bf16)]             # tower im2col slab

    # Explicit scoped-VMEM budget sized from the (double-buffered) footprint,
    # clamped to stay within every chip generation's physical VMEM.
    est = sum(2 * _tile_bytes(a.shape, a.dtype) for a in inputs)
    est += 2 * (2 * _tile_bytes((BT, Ap), f32) + _tile_bytes((BT, 1), f32))
    est += _tile_bytes((BT * (H + 2) * (W + 2), Chid), f32)
    est += _tile_bytes((M, 9 * Cin), bf16) + _tile_bytes((M, 9 * Chid), bf16)
    vmem_limit = int(min(64 * 2 ** 20, max(16 * 2 ** 20, 2 * est)))

    trunk = pl.pallas_call(
        _alphazero_kernel,
        out_shape=out_shape,
        grid_spec=pltpu.PrefetchScalarGridSpec(
            num_scalar_prefetch=0,
            grid=(N // BT,),
            in_specs=in_specs,
            out_specs=out_specs,
            scratch_shapes=scratch_shapes),
        compiler_params=pltpu.CompilerParams(
            dimension_semantics=("parallel",),
            vmem_limit_bytes=vmem_limit),
    )
    plog, pol, val = trunk(*inputs)

    policy_logit = plog.reshape(N, Ap)[:, :A]
    policy = pol.reshape(N, Ap)[:, :A]
    value = val.reshape(N, 1)
    return {'policy_logit': policy_logit, 'policy': policy, 'value': value}


# ------------------------------- parameters ---------------------------------

def build_params(key, cfg):
    Cin, Chid = cfg['Cin'], cfg['Chid']
    H, W, A, V, nblk = cfg['H'], cfg['W'], cfg['A'], cfg['V'], cfg['blocks']
    R = H * W
    Ap = -(-A // 128) * 128
    bf16, f32 = jnp.bfloat16, jnp.float32
    ks = iter(jax.random.split(key, 64))

    def nrm(shape, s=0.1):
        return jax.random.normal(next(ks), shape, f32) * s

    def unif(shape, lo=0.5, hi=1.5):
        return jax.random.uniform(next(ks), shape, f32, lo, hi)

    def conv3x3(cin, cout):
        w_torch = nrm((cout, cin, 3, 3))          # torch OIHW
        scale = unif((cout,))                     # folded BN scale
        shift = nrm((1, cout))                    # folded BN shift
        # Fold BN scale; reorder to im2col layout (tap-major, cin-minor, cout).
        w = jnp.transpose(w_torch * scale[:, None, None, None],
                          (2, 3, 1, 0)).reshape(9 * cin, cout)
        return w.astype(bf16), shift

    sw, sb = conv3x3(Cin, Chid)
    params = {'stem': {'w': sw, 'shift': sb}}

    w1s, b1s, w2s, b2s = [], [], [], []
    for _ in range(nblk):
        w1, b1 = conv3x3(Chid, Chid)
        w2, b2 = conv3x3(Chid, Chid)
        w1s.append(w1); b1s.append(b1); w2s.append(w2); b2s.append(b2)
    params['blocks'] = {'w1': jnp.stack(w1s), 'shift1': jnp.stack(b1s),
                        'w2': jnp.stack(w2s), 'shift2': jnp.stack(b2s)}

    # Head 1x1 convs (BN scale folded), policy (2 ch) and value (1 ch) fused.
    pconv = nrm((2, Chid, 1, 1)); pscale = unif((2,)); pshift = nrm((1, 2))
    vconv = nrm((1, Chid, 1, 1)); vscale = unif((1,)); vshift = nrm((1, 1))
    pw = (pconv.reshape(2, Chid) * pscale[:, None]).T            # (Chid, 2)
    vw = (vconv.reshape(1, Chid) * vscale[:, None]).T            # (Chid, 1)
    params['heads_conv'] = {'w': jnp.concatenate([pw, vw], axis=1).astype(bf16),
                            'shift': jnp.concatenate([pshift, vshift], axis=1)}

    # Policy FC (torch Linear(2*H*W, A); torch flatten is channel-major NCHW).
    fc_w_torch = nrm((A, 2 * R))
    fc_w_chw = fc_w_torch.T                                      # (2R, A), rows c*R + r
    fc_b = nrm((1, A))
    fc_w0 = jnp.zeros((R, Ap), f32).at[:, :A].set(fc_w_chw[:R])
    fc_w1 = jnp.zeros((R, Ap), f32).at[:, :A].set(fc_w_chw[R:])
    fc_b_pad = jnp.full((1, Ap), -1e30, f32).at[:, :A].set(fc_b)  # pads -> softmax 0
    params['policy'] = {'fc_w_chw': fc_w_chw.astype(bf16), 'fc_b': fc_b,
                        'fc_w0': fc_w0.astype(bf16), 'fc_w1': fc_w1.astype(bf16),
                        'fc_b_pad': fc_b_pad}

    # Value head (discrete_value_size == 1): fc1 + relu, fc2 + tanh.
    params['value'] = {'fc1_w': nrm((V, R)).T.astype(bf16), 'fc1_b': nrm((1, V)),
                       'fc2_w': nrm((1, V)).T.astype(bf16), 'fc2_b': nrm((1, 1))}
    return params


# ---------------------------- pure-JAX reference -----------------------------

def ref_forward(params, state_nchw, cfg):
    """Torch semantics reference: bf16 matmul operands, f32 accumulation."""
    N = state_nchw.shape[0]
    H, W, Chid = cfg['H'], cfg['W'], cfg['Chid']
    bf16, f32 = jnp.bfloat16, jnp.float32

    def mm(a, w):
        return jnp.dot(a.astype(bf16), w, preferred_element_type=f32)

    def conv3(x, w_flat, shift, res=None):
        cout = w_flat.shape[1]
        cin = w_flat.shape[0] // 9
        w = w_flat.reshape(3, 3, cin, cout)                       # HWIO
        y = lax.conv_general_dilated(x.astype(bf16), w, (1, 1), 'SAME',
                                     dimension_numbers=('NHWC', 'HWIO', 'NHWC'),
                                     preferred_element_type=f32)
        y = y + shift.reshape(1, 1, 1, cout)
        if res is not None:
            y = y + res
        return jnp.maximum(y, 0.0)

    x = jnp.transpose(state_nchw, (0, 2, 3, 1))                   # NHWC f32
    st = params['stem']
    x = conv3(x, st['w'], st['shift'])
    blk = params['blocks']
    for b in range(blk['w1'].shape[0]):
        h = conv3(x, blk['w1'][b], blk['shift1'][b])
        x = conv3(h, blk['w2'][b], blk['shift2'][b], res=x)

    hc = params['heads_conv']
    y3 = jnp.maximum(mm(x.reshape(-1, Chid), hc['w']).reshape(N, H, W, 3)
                     + hc['shift'].reshape(1, 1, 1, 3), 0.0)
    hp = y3[..., 0:2]
    hv = y3[..., 2:3]

    p = params['policy']
    hp_t = hp.transpose(0, 3, 1, 2).reshape(N, -1)                # torch NCHW flatten
    logits = mm(hp_t, p['fc_w_chw']) + p['fc_b']
    policy = jax.nn.softmax(logits, axis=1)

    v = params['value']
    hv_t = hv.transpose(0, 3, 1, 2).reshape(N, -1)
    h1 = jnp.maximum(mm(hv_t, v['fc1_w']) + v['fc1_b'], 0.0)
    val = jnp.tanh(mm(h1, v['fc2_w']) + v['fc2_b'])
    return {'policy_logit': logits, 'policy': policy, 'value': val}


# ----------------------------------- main ------------------------------------

if __name__ == "__main__":
    # Small config: 8x8 board, 4 input planes, 16 hidden channels, 2 residual
    # blocks, action_size = 8*8 + 1, value hidden = 16, discrete_value_size = 1.
    cfg = dict(Cin=4, Chid=16, H=8, W=8, A=8 * 8 + 1, V=16, blocks=2)

    key = jax.random.PRNGKey(0)
    kp, kx = jax.random.split(key)
    params = build_params(kp, cfg)
    state = jax.random.normal(kx, (2, cfg['Cin'], cfg['H'], cfg['W']), jnp.float32)

    fwd = jax.jit(lambda s: alphazero_forward(params, s, cfg))
    out = fwd(state)
    jax.block_until_ready(out)

    ref = ref_forward(params, state, cfg)
    for name in ('policy_logit', 'policy', 'value'):
        assert out[name].shape == ref[name].shape, (name, out[name].shape, ref[name].shape)
        err = float(jnp.max(jnp.abs(out[name] - ref[name])))
        assert jnp.allclose(out[name], ref[name], atol=2e-3, rtol=2e-3), (name, err)
    assert jnp.allclose(jnp.sum(out['policy'], axis=1), 1.0, atol=2e-3)

    print("KERNEL_OK")
</pallas_src>

<mosaic_0001>
module attributes {stable_mosaic.version = 11 : i64} {
  func.func @_alphazero_kernel(%arg0: i32, %arg1: memref<2x10x10x4xf32, #tpu.memory_space<vmem>>, %arg2: memref<36x16xbf16, #tpu.memory_space<vmem>>, %arg3: memref<1x16xf32, #tpu.memory_space<vmem>>, %arg4: memref<2x144x16xbf16, #tpu.memory_space<vmem>>, %arg5: memref<2x1x16xf32, #tpu.memory_space<vmem>>, %arg6: memref<2x144x16xbf16, #tpu.memory_space<vmem>>, %arg7: memref<2x1x16xf32, #tpu.memory_space<vmem>>, %arg8: memref<16x3xbf16, #tpu.memory_space<vmem>>, %arg9: memref<1x3xf32, #tpu.memory_space<vmem>>, %arg10: memref<128x128xbf16, #tpu.memory_space<vmem>>, %arg11: memref<128x128xbf16, #tpu.memory_space<vmem>>, %arg12: memref<1x128xf32, #tpu.memory_space<vmem>>, %arg13: memref<128x16xbf16, #tpu.memory_space<vmem>>, %arg14: memref<1x16xf32, #tpu.memory_space<vmem>>, %arg15: memref<16x1xbf16, #tpu.memory_space<vmem>>, %arg16: memref<1x1xf32, #tpu.memory_space<vmem>>, %arg17: memref<1x2x128xf32, #tpu.memory_space<vmem>>, %arg18: memref<1x2x128xf32, #tpu.memory_space<vmem>>, %arg19: memref<1x2x1xf32, #tpu.memory_space<vmem>>, %arg20: memref<2x10x10x16xf32, #tpu.memory_space<vmem>>, %arg21: memref<128x36xbf16, #tpu.memory_space<vmem>>, %arg22: memref<128x144xbf16, #tpu.memory_space<vmem>>) attributes {dimension_semantics = [#tpu.dimension_semantics<parallel>], iteration_bounds = array<i64: 1>, scalar_prefetch = 0 : i64, scratch_operands = 3 : i64, tpu.core_type = #tpu.core_type<tc>, window_params = [{transform_indices = @transform_0, window_bounds = array<i64: 2, 10, 10, 4>}, {pipeline_mode = #tpu.pipeline_mode<synchronous>, transform_indices = @transform_1, window_bounds = array<i64: 36, 16>}, {pipeline_mode = #tpu.pipeline_mode<synchronous>, transform_indices = @transform_2, window_bounds = array<i64: 1, 16>}, {pipeline_mode = #tpu.pipeline_mode<synchronous>, transform_indices = @transform_3, window_bounds = array<i64: 2, 144, 16>}, {pipeline_mode = #tpu.pipeline_mode<synchronous>, transform_indices = @transform_4, window_bounds = array<i64: 2, 1, 16>}, {pipeline_mode = #tpu.pipeline_mode<synchronous>, transform_indices = @transform_5, window_bounds = array<i64: 2, 144, 16>}, {pipeline_mode = #tpu.pipeline_mode<synchronous>, transform_indices = @transform_6, window_bounds = array<i64: 2, 1, 16>}, {pipeline_mode = #tpu.pipeline_mode<synchronous>, transform_indices = @transform_7, window_bounds = array<i64: 16, 3>}, {pipeline_mode = #tpu.pipeline_mode<synchronous>, transform_indices = @transform_8, window_bounds = array<i64: 1, 3>}, {pipeline_mode = #tpu.pipeline_mode<synchronous>, transform_indices = @transform_9, window_bounds = array<i64: 128, 128>}, {pipeline_mode = #tpu.pipeline_mode<synchronous>, transform_indices = @transform_10, window_bounds = array<i64: 128, 128>}, {pipeline_mode = #tpu.pipeline_mode<synchronous>, transform_indices = @transform_11, window_bounds = array<i64: 1, 128>}, {pipeline_mode = #tpu.pipeline_mode<synchronous>, transform_indices = @transform_12, window_bounds = array<i64: 128, 16>}, {pipeline_mode = #tpu.pipeline_mode<synchronous>, transform_indices = @transform_13, window_bounds = array<i64: 1, 16>}, {pipeline_mode = #tpu.pipeline_mode<synchronous>, transform_indices = @transform_14, window_bounds = array<i64: 16, 1>}, {pipeline_mode = #tpu.pipeline_mode<synchronous>, transform_indices = @transform_15, window_bounds = array<i64: 1, 1>}, {transform_indices = @transform_16, window_bounds = array<i64: 1, 2, 128>}, {transform_indices = @transform_17, window_bounds = array<i64: 1, 2, 128>}, {transform_indices = @transform_18, window_bounds = array<i64: 1, 2, 1>}]} {
    %cst = arith.constant 0.000000e+00 : f32
    %0 = vector.broadcast %cst : f32 to vector<2x1x10x16xf32>
    %c0 = arith.constant 0 : index
    %c0_0 = arith.constant 0 : index
    %c0_1 = arith.constant 0 : index
    %c0_2 = arith.constant 0 : index
    %1 = vector.load %arg20[%c0, %c0_0, %c0_1, %c0_2] : memref<2x10x10x16xf32, #tpu.memory_space<vmem>>, vector<2x1x10x16xf32>
    tpu.vector_store %arg20[%c0, %c0_0, %c0_1, %c0_2], %0 {strides = array<i32>} : memref<2x10x10x16xf32, #tpu.memory_space<vmem>>, vector<2x1x10x16xf32>,
    %cst_3 = arith.constant 0.000000e+00 : f32
    %2 = vector.broadcast %cst_3 : f32 to vector<2x1x10x16xf32>
    %c0_4 = arith.constant 0 : index
    %c9 = arith.constant 9 : index
    %c0_5 = arith.constant 0 : index
    %c0_6 = arith.constant 0 : index
    %3 = vector.load %arg20[%c0_4, %c9, %c0_5, %c0_6] : memref<2x10x10x16xf32, #tpu.memory_space<vmem>>, vector<2x1x10x16xf32>
    tpu.vector_store %arg20[%c0_4, %c9, %c0_5, %c0_6], %2 {strides = array<i32>} : memref<2x10x10x16xf32, #tpu.memory_space<vmem>>, vector<2x1x10x16xf32>,
    %cst_7 = arith.constant 0.000000e+00 : f32
    %4 = vector.broadcast %cst_7 : f32 to vector<2x10x1x16xf32>
    %c0_8 = arith.constant 0 : index
    %c0_9 = arith.constant 0 : index
    %c0_10 = arith.constant 0 : index
    %c0_11 = arith.constant 0 : index
    %5 = vector.load %arg20[%c0_8, %c0_9, %c0_10, %c0_11] : memref<2x10x10x16xf32, #tpu.memory_space<vmem>>, vector<2x10x1x16xf32>
    tpu.vector_store %arg20[%c0_8, %c0_9, %c0_10, %c0_11], %4 {strides = array<i32>} : memref<2x10x10x16xf32, #tpu.memory_space<vmem>>, vector<2x10x1x16xf32>,
    %cst_12 = arith.constant 0.000000e+00 : f32
    %6 = vector.broadcast %cst_12 : f32 to vector<2x10x1x16xf32>
    %c0_13 = arith.constant 0 : index
    %c0_14 = arith.constant 0 : index
    %c9_15 = arith.constant 9 : index
    %c0_16 = arith.constant 0 : index
    %7 = vector.load %arg20[%c0_13, %c0_14, %c9_15, %c0_16] : memref<2x10x10x16xf32, #tpu.memory_space<vmem>>, vector<2x10x1x16xf32>
    tpu.vector_store %arg20[%c0_13, %c0_14, %c9_15, %c0_16], %6 {strides = array<i32>} : memref<2x10x10x16xf32, #tpu.memory_space<vmem>>, vector<2x10x1x16xf32>,
    %c0_17 = arith.constant 0 : index
    %c0_18 = arith.constant 0 : index
    %c0_19 = arith.constant 0 : index
    %c0_20 = arith.constant 0 : index
    %8 = vector.load %arg1[%c0_17, %c0_18, %c0_19, %c0_20] : memref<2x10x10x4xf32, #tpu.memory_space<vmem>>, vector<2x8x8x4xf32>
    %9 = vector.shape_cast %8 : vector<2x8x8x4xf32> to vector<128x4xf32>
    %10 = arith.truncf %9 : vector<128x4xf32> to vector<128x4xbf16>
    %c0_21 = arith.constant 0 : index
    %c0_22 = arith.constant 0 : index
    %11 = vector.load %arg21[%c0_21, %c0_22] : memref<128x36xbf16, #tpu.memory_space<vmem>>, vector<128x4xbf16>
    tpu.vector_store %arg21[%c0_21, %c0_22], %10 {strides = array<i32>} : memref<128x36xbf16, #tpu.memory_space<vmem>>, vector<128x4xbf16>,
    %c0_23 = arith.constant 0 : index
    %c0_24 = arith.constant 0 : index
    %c1 = arith.constant 1 : index
    %c0_25 = arith.constant 0 : index
    %12 = vector.load %arg1[%c0_23, %c0_24, %c1, %c0_25] : memref<2x10x10x4xf32, #tpu.memory_space<vmem>>, vector<2x8x8x4xf32>
    %13 = vector.shape_cast %12 : vector<2x8x8x4xf32> to vector<128x4xf32>
    %14 = arith.truncf %13 : vector<128x4xf32> to vector<128x4xbf16>
    %c0_26 = arith.constant 0 : index
    %c4 = arith.constant 4 : index
    %15 = vector.load %arg21[%c0_26, %c4] : memref<128x36xbf16, #tpu.memory_space<vmem>>, vector<128x4xbf16>
    tpu.vector_store %arg21[%c0_26, %c4], %14 {strides = array<i32>} : memref<128x36xbf16, #tpu.memory_space<vmem>>, vector<128x4xbf16>,
    %c0_27 = arith.constant 0 : index
    %c0_28 = arith.constant 0 : index
    %c2 = arith.constant 2 : index
    %c0_29 = arith.constant 0 : index
    %16 = vector.load %arg1[%c0_27, %c0_28, %c2, %c0_29] : memref<2x10x10x4xf32, #tpu.memory_space<vmem>>, vector<2x8x8x4xf32>
    %17 = vector.shape_cast %16 : vector<2x8x8x4xf32> to vector<128x4xf32>
    %18 = arith.truncf %17 : vector<128x4xf32> to vector<128x4xbf16>
    %c0_30 = arith.constant 0 : index
    %c8 = arith.constant 8 : index
    %19 = vector.load %arg21[%c0_30, %c8] : memref<128x36xbf16, #tpu.memory_space<vmem>>, vector<128x4xbf16>
    tpu.vector_store %arg21[%c0_30, %c8], %18 {strides = array<i32>} : memref<128x36xbf16, #tpu.memory_space<vmem>>, vector<128x4xbf16>,
    %c0_31 = arith.constant 0 : index
    %c1_32 = arith.constant 1 : index
    %c0_33 = arith.constant 0 : index
    %c0_34 = arith.constant 0 : index
    %20 = vector.load %arg1[%c0_31, %c1_32, %c0_33, %c0_34] : memref<2x10x10x4xf32, #tpu.memory_space<vmem>>, vector<2x8x8x4xf32>
    %21 = vector.shape_cast %20 : vector<2x8x8x4xf32> to vector<128x4xf32>
    %22 = arith.truncf %21 : vector<128x4xf32> to vector<128x4xbf16>
    %c0_35 = arith.constant 0 : index
    %c12 = arith.constant 12 : index
    %23 = vector.load %arg21[%c0_35, %c12] : memref<128x36xbf16, #tpu.memory_space<vmem>>, vector<128x4xbf16>
    tpu.vector_store %arg21[%c0_35, %c12], %22 {strides = array<i32>} : memref<128x36xbf16, #tpu.memory_space<vmem>>, vector<128x4xbf16>,
    %c0_36 = arith.constant 0 : index
    %c1_37 = arith.constant 1 : index
    %c1_38 = arith.constant 1 : index
    %c0_39 = arith.constant 0 : index
    %24 = vector.load %arg1[%c0_36, %c1_37, %c1_38, %c0_39] : memref<2x10x10x4xf32, #tpu.memory_space<vmem>>, vector<2x8x8x4xf32>
    %25 = vector.shape_cast %24 : vector<2x8x8x4xf32> to vector<128x4xf32>
    %26 = arith.truncf %25 : vector<128x4xf32> to vector<128x4xbf16>
    %c0_40 = arith.constant 0 : index
    %c16 = arith.constant 16 : index
    %27 = vector.load %arg21[%c0_40, %c16] : memref<128x36xbf16, #tpu.memory_space<vmem>>, vector<128x4xbf16>
    tpu.vector_store %arg21[%c0_40, %c16], %26 {strides = array<i32>} : memref<128x36xbf16, #tpu.memory_space<vmem>>, vector<128x4xbf16>,
    %c0_41 = arith.constant 0 : index
    %c1_42 = arith.constant 1 : index
    %c2_43 = arith.constant 2 : index
    %c0_44 = arith.constant 0 : index
    %28 = vector.load %arg1[%c0_41, %c1_42, %c2_43, %c0_44] : memref<2x10x10x4xf32, #tpu.memory_space<vmem>>, vector<2x8x8x4xf32>
    %29 = vector.shape_cast %28 : vector<2x8x8x4xf32> to vector<128x4xf32>
    %30 = arith.truncf %29 : vector<128x4xf32> to vector<128x4xbf16>
    %c0_45 = arith.constant 0 : index
    %c20 = arith.constant 20 : index
    %31 = vector.load %arg21[%c0_45, %c20] : memref<128x36xbf16, #tpu.memory_space<vmem>>, vector<128x4xbf16>
    tpu.vector_store %arg21[%c0_45, %c20], %30 {strides = array<i32>} : memref<128x36xbf16, #tpu.memory_space<vmem>>, vector<128x4xbf16>,
    %c0_46 = arith.constant 0 : index
    %c2_47 = arith.constant 2 : index
    %c0_48 = arith.constant 0 : index
    %c0_49 = arith.constant 0 : index
    %32 = vector.load %arg1[%c0_46, %c2_47, %c0_48, %c0_49] : memref<2x10x10x4xf32, #tpu.memory_space<vmem>>, vector<2x8x8x4xf32>
    %33 = vector.shape_cast %32 : vector<2x8x8x4xf32> to vector<128x4xf32>
    %34 = arith.truncf %33 : vector<128x4xf32> to vector<128x4xbf16>
    %c0_50 = arith.constant 0 : index
    %c24 = arith.constant 24 : index
    %35 = vector.load %arg21[%c0_50, %c24] : memref<128x36xbf16, #tpu.memory_space<vmem>>, vector<128x4xbf16>
    tpu.vector_store %arg21[%c0_50, %c24], %34 {strides = array<i32>} : memref<128x36xbf16, #tpu.memory_space<vmem>>, vector<128x4xbf16>,
    %c0_51 = arith.constant 0 : index
    %c2_52 = arith.constant 2 : index
    %c1_53 = arith.constant 1 : index
    %c0_54 = arith.constant 0 : index
    %36 = vector.load %arg1[%c0_51, %c2_52, %c1_53, %c0_54] : memref<2x10x10x4xf32, #tpu.memory_space<vmem>>, vector<2x8x8x4xf32>
    %37 = vector.shape_cast %36 : vector<2x8x8x4xf32> to vector<128x4xf32>
    %38 = arith.truncf %37 : vector<128x4xf32> to vector<128x4xbf16>
    %c0_55 = arith.constant 0 : index
    %c28 = arith.constant 28 : index
    %39 = vector.load %arg21[%c0_55, %c28] : memref<128x36xbf16, #tpu.memory_space<vmem>>, vector<128x4xbf16>
    tpu.vector_store %arg21[%c0_55, %c28], %38 {strides = array<i32>} : memref<128x36xbf16, #tpu.memory_space<vmem>>, vector<128x4xbf16>,
    %c0_56 = arith.constant 0 : index
    %c2_57 = arith.constant 2 : index
    %c2_58 = arith.constant 2 : index
    %c0_59 = arith.constant 0 : index
    %40 = vector.load %arg1[%c0_56, %c2_57, %c2_58, %c0_59] : memref<2x10x10x4xf32, #tpu.memory_space<vmem>>, vector<2x8x8x4xf32>
    %41 = vector.shape_cast %40 : vector<2x8x8x4xf32> to vector<128x4xf32>
    %42 = arith.truncf %41 : vector<128x4xf32> to vector<128x4xbf16>
    %c0_60 = arith.constant 0 : index
    %c32 = arith.constant 32 : index
    %43 = vector.load %arg21[%c0_60, %c32] : memref<128x36xbf16, #tpu.memory_space<vmem>>, vector<128x4xbf16>
    tpu.vector_store %arg21[%c0_60, %c32], %42 {strides = array<i32>} : memref<128x36xbf16, #tpu.memory_space<vmem>>, vector<128x4xbf16>,
    %c0_61 = arith.constant 0 : index
    %c0_62 = arith.constant 0 : index
    %44 = vector.load %arg21[%c0_61, %c0_62] : memref<128x36xbf16, #tpu.memory_space<vmem>>, vector<128x36xbf16>
    %c0_63 = arith.constant 0 : index
    %c0_64 = arith.constant 0 : index
    %45 = vector.load %arg2[%c0_63, %c0_64] : memref<36x16xbf16, #tpu.memory_space<vmem>>, vector<36x16xbf16>
    %cst_65 = arith.constant dense<0.000000e+00> : vector<128x16xf32>
    %46 = tpu.matmul %44, %45, %cst_65 {dimension_numbers = #tpu.dot_dimension_numbers<[1], [0], [0], [1], [0, 0, 1, 1], [], []>} : vector<128x36xbf16>, vector<36x16xbf16>, vector<128x16xf32> -> vector<128x16xf32>
    %c0_66 = arith.constant 0 : index
    %c0_67 = arith.constant 0 : index
    %47 = vector.load %arg3[%c0_66, %c0_67] : memref<1x16xf32, #tpu.memory_space<vmem>>, vector<1x16xf32>
    %48 = vector.broadcast %47 : vector<1x16xf32> to vector<128x16xf32>
    %49 = arith.addf %46, %48 : vector<128x16xf32>
    %cst_68 = arith.constant 0.000000e+00 : f32
    %50 = vector.broadcast %cst_68 : f32 to vector<128x16xf32>
    %51 = arith.maximumf %49, %50 : vector<128x16xf32>
    %52 = vector.shape_cast %51 : vector<128x16xf32> to vector<2x8x8x16xf32>
    %c0_69 = arith.constant 0 : index
    %c1_70 = arith.constant 1 : index
    %c1_71 = arith.constant 1 : index
    %c0_72 = arith.constant 0 : index
    %53 = vector.load %arg20[%c0_69, %c1_70, %c1_71, %c0_72] : memref<2x10x10x16xf32, #tpu.memory_space<vmem>>, vector<2x8x8x16xf32>
    tpu.vector_store %arg20[%c0_69, %c1_70, %c1_71, %c0_72], %52 {strides = array<i32>} : memref<2x10x10x16xf32, #tpu.memory_space<vmem>>, vector<2x8x8x16xf32>,
    %c0_i32 = arith.constant 0 : i32
    %c2_i32 = arith.constant 2 : i32
    %54 = arith.addi %c0_i32, %c2_i32 : i32
    %c1_i32 = arith.constant 1 : i32
    %55 = scf.for %arg23 = %c0_i32 to %54 step %c1_i32 iter_args(%arg24 = %51) -> (vector<128x16xf32>)  : i32 {
      %c0_111 = arith.constant 0 : index
      %c0_112 = arith.constant 0 : index
      %c0_113 = arith.constant 0 : index
      %c0_114 = arith.constant 0 : index
      %129 = vector.load %arg20[%c0_111, %c0_112, %c0_113, %c0_114] : memref<2x10x10x16xf32, #tpu.memory_space<vmem>>, vector<2x8x8x16xf32>
      %130 = vector.shape_cast %129 : vector<2x8x8x16xf32> to vector<128x16xf32>
      %131 = arith.truncf %130 : vector<128x16xf32> to vector<128x16xbf16>
      %c0_115 = arith.constant 0 : index
      %c0_116 = arith.constant 0 : index
      %132 = vector.load %arg22[%c0_115, %c0_116] : memref<128x144xbf16, #tpu.memory_space<vmem>>, vector<128x16xbf16>
      tpu.vector_store %arg22[%c0_115, %c0_116], %131 {strides = array<i32>} : memref<128x144xbf16, #tpu.memory_space<vmem>>, vector<128x16xbf16>,
      %c0_117 = arith.constant 0 : index
      %c0_118 = arith.constant 0 : index
      %c1_119 = arith.constant 1 : index
      %c0_120 = arith.constant 0 : index
      %133 = vector.load %arg20[%c0_117, %c0_118, %c1_119, %c0_120] : memref<2x10x10x16xf32, #tpu.memory_space<vmem>>, vector<2x8x8x16xf32>
      %134 = vector.shape_cast %133 : vector<2x8x8x16xf32> to vector<128x16xf32>
      %135 = arith.truncf %134 : vector<128x16xf32> to vector<128x16xbf16>
      %c0_121 = arith.constant 0 : index
      %c16_122 = arith.constant 16 : index
      %136 = vector.load %arg22[%c0_121, %c16_122] : memref<128x144xbf16, #tpu.memory_space<vmem>>, vector<128x16xbf16>
      tpu.vector_store %arg22[%c0_121, %c16_122], %135 {strides = array<i32>} : memref<128x144xbf16, #tpu.memory_space<vmem>>, vector<128x16xbf16>,
      %c0_123 = arith.constant 0 : index
      %c0_124 = arith.constant 0 : index
      %c2_125 = arith.constant 2 : index
      %c0_126 = arith.constant 0 : index
      %137 = vector.load %arg20[%c0_123, %c0_124, %c2_125, %c0_126] : memref<2x10x10x16xf32, #tpu.memory_space<vmem>>, vector<2x8x8x16xf32>
      %138 = vector.shape_cast %137 : vector<2x8x8x16xf32> to vector<128x16xf32>
      %139 = arith.truncf %138 : vector<128x16xf32> to vector<128x16xbf16>
      %c0_127 = arith.constant 0 : index
      %c32_128 = arith.constant 32 : index
      %140 = vector.load %arg22[%c0_127, %c32_128] : memref<128x144xbf16, #tpu.memory_space<vmem>>, vector<128x16xbf16>
      tpu.vector_store %arg22[%c0_127, %c32_128], %139 {strides = array<i32>} : memref<128x144xbf16, #tpu.memory_space<vmem>>, vector<128x16xbf16>,
      %c0_129 = arith.constant 0 : index
      %c1_130 = arith.constant 1 : index
      %c0_131 = arith.constant 0 : index
      %c0_132 = arith.constant 0 : index
      %141 = vector.load %arg20[%c0_129, %c1_130, %c0_131, %c0_132] : memref<2x10x10x16xf32, #tpu.memory_space<vmem>>, vector<2x8x8x16xf32>
      %142 = vector.shape_cast %141 : vector<2x8x8x16xf32> to vector<128x16xf32>
      %143 = arith.truncf %142 : vector<128x16xf32> to vector<128x16xbf16>
      %c0_133 = arith.constant 0 : index
      %c48 = arith.constant 48 : index
      %144 = vector.load %arg22[%c0_133, %c48] : memref<128x144xbf16, #tpu.memory_space<vmem>>, vector<128x16xbf16>
      tpu.vector_store %arg22[%c0_133, %c48], %143 {strides = array<i32>} : memref<128x144xbf16, #tpu.memory_space<vmem>>, vector<128x16xbf16>,
      %c0_134 = arith.constant 0 : index
      %c1_135 = arith.constant 1 : index
      %c1_136 = arith.constant 1 : index
      %c0_137 = arith.constant 0 : index
      %145 = vector.load %arg20[%c0_134, %c1_135, %c1_136, %c0_137] : memref<2x10x10x16xf32, #tpu.memory_space<vmem>>, vector<2x8x8x16xf32>
      %146 = vector.shape_cast %145 : vector<2x8x8x16xf32> to vector<128x16xf32>
      %147 = arith.truncf %146 : vector<128x16xf32> to vector<128x16xbf16>
      %c0_138 = arith.constant 0 : index
      %c64 = arith.constant 64 : index
      %148 = vector.load %arg22[%c0_138, %c64] : memref<128x144xbf16, #tpu.memory_space<vmem>>, vector<128x16xbf16>
      tpu.vector_store %arg22[%c0_138, %c64], %147 {strides = array<i32>} : memref<128x144xbf16, #tpu.memory_space<vmem>>, vector<128x16xbf16>,
      %c0_139 = arith.constant 0 : index
      %c1_140 = arith.constant 1 : index
      %c2_141 = arith.constant 2 : index
      %c0_142 = arith.constant 0 : index
      %149 = vector.load %arg20[%c0_139, %c1_140, %c2_141, %c0_142] : memref<2x10x10x16xf32, #tpu.memory_space<vmem>>, vector<2x8x8x16xf32>
      %150 = vector.shape_cast %149 : vector<2x8x8x16xf32> to vector<128x16xf32>
      %151 = arith.truncf %150 : vector<128x16xf32> to vector<128x16xbf16>
      %c0_143 = arith.constant 0 : index
      %c80 = arith.constant 80 : index
      %152 = vector.load %arg22[%c0_143, %c80] : memref<128x144xbf16, #tpu.memory_space<vmem>>, vector<128x16xbf16>
      tpu.vector_store %arg22[%c0_143, %c80], %151 {strides = array<i32>} : memref<128x144xbf16, #tpu.memory_space<vmem>>, vector<128x16xbf16>,
      %c0_144 = arith.constant 0 : index
      %c2_145 = arith.constant 2 : index
      %c0_146 = arith.constant 0 : index
      %c0_147 = arith.constant 0 : index
      %153 = vector.load %arg20[%c0_144, %c2_145, %c0_146, %c0_147] : memref<2x10x10x16xf32, #tpu.memory_space<vmem>>, vector<2x8x8x16xf32>
      %154 = vector.shape_cast %153 : vector<2x8x8x16xf32> to vector<128x16xf32>
      %155 = arith.truncf %154 : vector<128x16xf32> to vector<128x16xbf16>
      %c0_148 = arith.constant 0 : index
      %c96 = arith.constant 96 : index
      %156 = vector.load %arg22[%c0_148, %c96] : memref<128x144xbf16, #tpu.memory_space<vmem>>, vector<128x16xbf16>
      tpu.vector_store %arg22[%c0_148, %c96], %155 {strides = array<i32>} : memref<128x144xbf16, #tpu.memory_space<vmem>>, vector<128x16xbf16>,
      %c0_149 = arith.constant 0 : index
      %c2_150 = arith.constant 2 : index
      %c1_151 = arith.constant 1 : index
      %c0_152 = arith.constant 0 : index
      %157 = vector.load %arg20[%c0_149, %c2_150, %c1_151, %c0_152] : memref<2x10x10x16xf32, #tpu.memory_space<vmem>>, vector<2x8x8x16xf32>
      %158 = vector.shape_cast %157 : vector<2x8x8x16xf32> to vector<128x16xf32>
      %159 = arith.truncf %158 : vector<128x16xf32> to vector<128x16xbf16>
      %c0_153 = arith.constant 0 : index
      %c112 = arith.constant 112 : index
      %160 = vector.load %arg22[%c0_153, %c112] : memref<128x144xbf16, #tpu.memory_space<vmem>>, vector<128x16xbf16>
      tpu.vector_store %arg22[%c0_153, %c112], %159 {strides = array<i32>} : memref<128x144xbf16, #tpu.memory_space<vmem>>, vector<128x16xbf16>,
      %c0_154 = arith.constant 0 : index
      %c2_155 = arith.constant 2 : index
      %c2_156 = arith.constant 2 : index
      %c0_157 = arith.constant 0 : index
      %161 = vector.load %arg20[%c0_154, %c2_155, %c2_156, %c0_157] : memref<2x10x10x16xf32, #tpu.memory_space<vmem>>, vector<2x8x8x16xf32>
      %162 = vector.shape_cast %161 : vector<2x8x8x16xf32> to vector<128x16xf32>
      %163 = arith.truncf %162 : vector<128x16xf32> to vector<128x16xbf16>
      %c0_158 = arith.constant 0 : index
      %c128 = arith.constant 128 : index
      %164 = vector.load %arg22[%c0_158, %c128] : memref<128x144xbf16, #tpu.memory_space<vmem>>, vector<128x16xbf16>
      tpu.vector_store %arg22[%c0_158, %c128], %163 {strides = array<i32>} : memref<128x144xbf16, #tpu.memory_space<vmem>>, vector<128x16xbf16>,
      %c0_159 = arith.constant 0 : index
      %c0_160 = arith.constant 0 : index
      %165 = vector.load %arg22[%c0_159, %c0_160] : memref<128x144xbf16, #tpu.memory_space<vmem>>, vector<128x144xbf16>
      %166 = arith.index_cast %arg23 : i32 to index
      %c0_161 = arith.constant 0 : index
      %c0_162 = arith.constant 0 : index
      %167 = vector.load %arg4[%166, %c0_161, %c0_162] : memref<2x144x16xbf16, #tpu.memory_space<vmem>>, vector<1x144x16xbf16>
      %168 = vector.shape_cast %167 : vector<1x144x16xbf16> to vector<144x16xbf16>
      %cst_163 = arith.constant dense<0.000000e+00> : vector<128x16xf32>
      %169 = tpu.matmul %165, %168, %cst_163 {dimension_numbers = #tpu.dot_dimension_numbers<[1], [0], [0], [1], [0, 0, 1, 1], [], []>} : vector<128x144xbf16>, vector<144x16xbf16>, vector<128x16xf32> -> vector<128x16xf32>
      %170 = arith.index_cast %arg23 : i32 to index
      %c0_164 = arith.constant 0 : index
      %c0_165 = arith.constant 0 : index
      %171 = vector.load %arg5[%170, %c0_164, %c0_165] : memref<2x1x16xf32, #tpu.memory_space<vmem>>, vector<1x1x16xf32>
      %172 = vector.shape_cast %171 : vector<1x1x16xf32> to vector<1x16xf32>
      %173 = vector.broadcast %172 : vector<1x16xf32> to vector<128x16xf32>
      %174 = arith.addf %169, %173 : vector<128x16xf32>
      %cst_166 = arith.constant 0.000000e+00 : f32
      %175 = vector.broadcast %cst_166 : f32 to vector<128x16xf32>
      %176 = arith.maximumf %174, %175 : vector<128x16xf32>
      %177 = vector.shape_cast %176 : vector<128x16xf32> to vector<2x8x8x16xf32>
      %c0_167 = arith.constant 0 : index
      %c1_168 = arith.constant 1 : index
      %c1_169 = arith.constant 1 : index
      %c0_170 = arith.constant 0 : index
      %178 = vector.load %arg20[%c0_167, %c1_168, %c1_169, %c0_170] : memref<2x10x10x16xf32, #tpu.memory_space<vmem>>, vector<2x8x8x16xf32>
      tpu.vector_store %arg20[%c0_167, %c1_168, %c1_169, %c0_170], %177 {strides = array<i32>} : memref<2x10x10x16xf32, #tpu.memory_space<vmem>>, vector<2x8x8x16xf32>,
      %c0_171 = arith.constant 0 : index
      %c0_172 = arith.constant 0 : index
      %c0_173 = arith.constant 0 : index
      %c0_174 = arith.constant 0 : index
      %179 = vector.load %arg20[%c0_171, %c0_172, %c0_173, %c0_174] : memref<2x10x10x16xf32, #tpu.memory_space<vmem>>, vector<2x8x8x16xf32>
      %180 = vector.shape_cast %179 : vector<2x8x8x16xf32> to vector<128x16xf32>
      %181 = arith.truncf %180 : vector<128x16xf32> to vector<128x16xbf16>
      %c0_175 = arith.constant 0 : index
      %c0_176 = arith.constant 0 : index
      %182 = vector.load %arg22[%c0_175, %c0_176] : memref<128x144xbf16, #tpu.memory_space<vmem>>, vector<128x16xbf16>
      tpu.vector_store %arg22[%c0_175, %c0_176], %181 {strides = array<i32>} : memref<128x144xbf16, #tpu.memory_space<vmem>>, vector<128x16xbf16>,
      %c0_177 = arith.constant 0 : index
      %c0_178 = arith.constant 0 : index
      %c1_179 = arith.constant 1 : index
      %c0_180 = arith.constant 0 : index
      %183 = vector.load %arg20[%c0_177, %c0_178, %c1_179, %c0_180] : memref<2x10x10x16xf32, #tpu.memory_space<vmem>>, vector<2x8x8x16xf32>
      %184 = vector.shape_cast %183 : vector<2x8x8x16xf32> to vector<128x16xf32>
      %185 = arith.truncf %184 : vector<128x16xf32> to vector<128x16xbf16>
      %c0_181 = arith.constant 0 : index
      %c16_182 = arith.constant 16 : index
      %186 = vector.load %arg22[%c0_181, %c16_182] : memref<128x144xbf16, #tpu.memory_space<vmem>>, vector<128x16xbf16>
      tpu.vector_store %arg22[%c0_181, %c16_182], %185 {strides = array<i32>} : memref<128x144xbf16, #tpu.memory_space<vmem>>, vector<128x16xbf16>,
      %c0_183 = arith.constant 0 : index
      %c0_184 = arith.constant 0 : index
      %c2_185 = arith.constant 2 : index
      %c0_186 = arith.constant 0 : index
      %187 = vector.load %arg20[%c0_183, %c0_184, %c2_185, %c0_186] : memref<2x10x10x16xf32, #tpu.memory_space<vmem>>, vector<2x8x8x16xf32>
      %188 = vector.shape_cast %187 : vector<2x8x8x16xf32> to vector<128x16xf32>
      %189 = arith.truncf %188 : vector<128x16xf32> to vector<128x16xbf16>
      %c0_187 = arith.constant 0 : index
      %c32_188 = arith.constant 32 : index
      %190 = vector.load %arg22[%c0_187, %c32_188] : memref<128x144xbf16, #tpu.memory_space<vmem>>, vector<128x16xbf16>
      tpu.vector_store %arg22[%c0_187, %c32_188], %189 {strides = array<i32>} : memref<128x144xbf16, #tpu.memory_space<vmem>>, vector<128x16xbf16>,
      %c0_189 = arith.constant 0 : index
      %c1_190 = arith.constant 1 : index
      %c0_191 = arith.constant 0 : index
      %c0_192 = arith.constant 0 : index
      %191 = vector.load %arg20[%c0_189, %c1_190, %c0_191, %c0_192] : memref<2x10x10x16xf32, #tpu.memory_space<vmem>>, vector<2x8x8x16xf32>
      %192 = vector.shape_cast %191 : vector<2x8x8x16xf32> to vector<128x16xf32>
      %193 = arith.truncf %192 : vector<128x16xf32> to vector<128x16xbf16>
      %c0_193 = arith.constant 0 : index
      %c48_194 = arith.constant 48 : index
      %194 = vector.load %arg22[%c0_193, %c48_194] : memref<128x144xbf16, #tpu.memory_space<vmem>>, vector<128x16xbf16>
      tpu.vector_store %arg22[%c0_193, %c48_194], %193 {strides = array<i32>} : memref<128x144xbf16, #tpu.memory_space<vmem>>, vector<128x16xbf16>,
      %c0_195 = arith.constant 0 : index
      %c1_196 = arith.constant 1 : index
      %c1_197 = arith.constant 1 : index
      %c0_198 = arith.constant 0 : index
      %195 = vector.load %arg20[%c0_195, %c1_196, %c1_197, %c0_198] : memref<2x10x10x16xf32, #tpu.memory_space<vmem>>, vector<2x8x8x16xf32>
      %196 = vector.shape_cast %195 : vector<2x8x8x16xf32> to vector<128x16xf32>
      %197 = arith.truncf %196 : vector<128x16xf32> to vector<128x16xbf16>
      %c0_199 = arith.constant 0 : index
      %c64_200 = arith.constant 64 : index
      %198 = vector.load %arg22[%c0_199, %c64_200] : memref<128x144xbf16, #tpu.memory_space<vmem>>, vector<128x16xbf16>
      tpu.vector_store %arg22[%c0_199, %c64_200], %197 {strides = array<i32>} : memref<128x144xbf16, #tpu.memory_space<vmem>>, vector<128x16xbf16>,
      %c0_201 = arith.constant 0 : index
      %c1_202 = arith.constant 1 : index
      %c2_203 = arith.constant 2 : index
      %c0_204 = arith.constant 0 : index
      %199 = vector.load %arg20[%c0_201, %c1_202, %c2_203, %c0_204] : memref<2x10x10x16xf32, #tpu.memory_space<vmem>>, vector<2x8x8x16xf32>
      %200 = vector.shape_cast %199 : vector<2x8x8x16xf32> to vector<128x16xf32>
      %201 = arith.truncf %200 : vector<128x16xf32> to vector<128x16xbf16>
      %c0_205 = arith.constant 0 : index
      %c80_206 = arith.constant 80 : index
      %202 = vector.load %arg22[%c0_205, %c80_206] : memref<128x144xbf16, #tpu.memory_space<vmem>>, vector<128x16xbf16>
      tpu.vector_store %arg22[%c0_205, %c80_206], %201 {strides = array<i32>} : memref<128x144xbf16, #tpu.memory_space<vmem>>, vector<128x16xbf16>,
      %c0_207 = arith.constant 0 : index
      %c2_208 = arith.constant 2 : index
      %c0_209 = arith.constant 0 : index
      %c0_210 = arith.constant 0 : index
      %203 = vector.load %arg20[%c0_207, %c2_208, %c0_209, %c0_210] : memref<2x10x10x16xf32, #tpu.memory_space<vmem>>, vector<2x8x8x16xf32>
      %204 = vector.shape_cast %203 : vector<2x8x8x16xf32> to vector<128x16xf32>
      %205 = arith.truncf %204 : vector<128x16xf32> to vector<128x16xbf16>
      %c0_211 = arith.constant 0 : index
      %c96_212 = arith.constant 96 : index
      %206 = vector.load %arg22[%c0_211, %c96_212] : memref<128x144xbf16, #tpu.memory_space<vmem>>, vector<128x16xbf16>
      tpu.vector_store %arg22[%c0_211, %c96_212], %205 {strides = array<i32>} : memref<128x144xbf16, #tpu.memory_space<vmem>>, vector<128x16xbf16>,
      %c0_213 = arith.constant 0 : index
      %c2_214 = arith.constant 2 : index
      %c1_215 = arith.constant 1 : index
      %c0_216 = arith.constant 0 : index
      %207 = vector.load %arg20[%c0_213, %c2_214, %c1_215, %c0_216] : memref<2x10x10x16xf32, #tpu.memory_space<vmem>>, vector<2x8x8x16xf32>
      %208 = vector.shape_cast %207 : vector<2x8x8x16xf32> to vector<128x16xf32>
      %209 = arith.truncf %208 : vector<128x16xf32> to vector<128x16xbf16>
      %c0_217 = arith.constant 0 : index
      %c112_218 = arith.constant 112 : index
      %210 = vector.load %arg22[%c0_217, %c112_218] : memref<128x144xbf16, #tpu.memory_space<vmem>>, vector<128x16xbf16>
      tpu.vector_store %arg22[%c0_217, %c112_218], %209 {strides = array<i32>} : memref<128x144xbf16, #tpu.memory_space<vmem>>, vector<128x16xbf16>,
      %c0_219 = arith.constant 0 : index
      %c2_220 = arith.constant 2 : index
      %c2_221 = arith.constant 2 : index
      %c0_222 = arith.constant 0 : index
      %211 = vector.load %arg20[%c0_219, %c2_220, %c2_221, %c0_222] : memref<2x10x10x16xf32, #tpu.memory_space<vmem>>, vector<2x8x8x16xf32>
      %212 = vector.shape_cast %211 : vector<2x8x8x16xf32> to vector<128x16xf32>
      %213 = arith.truncf %212 : vector<128x16xf32> to vector<128x16xbf16>
      %c0_223 = arith.constant 0 : index
      %c128_224 = arith.constant 128 : index
      %214 = vector.load %arg22[%c0_223, %c128_224] : memref<128x144xbf16, #tpu.memory_space<vmem>>, vector<128x16xbf16>
      tpu.vector_store %arg22[%c0_223, %c128_224], %213 {strides = array<i32>} : memref<128x144xbf16, #tpu.memory_space<vmem>>, vector<128x16xbf16>,
      %c0_225 = arith.constant 0 : index
      %c0_226 = arith.constant 0 : index
      %215 = vector.load %arg22[%c0_225, %c0_226] : memref<128x144xbf16, #tpu.memory_space<vmem>>, vector<128x144xbf16>
      %216 = arith.index_cast %arg23 : i32 to index
      %c0_227 = arith.constant 0 : index
      %c0_228 = arith.constant 0 : index
      %217 = vector.load %arg6[%216, %c0_227, %c0_228] : memref<2x144x16xbf16, #tpu.memory_space<vmem>>, vector<1x144x16xbf16>
      %218 = vector.shape_cast %217 : vector<1x144x16xbf16> to vector<144x16xbf16>
      %cst_229 = arith.constant dense<0.000000e+00> : vector<128x16xf32>
      %219 = tpu.matmul %215, %218, %cst_229 {dimension_numbers = #tpu.dot_dimension_numbers<[1], [0], [0], [1], [0, 0, 1, 1], [], []>} : vector<128x144xbf16>, vector<144x16xbf16>, vector<128x16xf32> -> vector<128x16xf32>
      %220 = arith.index_cast %arg23 : i32 to index
      %c0_230 = arith.constant 0 : index
      %c0_231 = arith.constant 0 : index
      %221 = vector.load %arg7[%220, %c0_230, %c0_231] : memref<2x1x16xf32, #tpu.memory_space<vmem>>, vector<1x1x16xf32>
      %222 = vector.shape_cast %221 : vector<1x1x16xf32> to vector<1x16xf32>
      %223 = vector.broadcast %222 : vector<1x16xf32> to vector<128x16xf32>
      %224 = arith.addf %219, %223 : vector<128x16xf32>
      %225 = arith.addf %224, %arg24 : vector<128x16xf32>
      %cst_232 = arith.constant 0.000000e+00 : f32
      %226 = vector.broadcast %cst_232 : f32 to vector<128x16xf32>
      %227 = arith.maximumf %225, %226 : vector<128x16xf32>
      %228 = vector.shape_cast %227 : vector<128x16xf32> to vector<2x8x8x16xf32>
      %c0_233 = arith.constant 0 : index
      %c1_234 = arith.constant 1 : index
      %c1_235 = arith.constant 1 : index
      %c0_236 = arith.constant 0 : index
      %229 = vector.load %arg20[%c0_233, %c1_234, %c1_235, %c0_236] : memref<2x10x10x16xf32, #tpu.memory_space<vmem>>, vector<2x8x8x16xf32>
      tpu.vector_store %arg20[%c0_233, %c1_234, %c1_235, %c0_236], %228 {strides = array<i32>} : memref<2x10x10x16xf32, #tpu.memory_space<vmem>>, vector<2x8x8x16xf32>,
      scf.yield %227 : vector<128x16xf32>
    }
    %c2_i32_73 = arith.constant 2 : i32
    %56 = arith.truncf %55 : vector<128x16xf32> to vector<128x16xbf16>
    %c0_74 = arith.constant 0 : index
    %c0_75 = arith.constant 0 : index
    %57 = vector.load %arg8[%c0_74, %c0_75] : memref<16x3xbf16, #tpu.memory_space<vmem>>, vector<16x3xbf16>
    %cst_76 = arith.constant dense<0.000000e+00> : vector<128x3xf32>
    %58 = tpu.matmul %56, %57, %cst_76 {dimension_numbers = #tpu.dot_dimension_numbers<[1], [0], [0], [1], [0, 0, 1, 1], [], []>} : vector<128x16xbf16>, vector<16x3xbf16>, vector<128x3xf32> -> vector<128x3xf32>
    %c0_77 = arith.constant 0 : index
    %c0_78 = arith.constant 0 : index
    %59 = vector.load %arg9[%c0_77, %c0_78] : memref<1x3xf32, #tpu.memory_space<vmem>>, vector<1x3xf32>
    %60 = vector.broadcast %59 : vector<1x3xf32> to vector<128x3xf32>
    %61 = arith.addf %58, %60 : vector<128x3xf32>
    %cst_79 = arith.constant 0.000000e+00 : f32
    %62 = vector.broadcast %cst_79 : f32 to vector<128x3xf32>
    %63 = arith.maximumf %61, %62 : vector<128x3xf32>
    %64 = arith.truncf %63 : vector<128x3xf32> to vector<128x3xbf16>
    %65 = arith.extf %64 : vector<128x3xbf16> to vector<128x3xf32>
    %66 = vector.extract_strided_slice %65 {offsets = [0, 0], sizes = [128, 1], strides = [1, 1]} : vector<128x3xf32> to vector<128x1xf32>
    %c0_80 = arith.constant 0 : index
    %c0_81 = arith.constant 0 : index
    %67 = vector.load %arg10[%c0_80, %c0_81] : memref<128x128xbf16, #tpu.memory_space<vmem>>, vector<128x128xbf16>
    %68 = arith.extf %67 : vector<128x128xbf16> to vector<128x128xf32>
    %69 = vector.broadcast %66 : vector<128x1xf32> to vector<128x128xf32>
    %70 = arith.mulf %69, %68 : vector<128x128xf32>
    %71 = vector.extract_strided_slice %65 {offsets = [0, 1], sizes = [128, 1], strides = [1, 1]} : vector<128x3xf32> to vector<128x1xf32>
    %c0_82 = arith.constant 0 : index
    %c0_83 = arith.constant 0 : index
    %72 = vector.load %arg11[%c0_82, %c0_83] : memref<128x128xbf16, #tpu.memory_space<vmem>>, vector<128x128xbf16>
    %73 = arith.extf %72 : vector<128x128xbf16> to vector<128x128xf32>
    %74 = vector.broadcast %71 : vector<128x1xf32> to vector<128x128xf32>
    %75 = arith.mulf %74, %73 : vector<128x128xf32>
    %76 = arith.addf %70, %75 : vector<128x128xf32>
    %77 = vector.extract_strided_slice %65 {offsets = [0, 2], sizes = [128, 1], strides = [1, 1]} : vector<128x3xf32> to vector<128x1xf32>
    %c0_84 = arith.constant 0 : index
    %c0_85 = arith.constant 0 : index
    %78 = vector.load %arg13[%c0_84, %c0_85] : memref<128x16xbf16, #tpu.memory_space<vmem>>, vector<128x16xbf16>
    %79 = arith.extf %78 : vector<128x16xbf16> to vector<128x16xf32>
    %80 = vector.broadcast %77 : vector<128x1xf32> to vector<128x16xf32>
    %81 = arith.mulf %80, %79 : vector<128x16xf32>
    %82 = vector.extract_strided_slice %76 {offsets = [0, 0], sizes = [64, 128], strides = [1, 1]} : vector<128x128xf32> to vector<64x128xf32>
    %cst_86 = arith.constant dense<0.000000e+00> : vector<128xf32>
    %83 = vector.multi_reduction <add>, %82, %cst_86 [0] : vector<64x128xf32> to vector<128xf32>
    %84 = vector.shape_cast %83 : vector<128xf32> to vector<1x128xf32>
    %85 = vector.extract_strided_slice %81 {offsets = [0, 0], sizes = [64, 16], strides = [1, 1]} : vector<128x16xf32> to vector<64x16xf32>
    %cst_87 = arith.constant dense<0.000000e+00> : vector<16xf32>
    %86 = vector.multi_reduction <add>, %85, %cst_87 [0] : vector<64x16xf32> to vector<16xf32>
    %87 = vector.shape_cast %86 : vector<16xf32> to vector<1x16xf32>
    %88 = vector.extract_strided_slice %76 {offsets = [64, 0], sizes = [64, 128], strides = [1, 1]} : vector<128x128xf32> to vector<64x128xf32>
    %cst_88 = arith.constant dense<0.000000e+00> : vector<128xf32>
    %89 = vector.multi_reduction <add>, %88, %cst_88 [0] : vector<64x128xf32> to vector<128xf32>
    %90 = vector.shape_cast %89 : vector<128xf32> to vector<1x128xf32>
    %91 = vector.extract_strided_slice %81 {offsets = [64, 0], sizes = [64, 16], strides = [1, 1]} : vector<128x16xf32> to vector<64x16xf32>
    %cst_89 = arith.constant dense<0.000000e+00> : vector<16xf32>
    %92 = vector.multi_reduction <add>, %91, %cst_89 [0] : vector<64x16xf32> to vector<16xf32>
    %93 = vector.shape_cast %92 : vector<16xf32> to vector<1x16xf32>
    %94 = tpu.concatenate %84, %90 in 0 : vector<1x128xf32>, vector<1x128xf32> -> vector<2x128xf32>
    %c0_90 = arith.constant 0 : index
    %c0_91 = arith.constant 0 : index
    %95 = vector.load %arg12[%c0_90, %c0_91] : memref<1x128xf32, #tpu.memory_space<vmem>>, vector<1x128xf32>
    %96 = vector.broadcast %95 : vector<1x128xf32> to vector<2x128xf32>
    %97 = arith.addf %94, %96 : vector<2x128xf32>
    %c0_92 = arith.constant 0 : index
    %c0_93 = arith.constant 0 : index
    %c0_94 = arith.constant 0 : index
    %98 = vector.load %arg17[%c0_92, %c0_93, %c0_94] : memref<1x2x128xf32, #tpu.memory_space<vmem>>, vector<1x2x128xf32>
    %99 = vector.shape_cast %98 : vector<1x2x128xf32> to vector<2x128xf32>
    %100 = vector.shape_cast %97 : vector<2x128xf32> to vector<1x2x128xf32>
    tpu.vector_store %arg17[%c0_92, %c0_93, %c0_94], %100 {strides = array<i32>} : memref<1x2x128xf32, #tpu.memory_space<vmem>>, vector<1x2x128xf32>,
    %cst_95 = arith.constant dense<0xFF800000> : vector<2xf32>
    %101 = vector.multi_reduction <maximumf>, %97, %cst_95 [1] : vector<2x128xf32> to vector<2xf32>
    %102 = vector.shape_cast %101 : vector<2xf32> to vector<2x1xf32>
    %103 = vector.broadcast %102 : vector<2x1xf32> to vector<2x128xf32>
    %104 = arith.subf %97, %103 : vector<2x128xf32>
    %105 = math.exp %104 : vector<2x128xf32>
    %cst_96 = arith.constant dense<0.000000e+00> : vector<2xf32>
    %106 = vector.multi_reduction <add>, %105, %cst_96 [1] : vector<2x128xf32> to vector<2xf32>
    %107 = vector.shape_cast %106 : vector<2xf32> to vector<2x1xf32>
    %108 = vector.broadcast %107 : vector<2x1xf32> to vector<2x128xf32>
    %109 = arith.divf %105, %108 : vector<2x128xf32>
    %c0_97 = arith.constant 0 : index
    %c0_98 = arith.constant 0 : index
    %c0_99 = arith.constant 0 : index
    %110 = vector.load %arg18[%c0_97, %c0_98, %c0_99] : memref<1x2x128xf32, #tpu.memory_space<vmem>>, vector<1x2x128xf32>
    %111 = vector.shape_cast %110 : vector<1x2x128xf32> to vector<2x128xf32>
    %112 = vector.shape_cast %109 : vector<2x128xf32> to vector<1x2x128xf32>
    tpu.vector_store %arg18[%c0_97, %c0_98, %c0_99], %112 {strides = array<i32>} : memref<1x2x128xf32, #tpu.memory_space<vmem>>, vector<1x2x128xf32>,
    %113 = tpu.concatenate %87, %93 in 0 : vector<1x16xf32>, vector<1x16xf32> -> vector<2x16xf32>
    %c0_100 = arith.constant 0 : index
    %c0_101 = arith.constant 0 : index
    %114 = vector.load %arg14[%c0_100, %c0_101] : memref<1x16xf32, #tpu.memory_space<vmem>>, vector<1x16xf32>
    %115 = vector.broadcast %114 : vector<1x16xf32> to vector<2x16xf32>
    %116 = arith.addf %113, %115 : vector<2x16xf32>
    %cst_102 = arith.constant 0.000000e+00 : f32
    %117 = vector.broadcast %cst_102 : f32 to vector<2x16xf32>
    %118 = arith.maximumf %116, %117 : vector<2x16xf32>
    %119 = arith.truncf %118 : vector<2x16xf32> to vector<2x16xbf16>
    %c0_103 = arith.constant 0 : index
    %c0_104 = arith.constant 0 : index
    %120 = vector.load %arg15[%c0_103, %c0_104] : memref<16x1xbf16, #tpu.memory_space<vmem>>, vector<16x1xbf16>
    %cst_105 = arith.constant dense<0.000000e+00> : vector<2x1xf32>
    %121 = tpu.matmul %119, %120, %cst_105 {dimension_numbers = #tpu.dot_dimension_numbers<[1], [0], [0], [1], [0, 0, 1, 1], [], []>} : vector<2x16xbf16>, vector<16x1xbf16>, vector<2x1xf32> -> vector<2x1xf32>
    %c0_106 = arith.constant 0 : index
    %c0_107 = arith.constant 0 : index
    %122 = vector.load %arg16[%c0_106, %c0_107] : memref<1x1xf32, #tpu.memory_space<vmem>>, vector<1x1xf32>
    %123 = vector.broadcast %122 : vector<1x1xf32> to vector<2x1xf32>
    %124 = arith.addf %121, %123 : vector<2x1xf32>
    %125 = math.tanh %124 : vector<2x1xf32>
    %c0_108 = arith.constant 0 : index
    %c0_109 = arith.constant 0 : index
    %c0_110 = arith.constant 0 : index
    %126 = vector.load %arg19[%c0_108, %c0_109, %c0_110] : memref<1x2x1xf32, #tpu.memory_space<vmem>>, vector<1x2x1xf32>
    %127 = vector.shape_cast %126 : vector<1x2x1xf32> to vector<2x1xf32>
    %128 = vector.shape_cast %125 : vector<2x1xf32> to vector<1x2x1xf32>
    tpu.vector_store %arg19[%c0_108, %c0_109, %c0_110], %128 {strides = array<i32>} : memref<1x2x1xf32, #tpu.memory_space<vmem>>, vector<1x2x1xf32>,
    return
  }
  func.func @transform_0(%arg0: i32) -> (i32, i32, i32, i32) {
    %c0_i32 = arith.constant 0 : i32
    %c0_i32_0 = arith.constant 0 : i32
    %c0_i32_1 = arith.constant 0 : i32
    %c0_i32_2 = arith.constant 0 : i32
    return %arg0, %c0_i32, %c0_i32_0, %c0_i32_1 : i32, i32, i32, i32
  }
  func.func @transform_1(%arg0: i32) -> (i32, i32) {
    %c0_i32 = arith.constant 0 : i32
    %c0_i32_0 = arith.constant 0 : i32
    %c0_i32_1 = arith.constant 0 : i32
    return %c0_i32, %c0_i32_0 : i32, i32
  }
  func.func @transform_2(%arg0: i32) -> (i32, i32) {
    %c0_i32 = arith.constant 0 : i32
    %c0_i32_0 = arith.constant 0 : i32
    %c0_i32_1 = arith.constant 0 : i32
    return %c0_i32, %c0_i32_0 : i32, i32
  }
  func.func @transform_3(%arg0: i32) -> (i32, i32, i32) {
    %c0_i32 = arith.constant 0 : i32
    %c0_i32_0 = arith.constant 0 : i32
    %c0_i32_1 = arith.constant 0 : i32
    %c0_i32_2 = arith.constant 0 : i32
    return %c0_i32, %c0_i32_0, %c0_i32_1 : i32, i32, i32
  }
  func.func @transform_4(%arg0: i32) -> (i32, i32, i32) {
    %c0_i32 = arith.constant 0 : i32
    %c0_i32_0 = arith.constant 0 : i32
    %c0_i32_1 = arith.constant 0 : i32
    %c0_i32_2 = arith.constant 0 : i32
    return %c0_i32, %c0_i32_0, %c0_i32_1 : i32, i32, i32
  }
  func.func @transform_5(%arg0: i32) -> (i32, i32, i32) {
    %c0_i32 = arith.constant 0 : i32
    %c0_i32_0 = arith.constant 0 : i32
    %c0_i32_1 = arith.constant 0 : i32
    %c0_i32_2 = arith.constant 0 : i32
    return %c0_i32, %c0_i32_0, %c0_i32_1 : i32, i32, i32
  }
  func.func @transform_6(%arg0: i32) -> (i32, i32, i32) {
    %c0_i32 = arith.constant 0 : i32
    %c0_i32_0 = arith.constant 0 : i32
    %c0_i32_1 = arith.constant 0 : i32
    %c0_i32_2 = arith.constant 0 : i32
    return %c0_i32, %c0_i32_0, %c0_i32_1 : i32, i32, i32
  }
  func.func @transform_7(%arg0: i32) -> (i32, i32) {
    %c0_i32 = arith.constant 0 : i32
    %c0_i32_0 = arith.constant 0 : i32
    %c0_i32_1 = arith.constant 0 : i32
    return %c0_i32, %c0_i32_0 : i32, i32
  }
  func.func @transform_8(%arg0: i32) -> (i32, i32) {
    %c0_i32 = arith.constant 0 : i32
    %c0_i32_0 = arith.constant 0 : i32
    %c0_i32_1 = arith.constant 0 : i32
    return %c0_i32, %c0_i32_0 : i32, i32
  }
  func.func @transform_9(%arg0: i32) -> (i32, i32) {
    %c0_i32 = arith.constant 0 : i32
    %c0_i32_0 = arith.constant 0 : i32
    %c0_i32_1 = arith.constant 0 : i32
    return %c0_i32, %c0_i32_0 : i32, i32
  }
  func.func @transform_10(%arg0: i32) -> (i32, i32) {
    %c0_i32 = arith.constant 0 : i32
    %c0_i32_0 = arith.constant 0 : i32
    %c0_i32_1 = arith.constant 0 : i32
    return %c0_i32, %c0_i32_0 : i32, i32
  }
  func.func @transform_11(%arg0: i32) -> (i32, i32) {
    %c0_i32 = arith.constant 0 : i32
    %c0_i32_0 = arith.constant 0 : i32
    %c0_i32_1 = arith.constant 0 : i32
    return %c0_i32, %c0_i32_0 : i32, i32
  }
  func.func @transform_12(%arg0: i32) -> (i32, i32) {
    %c0_i32 = arith.constant 0 : i32
    %c0_i32_0 = arith.constant 0 : i32
    %c0_i32_1 = arith.constant 0 : i32
    return %c0_i32, %c0_i32_0 : i32, i32
  }
  func.func @transform_13(%arg0: i32) -> (i32, i32) {
    %c0_i32 = arith.constant 0 : i32
    %c0_i32_0 = arith.constant 0 : i32
    %c0_i32_1 = arith.constant 0 : i32
    return %c0_i32, %c0_i32_0 : i32, i32
  }
  func.func @transform_14(%arg0: i32) -> (i32, i32) {
    %c0_i32 = arith.constant 0 : i32
    %c0_i32_0 = arith.constant 0 : i32
    %c0_i32_1 = arith.constant 0 : i32
    return %c0_i32, %c0_i32_0 : i32, i32
  }
  func.func @transform_15(%arg0: i32) -> (i32, i32) {
    %c0_i32 = arith.constant 0 : i32
    %c0_i32_0 = arith.constant 0 : i32
    %c0_i32_1 = arith.constant 0 : i32
    return %c0_i32, %c0_i32_0 : i32, i32
  }
  func.func @transform_16(%arg0: i32) -> (i32, i32, i32) {
    %c0_i32 = arith.constant 0 : i32
    %c0_i32_0 = arith.constant 0 : i32
    %c0_i32_1 = arith.constant 0 : i32
    return %arg0, %c0_i32, %c0_i32_0 : i32, i32, i32
  }
  func.func @transform_17(%arg0: i32) -> (i32, i32, i32) {
    %c0_i32 = arith.constant 0 : i32
    %c0_i32_0 = arith.constant 0 : i32
    %c0_i32_1 = arith.constant 0 : i32
    return %arg0, %c0_i32, %c0_i32_0 : i32, i32, i32
  }
  func.func @transform_18(%arg0: i32) -> (i32, i32, i32) {
    %c0_i32 = arith.constant 0 : i32
    %c0_i32_0 = arith.constant 0 : i32
    %c0_i32_1 = arith.constant 0 : i32
    return %arg0, %c0_i32, %c0_i32_0 : i32, i32, i32
  }
}

</mosaic_0001>

<llo_original>
// kernel: _lambda_.1
$region0: #{_lambda_.1}
  #allocation0 [shape = 'u32[]', space=smem, size = 0x4, offset = 0x4, fixed_abs, tag = 'smem constant byte address 0x4 - core index']
  #allocation1 [shape = 'u32[144,128]{1,0:T(1,128)}', space=vmem, size = 0x12000, scoped, tag = 'internal scratch']
  #allocation2 [shape = 'f32[2,10,10,16]{3,2,1,0:T(8,128)}', space=vmem, size = 0x28000, scoped, tag = 'scratch operand']
  #allocation3 [shape = 'bf16[128,36]{1,0:T(16,128)(2,1)}', space=vmem, size = 0x8000, scoped, tag = 'scratch operand']
  #allocation4 [shape = 'bf16[128,144]{1,0:T(16,128)(2,1)}', space=vmem, size = 0x10000, scoped, tag = 'scratch operand']
  #allocation5 [shape = 'f32[1,1]{1,0:T(1,128)S(1)}', space=vmem, size = 0x200, scoped, tag = 'scoped memory for _lambda_.1']
  %s0 = inlined_call_operand.vmem [shape: f32[2,10,10,4], index: 0, kind: input, shape index: {}]
  %s1 = inlined_call_operand.vmem [shape: bf16[36,16], index: 1, kind: input, shape index: {}]
  %s2 = inlined_call_operand.vmem [shape: f32[1,16], index: 2, kind: input, shape index: {}]
  %s3 = inlined_call_operand.vmem [shape: bf16[2,144,16], index: 3, kind: input, shape index: {}]
  %s4 = inlined_call_operand.vmem [shape: f32[2,1,16], index: 4, kind: input, shape index: {}]
  %s5 = inlined_call_operand.vmem [shape: bf16[2,144,16], index: 5, kind: input, shape index: {}]
  %s6 = inlined_call_operand.vmem [shape: f32[2,1,16], index: 6, kind: input, shape index: {}]
  %s7 = inlined_call_operand.vmem [shape: bf16[16,3], index: 7, kind: input, shape index: {}]
  %s8 = inlined_call_operand.vmem [shape: f32[1,3], index: 8, kind: input, shape index: {}]
  %s9 = inlined_call_operand.vmem [shape: bf16[128,128], index: 9, kind: input, shape index: {}]
  %s10 = inlined_call_operand.vmem [shape: bf16[128,128], index: 10, kind: input, shape index: {}]
  %s11 = inlined_call_operand.vmem [shape: f32[1,128], index: 11, kind: input, shape index: {}]
  %s12 = inlined_call_operand.vmem [shape: bf16[128,16], index: 12, kind: input, shape index: {}]
  %s13 = inlined_call_operand.vmem [shape: f32[1,16], index: 13, kind: input, shape index: {}]
  %s14 = inlined_call_operand.vmem [shape: bf16[16,1], index: 14, kind: input, shape index: {}]
  %s15 = inlined_call_operand.<no memory space> [shape: f32[1,1], index: 15, kind: input, shape index: {}]
  %s16 = inlined_call_operand.hbm [shape: f32[1,2,128], index: 16, kind: output, shape index: {0}]
  %s17 = inlined_call_operand.hbm [shape: f32[1,2,128], index: 17, kind: output, shape index: {1}]
  %s18 = inlined_call_operand.vmem [shape: f32[1,2,1], index: 18, kind: output, shape index: {2}]
  %19 = xla_tuple %s16, %s17, %s18
  %s20 = sld [smem:[#allocation0]]
  $region97: #{_lambda_.1} parent=0
    _
  %s22 = ssub.s32 1, %s20
  %s23 = scalar_select 0, %s22, %s20
  %v24 = vstv %s15
  %25 = vst [vmem:[#allocation5] sm:$0x1] %v24
  $region1: #{_lambda_.1} parent=0
    #allocation6 [shape = 'u8[1024]{0}', space=vmem, size = 0x400, scoped, tag = 'output window, operand 0, single buffered']
    #allocation7 [shape = 's32[1]{0}', space=sflag, size = 0x4, scoped, tag = 'scoped memory for _lambda_.1']
    #allocation8 [shape = 'u8[1024]{0}', space=vmem, size = 0x400, scoped, tag = 'output window, operand 1, single buffered']
    #allocation9 [shape = 's32[1]{0}', space=sflag, size = 0x4, scoped, tag = 'scoped memory for _lambda_.1']
    %26 = vsyncpa [#allocation7], 0
    %27 = vsyncpa [#allocation9], 0
    // Predicated region
    $region2: #{_lambda_.1} parent=1 // pred_check
      _
    $region3: #{_lambda_.1} parent=1 // pred_check_branch
      %29 = sbr.rel (0) target = $region5
    $region4: #{_lambda_.1} parent=1 // pred_region
      _
    $region5: #{_lambda_.1} parent=1 // pred_fallthru
      _
    // Predicated region
    $region6: #{_lambda_.1} parent=1 // pred_check
      _
    $region7: #{_lambda_.1} parent=1 // pred_check_branch
      %31 = sbr.rel (0) target = $region9
    $region8: #{_lambda_.1} parent=1 // pred_region
      _
    $region9: #{_lambda_.1} parent=1 // pred_fallthru
      _
    // Predicated region
    $region10: #{_lambda_.1} parent=1 // pred_check
      _
    $region11: #{_lambda_.1} parent=1 // pred_check_branch
      %33 = sbr.rel (0) target = $region13
    $region12: #{_lambda_.1} parent=1 // pred_region
      _
    $region13: #{_lambda_.1} parent=1 // pred_fallthru
      _
    // Predicated region
    $region14: #{_lambda_.1} parent=1 // pred_check
      _
    $region15: #{_lambda_.1} parent=1 // pred_check_branch
      %35 = sbr.rel (0) target = $region17
    $region16: #{_lambda_.1} parent=1 // pred_region
      _
    $region17: #{_lambda_.1} parent=1 // pred_fallthru
      _
    // Predicated region
    $region18: #{_lambda_.1} parent=1 // pred_check
      _
    $region19: #{_lambda_.1} parent=1 // pred_check_branch
      %37 = sbr.rel (0) target = $region21
    $region20: #{_lambda_.1} parent=1 // pred_region
      _
    $region21: #{_lambda_.1} parent=1 // pred_fallthru
      _
    // Predicated region
    $region22: #{_lambda_.1} parent=1 // pred_check
      _
    $region23: #{_lambda_.1} parent=1 // pred_check_branch
      %39 = sbr.rel (0) target = $region25
    $region24: #{_lambda_.1} parent=1 // pred_region
      _
    $region25: #{_lambda_.1} parent=1 // pred_fallthru
      _
    // Predicated region
    $region26: #{_lambda_.1} parent=1 // pred_check
      _
    $region27: #{_lambda_.1} parent=1 // pred_check_branch
      %41 = sbr.rel (0) target = $region29
    $region28: #{_lambda_.1} parent=1 // pred_region
      _
    $region29: #{_lambda_.1} parent=1 // pred_fallthru
      _
    // Predicated region
    $region30: #{_lambda_.1} parent=1 // pred_check
      _
    $region31: #{_lambda_.1} parent=1 // pred_check_branch
      %43 = sbr.rel (0) target = $region33
    $region32: #{_lambda_.1} parent=1 // pred_region
      _
    $region33: #{_lambda_.1} parent=1 // pred_fallthru
      _
    // Predicated region
    $region34: #{_lambda_.1} parent=1 // pred_check
      _
    $region35: #{_lambda_.1} parent=1 // pred_check_branch
      %45 = sbr.rel (0) target = $region37
    $region36: #{_lambda_.1} parent=1 // pred_region
      _
    $region37: #{_lambda_.1} parent=1 // pred_fallthru
      _
    // Predicated region
    $region38: #{_lambda_.1} parent=1 // pred_check
      _
    $region39: #{_lambda_.1} parent=1 // pred_check_branch
      %47 = sbr.rel (0) target = $region41
    $region40: #{_lambda_.1} parent=1 // pred_region
      _
    $region41: #{_lambda_.1} parent=1 // pred_fallthru
      _
    // Predicated region
    $region42: #{_lambda_.1} parent=1 // pred_check
      _
    $region43: #{_lambda_.1} parent=1 // pred_check_branch
      %49 = sbr.rel (0) target = $region45
    $region44: #{_lambda_.1} parent=1 // pred_region
      _
    $region45: #{_lambda_.1} parent=1 // pred_fallthru
      _
    // Predicated region
    $region46: #{_lambda_.1} parent=1 // pred_check
      _
    $region47: #{_lambda_.1} parent=1 // pred_check_branch
      %51 = sbr.rel (0) target = $region49
    $region48: #{_lambda_.1} parent=1 // pred_region
      _
    $region49: #{_lambda_.1} parent=1 // pred_fallthru
      _
    // Predicated region
    $region50: #{_lambda_.1} parent=1 // pred_check
      _
    $region51: #{_lambda_.1} parent=1 // pred_check_branch
      %53 = sbr.rel (0) target = $region53
    $region52: #{_lambda_.1} parent=1 // pred_region
      _
    $region53: #{_lambda_.1} parent=1 // pred_fallthru
      _
    // Predicated region
    $region54: #{_lambda_.1} parent=1 // pred_check
      _
    $region55: #{_lambda_.1} parent=1 // pred_check_branch
      %55 = sbr.rel (0) target = $region57
    $region56: #{_lambda_.1} parent=1 // pred_region
      _
    $region57: #{_lambda_.1} parent=1 // pred_fallthru
      _
    // Predicated region
    $region58: #{_lambda_.1} parent=1 // pred_check
      _
    $region59: #{_lambda_.1} parent=1 // pred_check_branch
      %57 = sbr.rel (0) target = $region61
    $region60: #{_lambda_.1} parent=1 // pred_region
      _
    $region61: #{_lambda_.1} parent=1 // pred_fallthru
      _
    // Predicated region
    $region62: #{_lambda_.1} parent=1 // pred_check
      _
    $region63: #{_lambda_.1} parent=1 // pred_check_branch
      %59 = sbr.rel (0) target = $region65
    $region64: #{_lambda_.1} parent=1 // pred_region
      _
    $region65: #{_lambda_.1} parent=1 // pred_fallthru
      _
    %vm61 = vcmask 130048
    %62 = vst.msk [vmem:[#allocation2] sm:$0xff] %vm61, 0.0
    %vm63 = vcmask 123904
    %64 = vst.msk [vmem:[#allocation2 + $0x8] sm:$0x3] %vm63, 0.0
    %65 = vst.msk [vmem:[#allocation2 + $0xa0] sm:$0xff] %vm61, 0.0
    %66 = vst.msk [vmem:[#allocation2 + $0xa8] sm:$0x3] %vm63, 0.0
    %s67 = scalar_lea.vmem [#allocation2], 144
    %68 = vst.msk [vmem:[%s67] sm:$0xff] %vm61, 0.0
    %69 = vst.msk [vmem:[%s67 + $0x8] sm:$0x3] %vm63, 0.0
    %70 = vst.msk [vmem:[%s67 + $0xa0] sm:$0xff] %vm61, 0.0
    %71 = vst.msk [vmem:[%s67 + $0xa8] sm:$0x3] %vm63, 0.0
    %vm72 = vcmask 122880
    %73 = vst.msk [vmem:[#allocation2] sm:$0x1] %vm72, 0.0
    %74 = vst.msk [vmem:[#allocation2 + $0x10] sm:$0x1] %vm72, 0.0
    %75 = vst.msk [vmem:[#allocation2 + $0x20] sm:$0x1] %vm72, 0.0
    %76 = vst.msk [vmem:[#allocation2 + $0x30] sm:$0x1] %vm72, 0.0
    %77 = vst.msk [vmem:[#allocation2 + $0x40] sm:$0x1] %vm72, 0.0
    %78 = vst.msk [vmem:[#allocation2 + $0x50] sm:$0x1] %vm72, 0.0
    %79 = vst.msk [vmem:[#allocation2 + $0x60] sm:$0x1] %vm72, 0.0
    %80 = vst.msk [vmem:[#allocation2 + $0x70] sm:$0x1] %vm72, 0.0
    %81 = vst.msk [vmem:[#allocation2 + $0x80] sm:$0x1] %vm72, 0.0
    %82 = vst.msk [vmem:[#allocation2 + $0x90] sm:$0x1] %vm72, 0.0
    %83 = vst.msk [vmem:[#allocation2 + $0xa0] sm:$0x1] %vm72, 0.0
    %84 = vst.msk [vmem:[#allocation2 + $0xb0] sm:$0x1] %vm72, 0.0
    %85 = vst.msk [vmem:[#allocation2 + $0xc0] sm:$0x1] %vm72, 0.0
    %86 = vst.msk [vmem:[#allocation2 + $0xd0] sm:$0x1] %vm72, 0.0
    %87 = vst.msk [vmem:[#allocation2 + $0xe0] sm:$0x1] %vm72, 0.0
    %88 = vst.msk [vmem:[#allocation2 + $0xf0] sm:$0x1] %vm72, 0.0
    %89 = vst.msk [vmem:[#allocation2 + $0x100] sm:$0x1] %vm72, 0.0
    %90 = vst.msk [vmem:[#allocation2 + $0x110] sm:$0x1] %vm72, 0.0
    %91 = vst.msk [vmem:[#allocation2 + $0x120] sm:$0x1] %vm72, 0.0
    %92 = vst.msk [vmem:[#allocation2 + $0x130] sm:$0x1] %vm72, 0.0
    %93 = vst.msk [vmem:[#allocation2 + $0x9] sm:$0x1] %vm72, 0.0
    %94 = vst.msk [vmem:[#allocation2 + $0x19] sm:$0x1] %vm72, 0.0
    %95 = vst.msk [vmem:[#allocation2 + $0x29] sm:$0x1] %vm72, 0.0
    %96 = vst.msk [vmem:[#allocation2 + $0x39] sm:$0x1] %vm72, 0.0
    %97 = vst.msk [vmem:[#allocation2 + $0x49] sm:$0x1] %vm72, 0.0
    %98 = vst.msk [vmem:[#allocation2 + $0x59] sm:$0x1] %vm72, 0.0
    %99 = vst.msk [vmem:[#allocation2 + $0x69] sm:$0x1] %vm72, 0.0
    %100 = vst.msk [vmem:[#allocation2 + $0x79] sm:$0x1] %vm72, 0.0
    %101 = vst.msk [vmem:[#allocation2 + $0x89] sm:$0x1] %vm72, 0.0
    %102 = vst.msk [vmem:[#allocation2 + $0x99] sm:$0x1] %vm72, 0.0
    %103 = vst.msk [vmem:[#allocation2 + $0xa9] sm:$0x1] %vm72, 0.0
    %104 = vst.msk [vmem:[#allocation2 + $0xb9] sm:$0x1] %vm72, 0.0
    %105 = vst.msk [vmem:[#allocation2 + $0xc9] sm:$0x1] %vm72, 0.0
    %106 = vst.msk [vmem:[#allocation2 + $0xd9] sm:$0x1] %vm72, 0.0
    %107 = vst.msk [vmem:[#allocation2 + $0xe9] sm:$0x1] %vm72, 0.0
    %108 = vst.msk [vmem:[#allocation2 + $0xf9] sm:$0x1] %vm72, 0.0
    %109 = vst.msk [vmem:[#allocation2 + $0x109] sm:$0x1] %vm72, 0.0
    %110 = vst.msk [vmem:[#allocation2 + $0x119] sm:$0x1] %vm72, 0.0
    %111 = vst.msk [vmem:[#allocation2 + $0x129] sm:$0x1] %vm72, 0.0
    %112 = vst.msk [vmem:[#allocation2 + $0x139] sm:$0x1] %vm72, 0.0
    %v113 = vld [vmem:[%s0] sm:$0xff]
    %v114 = vld [vmem:[%s0 + $0x10] sm:$0xff]
    %v115 = vld [vmem:[%s0 + $0x20] sm:$0xff]
    %v116 = vld [vmem:[%s0 + $0x30] sm:$0xff]
    %v117 = vld [vmem:[%s0 + $0x40] sm:$0xff]
    %v118 = vld [vmem:[%s0 + $0x50] sm:$0xff]
    %v119 = vld [vmem:[%s0 + $0x60] sm:$0xff]
    %v120 = vld [vmem:[%s0 + $0x70] sm:$0xff]
    %v121 = vld [vmem:[%s0 + $0xa0] sm:$0xff]
    %v122 = vld [vmem:[%s0 + $0xb0] sm:$0xff]
    %v123 = vld [vmem:[%s0 + $0xc0] sm:$0xff]
    %v124 = vld [vmem:[%s0 + $0xd0] sm:$0xff]
    %v125 = vld [vmem:[%s0 + $0xe0] sm:$0xff]
    %v126 = vld [vmem:[%s0 + $0xf0] sm:$0xff]
    %v127 = vld [vmem:[%s0 + $0x100] sm:$0xff]
    %v128 = vld [vmem:[%s0 + $0x110] sm:$0xff]
    %v129 = vpack.c.bf16 %v114, %v113
    %v130 = vpack.c.bf16 %v116, %v115
    %v131 = vpack.c.bf16 %v118, %v117
    %v132 = vpack.c.bf16 %v120, %v119
    %v133 = vpack.c.bf16 %v122, %v121
    %v134 = vpack.c.bf16 %v124, %v123
    %v135 = vpack.c.bf16 %v126, %v125
    %v136 = vpack.c.bf16 %v128, %v127
    %vm137 = vcmask 31744
    %138 = vst.msk [vmem:[#allocation3] sm:$0xff] %vm137, %v129
    %139 = vst.msk [vmem:[#allocation3 + $0x8] sm:$0xff] %vm137, %v130
    %140 = vst.msk [vmem:[#allocation3 + $0x10] sm:$0xff] %vm137, %v131
    %141 = vst.msk [vmem:[#allocation3 + $0x18] sm:$0xff] %vm137, %v132
    %142 = vst.msk [vmem:[#allocation3 + $0x20] sm:$0xff] %vm137, %v133
    %143 = vst.msk [vmem:[#allocation3 + $0x28] sm:$0xff] %vm137, %v134
    %144 = vst.msk [vmem:[#allocation3 + $0x30] sm:$0xff] %vm137, %v135
    %145 = vst.msk [vmem:[#allocation3 + $0x38] sm:$0xff] %vm137, %v136
    %v146 = vld [vmem:[%s0 + $0x1] sm:$0xff]
    %v147 = vld [vmem:[%s0 + $0x11] sm:$0xff]
    %v148 = vld [vmem:[%s0 + $0x21] sm:$0xff]
    %v149 = vld [vmem:[%s0 + $0x31] sm:$0xff]
    %v150 = vld [vmem:[%s0 + $0x41] sm:$0xff]
    %v151 = vld [vmem:[%s0 + $0x51] sm:$0xff]
    %v152 = vld [vmem:[%s0 + $0x61] sm:$0xff]
    %v153 = vld [vmem:[%s0 + $0x71] sm:$0xff]
    %v154 = vld [vmem:[%s0 + $0xa1] sm:$0xff]
    %v155 = vld [vmem:[%s0 + $0xb1] sm:$0xff]
    %v156 = vld [vmem:[%s0 + $0xc1] sm:$0xff]
    %v157 = vld [vmem:[%s0 + $0xd1] sm:$0xff]
    %v158 = vld [vmem:[%s0 + $0xe1] sm:$0xff]
    %v159 = vld [vmem:[%s0 + $0xf1] sm:$0xff]
    %v160 = vld [vmem:[%s0 + $0x101] sm:$0xff]
    %v161 = vld [vmem:[%s0 + $0x111] sm:$0xff]
    %v162 = vpack.c.bf16 %v147, %v146
    %v163 = vpack.c.bf16 %v149, %v148
    %v164 = vpack.c.bf16 %v151, %v150
    %v165 = vpack.c.bf16 %v153, %v152
    %v166 = vpack.c.bf16 %v155, %v154
    %v167 = vpack.c.bf16 %v157, %v156
    %v168 = vpack.c.bf16 %v159, %v158
    %v169 = vpack.c.bf16 %v161, %v160
    %178 = vrot.lane.b32.xlu0 %v162, 4
    %v179 = vpop.permute.xlu0 %178
    %180 = vrot.lane.b32.xlu0 %v163, 4
    %v181 = vpop.permute.xlu0 %180
    %182 = vrot.lane.b32.xlu0 %v164, 4
    %v183 = vpop.permute.xlu0 %182
    %184 = vrot.lane.b32.xlu0 %v165, 4
    %v185 = vpop.permute.xlu0 %184
    %186 = vrot.lane.b32.xlu0 %v166, 4
    %v187 = vpop.permute.xlu0 %186
    %188 = vrot.lane.b32.xlu0 %v167, 4
    %v189 = vpop.permute.xlu0 %188
    %190 = vrot.lane.b32.xlu0 %v168, 4
    %v191 = vpop.permute.xlu0 %190
    %192 = vrot.lane.b32.xlu0 %v169, 4
    %v193 = vpop.permute.xlu0 %192
    %vm202 = vcmask 64544
    %203 = vst.msk [vmem:[#allocation3] sm:$0xff] %vm202, %v179
    %204 = vst.msk [vmem:[#allocation3 + $0x8] sm:$0xff] %vm202, %v181
    %205 = vst.msk [vmem:[#allocation3 + $0x10] sm:$0xff] %vm202, %v183
    %206 = vst.msk [vmem:[#allocation3 + $0x18] sm:$0xff] %vm202, %v185
    %207 = vst.msk [vmem:[#allocation3 + $0x20] sm:$0xff] %vm202, %v187
    %208 = vst.msk [vmem:[#allocation3 + $0x28] sm:$0xff] %vm202, %v189
    %209 = vst.msk [vmem:[#allocation3 + $0x30] sm:$0xff] %vm202, %v191
    %210 = vst.msk [vmem:[#allocation3 + $0x38] sm:$0xff] %vm202, %v193
    %v211 = vld [vmem:[%s0 + $0x2] sm:$0xff]
    %v212 = vld [vmem:[%s0 + $0x12] sm:$0xff]
    %v213 = vld [vmem:[%s0 + $0x22] sm:$0xff]
    %v214 = vld [vmem:[%s0 + $0x32] sm:$0xff]
    %v215 = vld [vmem:[%s0 + $0x42] sm:$0xff]
    %v216 = vld [vmem:[%s0 + $0x52] sm:$0xff]
    %v217 = vld [vmem:[%s0 + $0x62] sm:$0xff]
    %v218 = vld [vmem:[%s0 + $0x72] sm:$0xff]
    %v219 = vld [vmem:[%s0 + $0xa2] sm:$0xff]
    %v220 = vld [vmem:[%s0 + $0xb2] sm:$0xff]
    %v221 = vld [vmem:[%s0 + $0xc2] sm:$0xff]
    %v222 = vld [vmem:[%s0 + $0xd2] sm:$0xff]
    %v223 = vld [vmem:[%s0 + $0xe2] sm:$0xff]
    %v224 = vld [vmem:[%s0 + $0xf2] sm:$0xff]
    %v225 = vld [vmem:[%s0 + $0x102] sm:$0xff]
    %v226 = vld [vmem:[%s0 + $0x112] sm:$0xff]
    %v227 = vpack.c.bf16 %v212, %v211
    %v228 = vpack.c.bf16 %v214, %v213
    %v229 = vpack.c.bf16 %v216, %v215
    %v230 = vpack.c.bf16 %v218, %v217
    %v231 = vpack.c.bf16 %v220, %v219
    %v232 = vpack.c.bf16 %v222, %v221
    %v233 = vpack.c.bf16 %v224, %v223
    %v234 = vpack.c.bf16 %v226, %v225
    %243 = vrot.lane.b32.xlu0 %v227, 8
    %v244 = vpop.permute.xlu0 %243
    %245 = vrot.lane.b32.xlu0 %v228, 8
    %v246 = vpop.permute.xlu0 %245
    %247 = vrot.lane.b32.xlu0 %v229, 8
    %v248 = vpop.permute.xlu0 %247
    %249 = vrot.lane.b32.xlu0 %v230, 8
    %v250 = vpop.permute.xlu0 %249
    %251 = vrot.lane.b32.xlu0 %v231, 8
    %v252 = vpop.permute.xlu0 %251
    %253 = vrot.lane.b32.xlu0 %v232, 8
    %v254 = vpop.permute.xlu0 %253
    %255 = vrot.lane.b32.xlu0 %v233, 8
    %v256 = vpop.permute.xlu0 %255
    %257 = vrot.lane.b32.xlu0 %v234, 8
    %v258 = vpop.permute.xlu0 %257
    %vm267 = vcmask 97344
    %268 = vst.msk [vmem:[#allocation3] sm:$0xff] %vm267, %v244
    %269 = vst.msk [vmem:[#allocation3 + $0x8] sm:$0xff] %vm267, %v246
    %270 = vst.msk [vmem:[#allocation3 + $0x10] sm:$0xff] %vm267, %v248
    %271 = vst.msk [vmem:[#allocation3 + $0x18] sm:$0xff] %vm267, %v250
    %272 = vst.msk [vmem:[#allocation3 + $0x20] sm:$0xff] %vm267, %v252
    %273 = vst.msk [vmem:[#allocation3 + $0x28] sm:$0xff] %vm267, %v254
    %274 = vst.msk [vmem:[#allocation3 + $0x30] sm:$0xff] %vm267, %v256
    %275 = vst.msk [vmem:[#allocation3 + $0x38] sm:$0xff] %vm267, %v258
    %s276 = scalar_lea.vmem %s0, 16
    %v277 = vld [vmem:[%s276] sm:$0xff]
    %v278 = vld [vmem:[%s276 + $0x10] sm:$0xff]
    %v279 = vld [vmem:[%s276 + $0x20] sm:$0xff]
    %v280 = vld [vmem:[%s276 + $0x30] sm:$0xff]
    %v281 = vld [vmem:[%s276 + $0x40] sm:$0xff]
    %v282 = vld [vmem:[%s276 + $0x50] sm:$0xff]
    %v283 = vld [vmem:[%s276 + $0x60] sm:$0xff]
    %v284 = vld [vmem:[%s276 + $0x70] sm:$0xff]
    %v285 = vld [vmem:[%s276 + $0xa0] sm:$0xff]
    %v286 = vld [vmem:[%s276 + $0xb0] sm:$0xff]
    %v287 = vld [vmem:[%s276 + $0xc0] sm:$0xff]
    %v288 = vld [vmem:[%s276 + $0xd0] sm:$0xff]
    %v289 = vld [vmem:[%s276 + $0xe0] sm:$0xff]
    %v290 = vld [vmem:[%s276 + $0xf0] sm:$0xff]
    %v291 = vld [vmem:[%s276 + $0x100] sm:$0xff]
    %v292 = vld [vmem:[%s276 + $0x110] sm:$0xff]
    %v293 = vpack.c.bf16 %v278, %v277
    %v294 = vpack.c.bf16 %v280, %v279
    %v295 = vpack.c.bf16 %v282, %v281
    %v296 = vpack.c.bf16 %v284, %v283
    %v297 = vpack.c.bf16 %v286, %v285
    %v298 = vpack.c.bf16 %v288, %v287
    %v299 = vpack.c.bf16 %v290, %v289
    %v300 = vpack.c.bf16 %v292, %v291
    %309 = vrot.lane.b32.xlu0 %v293, 12
    %v310 = vpop.permute.xlu0 %309
    %311 = vrot.lane.b32.xlu0 %v294, 12
    %v312 = vpop.permute.xlu0 %311
    %313 = vrot.lane.b32.xlu0 %v295, 12
    %v314 = vpop.permute.xlu0 %313
    %315 = vrot.lane.b32.xlu0 %v296, 12
    %v316 = vpop.permute.xlu0 %315
    %317 = vrot.lane.b32.xlu0 %v297, 12
    %v318 = vpop.permute.xlu0 %317
    %319 = vrot.lane.b32.xlu0 %v298, 12
    %v320 = vpop.permute.xlu0 %319
    %321 = vrot.lane.b32.xlu0 %v299, 12
    %v322 = vpop.permute.xlu0 %321
    %323 = vrot.lane.b32.xlu0 %v300, 12
    %v324 = vpop.permute.xlu0 %323
    %vm333 = vcmask 130144
    %334 = vst.msk [vmem:[#allocation3] sm:$0xff] %vm333, %v310
    %335 = vst.msk [vmem:[#allocation3 + $0x8] sm:$0xff] %vm333, %v312
    %336 = vst.msk [vmem:[#allocation3 + $0x10] sm:$0xff] %vm333, %v314
    %337 = vst.msk [vmem:[#allocation3 + $0x18] sm:$0xff] %vm333, %v316
    %338 = vst.msk [vmem:[#allocation3 + $0x20] sm:$0xff] %vm333, %v318
    %339 = vst.msk [vmem:[#allocation3 + $0x28] sm:$0xff] %vm333, %v320
    %340 = vst.msk [vmem:[#allocation3 + $0x30] sm:$0xff] %vm333, %v322
    %341 = vst.msk [vmem:[#allocation3 + $0x38] sm:$0xff] %vm333, %v324
    %v342 = vld [vmem:[%s276 + $0x1] sm:$0xff]
    %v343 = vld [vmem:[%s276 + $0x11] sm:$0xff]
    %v344 = vld [vmem:[%s276 + $0x21] sm:$0xff]
    %v345 = vld [vmem:[%s276 + $0x31] sm:$0xff]
    %v346 = vld [vmem:[%s276 + $0x41] sm:$0xff]
    %v347 = vld [vmem:[%s276 + $0x51] sm:$0xff]
    %v348 = vld [vmem:[%s276 + $0x61] sm:$0xff]
    %v349 = vld [vmem:[%s276 + $0x71] sm:$0xff]
    %v350 = vld [vmem:[%s276 + $0xa1] sm:$0xff]
    %v351 = vld [vmem:[%s276 + $0xb1] sm:$0xff]
    %v352 = vld [vmem:[%s276 + $0xc1] sm:$0xff]
    %v353 = vld [vmem:[%s276 + $0xd1] sm:$0xff]
    %v354 = vld [vmem:[%s276 + $0xe1] sm:$0xff]
    %v355 = vld [vmem:[%s276 + $0xf1] sm:$0xff]
    %v356 = vld [vmem:[%s276 + $0x101] sm:$0xff]
    %v357 = vld [vmem:[%s276 + $0x111] sm:$0xff]
    %v358 = vpack.c.bf16 %v343, %v342
    %v359 = vpack.c.bf16 %v345, %v344
    %v360 = vpack.c.bf16 %v347, %v346
    %v361 = vpack.c.bf16 %v349, %v348
    %v362 = vpack.c.bf16 %v351, %v350
    %v363 = vpack.c.bf16 %v353, %v352
    %v364 = vpack.c.bf16 %v355, %v354
    %v365 = vpack.c.bf16 %v357, %v356
    %374 = vrot.lane.b32.xlu0 %v358, 16
    %v375 = vpop.permute.xlu0 %374
    %376 = vrot.lane.b32.xlu0 %v359, 16
    %v377 = vpop.permute.xlu0 %376
    %378 = vrot.lane.b32.xlu0 %v360, 16
    %v379 = vpop.permute.xlu0 %378
    %380 = vrot.lane.b32.xlu0 %v361, 16
    %v381 = vpop.permute.xlu0 %380
    %382 = vrot.lane.b32.xlu0 %v362, 16
    %v383 = vpop.permute.xlu0 %382
    %384 = vrot.lane.b32.xlu0 %v363, 16
    %v385 = vpop.permute.xlu0 %384
    %386 = vrot.lane.b32.xlu0 %v364, 16
    %v387 = vpop.permute.xlu0 %386
    %388 = vrot.lane.b32.xlu0 %v365, 16
    %v389 = vpop.permute.xlu0 %388
    %vm398 = vcmask 162944
    %399 = vst.msk [vmem:[#allocation3] sm:$0xff] %vm398, %v375
    %400 = vst.msk [vmem:[#allocation3 + $0x8] sm:$0xff] %vm398, %v377
    %401 = vst.msk [vmem:[#allocation3 + $0x10] sm:$0xff] %vm398, %v379
    %402 = vst.msk [vmem:[#allocation3 + $0x18] sm:$0xff] %vm398, %v381
    %403 = vst.msk [vmem:[#allocation3 + $0x20] sm:$0xff] %vm398, %v383
    %404 = vst.msk [vmem:[#allocation3 + $0x28] sm:$0xff] %vm398, %v385
    %405 = vst.msk [vmem:[#allocation3 + $0x30] sm:$0xff] %vm398, %v387
    %406 = vst.msk [vmem:[#allocation3 + $0x38] sm:$0xff] %vm398, %v389
    %v407 = vld [vmem:[%s276 + $0x2] sm:$0xff]
    %v408 = vld [vmem:[%s276 + $0x12] sm:$0xff]
    %v409 = vld [vmem:[%s276 + $0x22] sm:$0xff]
    %v410 = vld [vmem:[%s276 + $0x32] sm:$0xff]
    %v411 = vld [vmem:[%s276 + $0x42] sm:$0xff]
    %v412 = vld [vmem:[%s276 + $0x52] sm:$0xff]
    %v413 = vld [vmem:[%s276 + $0x62] sm:$0xff]
    %v414 = vld [vmem:[%s276 + $0x72] sm:$0xff]
    %v415 = vld [vmem:[%s276 + $0xa2] sm:$0xff]
    %v416 = vld [vmem:[%s276 + $0xb2] sm:$0xff]
    %v417 = vld [vmem:[%s276 + $0xc2] sm:$0xff]
    %v418 = vld [vmem:[%s276 + $0xd2] sm:$0xff]
    %v419 = vld [vmem:[%s276 + $0xe2] sm:$0xff]
    %v420 = vld [vmem:[%s276 + $0xf2] sm:$0xff]
    %v421 = vld [vmem:[%s276 + $0x102] sm:$0xff]
    %v422 = vld [vmem:[%s276 + $0x112] sm:$0xff]
    %v423 = vpack.c.bf16 %v408, %v407
    %v424 = vpack.c.bf16 %v410, %v409
    %v425 = vpack.c.bf16 %v412, %v411
    %v426 = vpack.c.bf16 %v414, %v413
    %v427 = vpack.c.bf16 %v416, %v415
    %v428 = vpack.c.bf16 %v418, %v417
    %v429 = vpack.c.bf16 %v420, %v419
    %v430 = vpack.c.bf16 %v422, %v421
    %439 = vrot.lane.b32.xlu0 %v423, 20
    %v440 = vpop.permute.xlu0 %439
    %441 = vrot.lane.b32.xlu0 %v424, 20
    %v442 = vpop.permute.xlu0 %441
    %443 = vrot.lane.b32.xlu0 %v425, 20
    %v444 = vpop.permute.xlu0 %443
    %445 = vrot.lane.b32.xlu0 %v426, 20
    %v446 = vpop.permute.xlu0 %445
    %447 = vrot.lane.b32.xlu0 %v427, 20
    %v448 = vpop.permute.xlu0 %447
    %449 = vrot.lane.b32.xlu0 %v428, 20
    %v450 = vpop.permute.xlu0 %449
    %451 = vrot.lane.b32.xlu0 %v429, 20
    %v452 = vpop.permute.xlu0 %451
    %453 = vrot.lane.b32.xlu0 %v430, 20
    %v454 = vpop.permute.xlu0 %453
    %vm463 = vcmask 195744
    %464 = vst.msk [vmem:[#allocation3] sm:$0xff] %vm463, %v440
    %465 = vst.msk [vmem:[#allocation3 + $0x8] sm:$0xff] %vm463, %v442
    %466 = vst.msk [vmem:[#allocation3 + $0x10] sm:$0xff] %vm463, %v444
    %467 = vst.msk [vmem:[#allocation3 + $0x18] sm:$0xff] %vm463, %v446
    %468 = vst.msk [vmem:[#allocation3 + $0x20] sm:$0xff] %vm463, %v448
    %469 = vst.msk [vmem:[#allocation3 + $0x28] sm:$0xff] %vm463, %v450
    %470 = vst.msk [vmem:[#allocation3 + $0x30] sm:$0xff] %vm463, %v452
    %471 = vst.msk [vmem:[#allocation3 + $0x38] sm:$0xff] %vm463, %v454
    %s472 = scalar_lea.vmem %s0, 32
    %v473 = vld [vmem:[%s472] sm:$0xff]
    %v474 = vld [vmem:[%s472 + $0x10] sm:$0xff]
    %v475 = vld [vmem:[%s472 + $0x20] sm:$0xff]
    %v476 = vld [vmem:[%s472 + $0x30] sm:$0xff]
    %v477 = vld [vmem:[%s472 + $0x40] sm:$0xff]
    %v478 = vld [vmem:[%s472 + $0x50] sm:$0xff]
    %v479 = vld [vmem:[%s472 + $0x60] sm:$0xff]
    %v480 = vld [vmem:[%s472 + $0x70] sm:$0xff]
    %v481 = vld [vmem:[%s472 + $0xa0] sm:$0xff]
    %v482 = vld [vmem:[%s472 + $0xb0] sm:$0xff]
    %v483 = vld [vmem:[%s472 + $0xc0] sm:$0xff]
    %v484 = vld [vmem:[%s472 + $0xd0] sm:$0xff]
    %v485 = vld [vmem:[%s472 + $0xe0] sm:$0xff]
    %v486 = vld [vmem:[%s472 + $0xf0] sm:$0xff]
    %v487 = vld [vmem:[%s472 + $0x100] sm:$0xff]
    %v488 = vld [vmem:[%s472 + $0x110] sm:$0xff]
    %v489 = vpack.c.bf16 %v474, %v473
    %v490 = vpack.c.bf16 %v476, %v475
    %v491 = vpack.c.bf16 %v478, %v477
    %v492 = vpack.c.bf16 %v480, %v479
    %v493 = vpack.c.bf16 %v482, %v481
    %v494 = vpack.c.bf16 %v484, %v483
    %v495 = vpack.c.bf16 %v486, %v485
    %v496 = vpack.c.bf16 %v488, %v487
    %505 = vrot.lane.b32.xlu0 %v489, 24
    %v506 = vpop.permute.xlu0 %505
    %507 = vrot.lane.b32.xlu0 %v490, 24
    %v508 = vpop.permute.xlu0 %507
    %509 = vrot.lane.b32.xlu0 %v491, 24
    %v510 = vpop.permute.xlu0 %509
    %511 = vrot.lane.b32.xlu0 %v492, 24
    %v512 = vpop.permute.xlu0 %511
    %513 = vrot.lane.b32.xlu0 %v493, 24
    %v514 = vpop.permute.xlu0 %513
    %515 = vrot.lane.b32.xlu0 %v494, 24
    %v516 = vpop.permute.xlu0 %515
    %517 = vrot.lane.b32.xlu0 %v495, 24
    %v518 = vpop.permute.xlu0 %517
    %519 = vrot.lane.b32.xlu0 %v496, 24
    %v520 = vpop.permute.xlu0 %519
    %vm529 = vcmask 228544
    %530 = vst.msk [vmem:[#allocation3] sm:$0xff] %vm529, %v506
    %531 = vst.msk [vmem:[#allocation3 + $0x8] sm:$0xff] %vm529, %v508
    %532 = vst.msk [vmem:[#allocation3 + $0x10] sm:$0xff] %vm529, %v510
    %533 = vst.msk [vmem:[#allocation3 + $0x18] sm:$0xff] %vm529, %v512
    %534 = vst.msk [vmem:[#allocation3 + $0x20] sm:$0xff] %vm529, %v514
    %535 = vst.msk [vmem:[#allocation3 + $0x28] sm:$0xff] %vm529, %v516
    %536 = vst.msk [vmem:[#allocation3 + $0x30] sm:$0xff] %vm529, %v518
    %537 = vst.msk [vmem:[#allocation3 + $0x38] sm:$0xff] %vm529, %v520
    %v538 = vld [vmem:[%s472 + $0x1] sm:$0xff]
    %v539 = vld [vmem:[%s472 + $0x11] sm:$0xff]
    %v540 = vld [vmem:[%s472 + $0x21] sm:$0xff]
    %v541 = vld [vmem:[%s472 + $0x31] sm:$0xff]
    %v542 = vld [vmem:[%s472 + $0x41] sm:$0xff]
    %v543 = vld [vmem:[%s472 + $0x51] sm:$0xff]
    %v544 = vld [vmem:[%s472 + $0x61] sm:$0xff]
    %v545 = vld [vmem:[%s472 + $0x71] sm:$0xff]
    %v546 = vld [vmem:[%s472 + $0xa1] sm:$0xff]
    %v547 = vld [vmem:[%s472 + $0xb1] sm:$0xff]
    %v548 = vld [vmem:[%s472 + $0xc1] sm:$0xff]
    %v549 = vld [vmem:[%s472 + $0xd1] sm:$0xff]
    %v550 = vld [vmem:[%s472 + $0xe1] sm:$0xff]
    %v551 = vld [vmem:[%s472 + $0xf1] sm:$0xff]
    %v552 = vld [vmem:[%s472 + $0x101] sm:$0xff]
    %v553 = vld [vmem:[%s472 + $0x111] sm:$0xff]
    %v554 = vpack.c.bf16 %v539, %v538
    %v555 = vpack.c.bf16 %v541, %v540
    %v556 = vpack.c.bf16 %v543, %v542
    %v557 = vpack.c.bf16 %v545, %v544
    %v558 = vpack.c.bf16 %v547, %v546
    %v559 = vpack.c.bf16 %v549, %v548
    %v560 = vpack.c.bf16 %v551, %v550
    %v561 = vpack.c.bf16 %v553, %v552
    %570 = vrot.lane.b32.xlu0 %v554, 28
    %v571 = vpop.permute.xlu0 %570
    %572 = vrot.lane.b32.xlu0 %v555, 28
    %v573 = vpop.permute.xlu0 %572
    %574 = vrot.lane.b32.xlu0 %v556, 28
    %v575 = vpop.permute.xlu0 %574
    %576 = vrot.lane.b32.xlu0 %v557, 28
    %v577 = vpop.permute.xlu0 %576
    %578 = vrot.lane.b32.xlu0 %v558, 28
    %v579 = vpop.permute.xlu0 %578
    %580 = vrot.lane.b32.xlu0 %v559, 28
    %v581 = vpop.permute.xlu0 %580
    %582 = vrot.lane.b32.xlu0 %v560, 28
    %v583 = vpop.permute.xlu0 %582
    %584 = vrot.lane.b32.xlu0 %v561, 28
    %v585 = vpop.permute.xlu0 %584
    %vm594 = vcmask 261344
    %595 = vst.msk [vmem:[#allocation3] sm:$0xff] %vm594, %v571
    %596 = vst.msk [vmem:[#allocation3 + $0x8] sm:$0xff] %vm594, %v573
    %597 = vst.msk [vmem:[#allocation3 + $0x10] sm:$0xff] %vm594, %v575
    %598 = vst.msk [vmem:[#allocation3 + $0x18] sm:$0xff] %vm594, %v577
    %599 = vst.msk [vmem:[#allocation3 + $0x20] sm:$0xff] %vm594, %v579
    %600 = vst.msk [vmem:[#allocation3 + $0x28] sm:$0xff] %vm594, %v581
    %601 = vst.msk [vmem:[#allocation3 + $0x30] sm:$0xff] %vm594, %v583
    %602 = vst.msk [vmem:[#allocation3 + $0x38] sm:$0xff] %vm594, %v585
    %v603 = vld [vmem:[%s472 + $0x2] sm:$0xff]
    %v604 = vld [vmem:[%s472 + $0x12] sm:$0xff]
    %v605 = vld [vmem:[%s472 + $0x22] sm:$0xff]
    %v606 = vld [vmem:[%s472 + $0x32] sm:$0xff]
    %v607 = vld [vmem:[%s472 + $0x42] sm:$0xff]
    %v608 = vld [vmem:[%s472 + $0x52] sm:$0xff]
    %v609 = vld [vmem:[%s472 + $0x62] sm:$0xff]
    %v610 = vld [vmem:[%s472 + $0x72] sm:$0xff]
    %v611 = vld [vmem:[%s472 + $0xa2] sm:$0xff]
    %v612 = vld [vmem:[%s472 + $0xb2] sm:$0xff]
    %v613 = vld [vmem:[%s472 + $0xc2] sm:$0xff]
    %v614 = vld [vmem:[%s472 + $0xd2] sm:$0xff]
    %v615 = vld [vmem:[%s472 + $0xe2] sm:$0xff]
    %v616 = vld [vmem:[%s472 + $0xf2] sm:$0xff]
    %v617 = vld [vmem:[%s472 + $0x102] sm:$0xff]
    %v618 = vld [vmem:[%s472 + $0x112] sm:$0xff]
    %v619 = vpack.c.bf16 %v604, %v603
    %v620 = vpack.c.bf16 %v606, %v605
    %v621 = vpack.c.bf16 %v608, %v607
    %v622 = vpack.c.bf16 %v610, %v609
    %v623 = vpack.c.bf16 %v612, %v611
    %v624 = vpack.c.bf16 %v614, %v613
    %v625 = vpack.c.bf16 %v616, %v615
    %v626 = vpack.c.bf16 %v618, %v617
    %635 = vrot.lane.b32.xlu0 %v619, 32
    %v636 = vpop.permute.xlu0 %635
    %637 = vrot.lane.b32.xlu0 %v620, 32
    %v638 = vpop.permute.xlu0 %637
    %639 = vrot.lane.b32.xlu0 %v621, 32
    %v640 = vpop.permute.xlu0 %639
    %641 = vrot.lane.b32.xlu0 %v622, 32
    %v642 = vpop.permute.xlu0 %641
    %643 = vrot.lane.b32.xlu0 %v623, 32
    %v644 = vpop.permute.xlu0 %643
    %645 = vrot.lane.b32.xlu0 %v624, 32
    %v646 = vpop.permute.xlu0 %645
    %647 = vrot.lane.b32.xlu0 %v625, 32
    %v648 = vpop.permute.xlu0 %647
    %649 = vrot.lane.b32.xlu0 %v626, 32
    %v650 = vpop.permute.xlu0 %649
    %vm659 = vcmask 294144
    %660 = vst.msk [vmem:[#allocation3] sm:$0xff] %vm659, %v636
    %661 = vst.msk [vmem:[#allocation3 + $0x8] sm:$0xff] %vm659, %v638
    %662 = vst.msk [vmem:[#allocation3 + $0x10] sm:$0xff] %vm659, %v640
    %663 = vst.msk [vmem:[#allocation3 + $0x18] sm:$0xff] %vm659, %v642
    %664 = vst.msk [vmem:[#allocation3 + $0x20] sm:$0xff] %vm659, %v644
    %665 = vst.msk [vmem:[#allocation3 + $0x28] sm:$0xff] %vm659, %v646
    %666 = vst.msk [vmem:[#allocation3 + $0x30] sm:$0xff] %vm659, %v648
    %667 = vst.msk [vmem:[#allocation3 + $0x38] sm:$0xff] %vm659, %v650
    %v668 = vld [vmem:[#allocation3] sm:$0xff]
    %v669 = vld [vmem:[#allocation3 + $0x8] sm:$0xff]
    %v670 = vld [vmem:[#allocation3 + $0x10] sm:$0xff]
    %v671 = vld [vmem:[#allocation3 + $0x18] sm:$0xff]
    %v672 = vld [vmem:[#allocation3 + $0x20] sm:$0xff]
    %v673 = vld [vmem:[#allocation3 + $0x28] sm:$0xff]
    %v674 = vld [vmem:[#allocation3 + $0x30] sm:$0xff]
    %v675 = vld [vmem:[#allocation3 + $0x38] sm:$0xff]
    %v676 = vld [vmem:[%s1] sm:$0xf]
    %v677 = vld [vmem:[%s1 + $0x4] sm:$0xf]
    %v678 = vld [vmem:[%s1 + $0x8] sm:$0xf]
    %v679 = vld [vmem:[%s1 + $0xc] sm:$0xf]
    %v680 = vld [vmem:[%s1 + $0x10] sm:$0x3]
    %v681 = vld [vmem:[%s2] sm:$0x1]
    %v683 = vlaneseq
    %v684 = vshrl.u32 %v683, 7
    %v685 = vsub.s32 0, %v684
    %v686 = vrot.slane %v681, %v685
    %v693 = vunpack.c.l.b16 %v676
    %v694 = vunpack.c.l.b16 %v677
    %v695 = vunpack.c.l.b16 %v678
    %v696 = vunpack.c.l.b16 %v679
    %v697 = vunpack.c.l.b16 %v680
    %v698 = vpack.c.b16 %v694, %v693
    %v699 = vpack.c.b16 %v696, %v695
    %v700 = vpack.c.b16 %v697, %v697
    %vm703 = vcmask 293888
    %v705 = vsel %vm703, %v668, 0
    %v708 = vsel %vm703, %v669, 0
    %v711 = vsel %vm703, %v670, 0
    %v714 = vsel %vm703, %v671, 0
    %v717 = vsel %vm703, %v672, 0
    %v720 = vsel %vm703, %v673, 0
    %v723 = vsel %vm703, %v674, 0
    %v726 = vsel %vm703, %v675, 0
    %vm728 = vcmask 1041408
    %v730 = vsel %vm728, %v700, 0
    %732 = vmatprep.subr.bf16.mxu0 0
    %733 = vmatpush1.bf16.msra.mxu0 %v698
    %734 = vmatprep.subr.bf16.mxu0 0
    %735 = vmatpush1.bf16.msra.mxu0 %v699
    %736 = vmatprep.subr.bf16.mxu0 0
    %737 = vmatpush1.bf16.msra.mxu0 %v730
    %738 = vmatprep.subr.bf16.mxu0 0
    %739 = vmatpush1.bf16.msra.mxu0 0
    %740 = vmatprep.subr.bf16.mxu0 0
    %741 = vmatpush1.bf16.msra.mxu0 0
    %742 = vmatprep.subr.bf16.mxu0 0
    %743 = vmatpush1.bf16.msra.mxu0 0
    %744 = vmatprep.subr.bf16.mxu0 0
    %745 = vmatpush1.bf16.msra.mxu0 0
    %746 = vmatprep.subr.bf16.mxu0 0
    %747 = vmatpush1.bf16.msra.mxu0 0
    %748 = vmatprep.subr.bf16.mxu0 0
    %749 = vmatpush1.bf16.msra.mxu0 0
    %750 = vmatprep.subr.bf16.mxu0 0
    %751 = vmatpush1.bf16.msra.mxu0 0
    %752 = vmatprep.subr.bf16.mxu0 0
    %753 = vmatpush1.bf16.msra.mxu0 0
    %754 = vmatprep.subr.bf16.mxu0 0
    %755 = vmatpush1.bf16.msra.mxu0 0
    %756 = vmatprep.subr.bf16.mxu0 0
    %757 = vmatpush1.bf16.msra.mxu0 0
    %758 = vmatprep.subr.bf16.mxu0 0
    %759 = vmatpush1.bf16.msra.mxu0 0
    %760 = vmatprep.subr.bf16.mxu0 0
    %761 = vmatpush1.bf16.msra.mxu0 0
    %762 = vmatprep.subr.bf16.mxu0 0
    %763 = vmatpush1.bf16.msra.mxu0 0
    %764 = vmatprep.mubr.bf16.mxu0 0
    %765 = vmatmul.mubr.bf16.gmra.mrb[0].mxu0 %v705
    %v766 = vpop.f32.mrb[0].mxu0
    %v767 = vadd.f32 %v686, %v766
    %v768 = vpop.f32.mrb[0].mxu0
    %v769 = vpop.f32.mrb[0].mxu0
    %v770 = vadd.f32 %v686, %v769
    %v771 = vpop.f32.mrb[0].mxu0
    %772 = vmatprep.mubr.bf16.mxu0 0
    %773 = vmatmul.mubr.bf16.gmra.mrb[0].mxu0 %v708
    %v774 = vpop.f32.mrb[0].mxu0
    %v775 = vadd.f32 %v686, %v774
    %v776 = vpop.f32.mrb[0].mxu0
    %v777 = vpop.f32.mrb[0].mxu0
    %v778 = vadd.f32 %v686, %v777
    %v779 = vpop.f32.mrb[0].mxu0
    %780 = vmatprep.mubr.bf16.mxu0 0
    %781 = vmatmul.mubr.bf16.gmra.mrb[0].mxu0 %v711
    %v782 = vpop.f32.mrb[0].mxu0
    %v783 = vadd.f32 %v686, %v782
    %v784 = vpop.f32.mrb[0].mxu0
    %v785 = vpop.f32.mrb[0].mxu0
    %v786 = vadd.f32 %v686, %v785
    %v787 = vpop.f32.mrb[0].mxu0
    %788 = vmatprep.mubr.bf16.mxu0 0
    %789 = vmatmul.mubr.bf16.gmra.mrb[0].mxu0 %v714
    %v790 = vpop.f32.mrb[0].mxu0
    %v791 = vadd.f32 %v686, %v790
    %v792 = vpop.f32.mrb[0].mxu0
    %v793 = vpop.f32.mrb[0].mxu0
    %v794 = vadd.f32 %v686, %v793
    %v795 = vpop.f32.mrb[0].mxu0
    %796 = vmatprep.mubr.bf16.mxu0 0
    %797 = vmatmul.mubr.bf16.gmra.mrb[0].mxu0 %v717
    %v798 = vpop.f32.mrb[0].mxu0
    %v799 = vadd.f32 %v686, %v798
    %v800 = vpop.f32.mrb[0].mxu0
    %v801 = vpop.f32.mrb[0].mxu0
    %v802 = vadd.f32 %v686, %v801
    %v803 = vpop.f32.mrb[0].mxu0
    %804 = vmatprep.mubr.bf16.mxu0 0
    %805 = vmatmul.mubr.bf16.gmra.mrb[0].mxu0 %v720
    %v806 = vpop.f32.mrb[0].mxu0
    %v807 = vadd.f32 %v686, %v806
    %v808 = vpop.f32.mrb[0].mxu0
    %v809 = vpop.f32.mrb[0].mxu0
    %v810 = vadd.f32 %v686, %v809
    %v811 = vpop.f32.mrb[0].mxu0
    %812 = vmatprep.mubr.bf16.mxu0 0
    %813 = vmatmul.mubr.bf16.gmra.mrb[0].mxu0 %v723
    %v814 = vpop.f32.mrb[0].mxu0
    %v815 = vadd.f32 %v686, %v814
    %v816 = vpop.f32.mrb[0].mxu0
    %v817 = vpop.f32.mrb[0].mxu0
    %v818 = vadd.f32 %v686, %v817
    %v819 = vpop.f32.mrb[0].mxu0
    %820 = vmatprep.mubr.bf16.mxu0 0
    %821 = vmatmul.mubr.bf16.gmra.mrb[0].mxu0 %v726
    %v822 = vpop.f32.mrb[0].mxu0
    %v823 = vadd.f32 %v686, %v822
    %v824 = vpop.f32.mrb[0].mxu0
    %v825 = vpop.f32.mrb[0].mxu0
    %v826 = vadd.f32 %v686, %v825
    %v827 = vpop.f32.mrb[0].mxu0
    %828 = vdwg.mxu0
    %v829 = vmax.f32 %v767, 0.0
    %v830 = vmax.f32 %v770, 0.0
    %v831 = vmax.f32 %v775, 0.0
    %v832 = vmax.f32 %v778, 0.0
    %v833 = vmax.f32 %v783, 0.0
    %v834 = vmax.f32 %v786, 0.0
    %v835 = vmax.f32 %v791, 0.0
    %v836 = vmax.f32 %v794, 0.0
    %v837 = vmax.f32 %v799, 0.0
    %v838 = vmax.f32 %v802, 0.0
    %v839 = vmax.f32 %v807, 0.0
    %v840 = vmax.f32 %v810, 0.0
    %v841 = vmax.f32 %v815, 0.0
    %v842 = vmax.f32 %v818, 0.0
    %v843 = vmax.f32 %v823, 0.0
    %v844 = vmax.f32 %v826, 0.0
    %s845 = scalar_lea.vmem [#allocation2], 16
    %846 = vst.msk [vmem:[%s845 + $0x1] sm:$0xff] %vm61, %v829
    %847 = vst.msk [vmem:[%s845 + $0x11] sm:$0xff] %vm61, %v830
    %848 = vst.msk [vmem:[%s845 + $0x21] sm:$0xff] %vm61, %v831
    %849 = vst.msk [vmem:[%s845 + $0x31] sm:$0xff] %vm61, %v832
    %850 = vst.msk [vmem:[%s845 + $0x41] sm:$0xff] %vm61, %v833
    %851 = vst.msk [vmem:[%s845 + $0x51] sm:$0xff] %vm61, %v834
    %852 = vst.msk [vmem:[%s845 + $0x61] sm:$0xff] %vm61, %v835
    %853 = vst.msk [vmem:[%s845 + $0x71] sm:$0xff] %vm61, %v836
    %854 = vst.msk [vmem:[%s845 + $0xa1] sm:$0xff] %vm61, %v837
    %855 = vst.msk [vmem:[%s845 + $0xb1] sm:$0xff] %vm61, %v838
    %856 = vst.msk [vmem:[%s845 + $0xc1] sm:$0xff] %vm61, %v839
    %857 = vst.msk [vmem:[%s845 + $0xd1] sm:$0xff] %vm61, %v840
    %858 = vst.msk [vmem:[%s845 + $0xe1] sm:$0xff] %vm61, %v841
    %859 = vst.msk [vmem:[%s845 + $0xf1] sm:$0xff] %vm61, %v842
    %860 = vst.msk [vmem:[%s845 + $0x101] sm:$0xff] %vm61, %v843
    %861 = vst.msk [vmem:[%s845 + $0x111] sm:$0xff] %vm61, %v844
    loop: start=0, step=1, limit=2
    $region66: #{_lambda_.1} parent=1 // loop_pre_header
      _
    $region67: #{_lambda_.1} parent=1 // loop_header
      %s863 = sphi 0, %s867
      %p864 = scmp.ge.s32.totalorder %s863, 2
      %v868 = vphi %v829, %v2403
      %v869 = vphi %v830, %v2404
      %v870 = vphi %v831, %v2405
      %v871 = vphi %v832, %v2406
      %v872 = vphi %v833, %v2407
      %v873 = vphi %v834, %v2408
      %v874 = vphi %v835, %v2409
      %v875 = vphi %v836, %v2410
      %v876 = vphi %v837, %v2411
      %v877 = vphi %v838, %v2412
      %v878 = vphi %v839, %v2413
      %v879 = vphi %v840, %v2414
      %v880 = vphi %v841, %v2415
      %v881 = vphi %v842, %v2416
      %v882 = vphi %v843, %v2417
      %v883 = vphi %v844, %v2418
    $region68: #{_lambda_.1} parent=1 // loop_header_branch
      %866 = sbr.rel (%p864) target = $region72
    $region69: #{_lambda_.1} parent=1 // loop_body
      %v884 = vld [vmem:[#allocation2] sm:$0xff]
      %v885 = vld [vmem:[#allocation2 + $0x10] sm:$0xff]
      %v886 = vld [vmem:[#allocation2 + $0x20] sm:$0xff]
      %v887 = vld [vmem:[#allocation2 + $0x30] sm:$0xff]
      %v888 = vld [vmem:[#allocation2 + $0x40] sm:$0xff]
      %v889 = vld [vmem:[#allocation2 + $0x50] sm:$0xff]
      %v890 = vld [vmem:[#allocation2 + $0x60] sm:$0xff]
      %v891 = vld [vmem:[#allocation2 + $0x70] sm:$0xff]
      %v892 = vld [vmem:[#allocation2 + $0xa0] sm:$0xff]
      %v893 = vld [vmem:[#allocation2 + $0xb0] sm:$0xff]
      %v894 = vld [vmem:[#allocation2 + $0xc0] sm:$0xff]
      %v895 = vld [vmem:[#allocation2 + $0xd0] sm:$0xff]
      %v896 = vld [vmem:[#allocation2 + $0xe0] sm:$0xff]
      %v897 = vld [vmem:[#allocation2 + $0xf0] sm:$0xff]
      %v898 = vld [vmem:[#allocation2 + $0x100] sm:$0xff]
      %v899 = vld [vmem:[#allocation2 + $0x110] sm:$0xff]
      %v900 = vpack.c.bf16 %v885, %v884
      %v901 = vpack.c.bf16 %v887, %v886
      %v902 = vpack.c.bf16 %v889, %v888
      %v903 = vpack.c.bf16 %v891, %v890
      %v904 = vpack.c.bf16 %v893, %v892
      %v905 = vpack.c.bf16 %v895, %v894
      %v906 = vpack.c.bf16 %v897, %v896
      %v907 = vpack.c.bf16 %v899, %v898
      %908 = vst.msk [vmem:[#allocation4] sm:$0xff] %vm61, %v900
      %909 = vst.msk [vmem:[#allocation4 + $0x10] sm:$0xff] %vm61, %v901
      %910 = vst.msk [vmem:[#allocation4 + $0x20] sm:$0xff] %vm61, %v902
      %911 = vst.msk [vmem:[#allocation4 + $0x30] sm:$0xff] %vm61, %v903
      %912 = vst.msk [vmem:[#allocation4 + $0x40] sm:$0xff] %vm61, %v904
      %913 = vst.msk [vmem:[#allocation4 + $0x50] sm:$0xff] %vm61, %v905
      %914 = vst.msk [vmem:[#allocation4 + $0x60] sm:$0xff] %vm61, %v906
      %915 = vst.msk [vmem:[#allocation4 + $0x70] sm:$0xff] %vm61, %v907
      %v916 = vld [vmem:[#allocation2 + $0x1] sm:$0xff]
      %v917 = vld [vmem:[#allocation2 + $0x11] sm:$0xff]
      %v918 = vld [vmem:[#allocation2 + $0x21] sm:$0xff]
      %v919 = vld [vmem:[#allocation2 + $0x31] sm:$0xff]
      %v920 = vld [vmem:[#allocation2 + $0x41] sm:$0xff]
      %v921 = vld [vmem:[#allocation2 + $0x51] sm:$0xff]
      %v922 = vld [vmem:[#allocation2 + $0x61] sm:$0xff]
      %v923 = vld [vmem:[#allocation2 + $0x71] sm:$0xff]
      %v924 = vld [vmem:[#allocation2 + $0xa1] sm:$0xff]
      %v925 = vld [vmem:[#allocation2 + $0xb1] sm:$0xff]
      %v926 = vld [vmem:[#allocation2 + $0xc1] sm:$0xff]
      %v927 = vld [vmem:[#allocation2 + $0xd1] sm:$0xff]
      %v928 = vld [vmem:[#allocation2 + $0xe1] sm:$0xff]
      %v929 = vld [vmem:[#allocation2 + $0xf1] sm:$0xff]
      %v930 = vld [vmem:[#allocation2 + $0x101] sm:$0xff]
      %v931 = vld [vmem:[#allocation2 + $0x111] sm:$0xff]
      %v932 = vpack.c.bf16 %v917, %v916
      %v933 = vpack.c.bf16 %v919, %v918
      %v934 = vpack.c.bf16 %v921, %v920
      %v935 = vpack.c.bf16 %v923, %v922
      %v936 = vpack.c.bf16 %v925, %v924
      %v937 = vpack.c.bf16 %v927, %v926
      %v938 = vpack.c.bf16 %v929, %v928
      %v939 = vpack.c.bf16 %v931, %v930
      %948 = vrot.lane.b32.xlu0 %v932, 16
      %v949 = vpop.permute.xlu0 %948
      %950 = vrot.lane.b32.xlu0 %v933, 16
      %v951 = vpop.permute.xlu0 %950
      %952 = vrot.lane.b32.xlu0 %v934, 16
      %v953 = vpop.permute.xlu0 %952
      %954 = vrot.lane.b32.xlu0 %v935, 16
      %v955 = vpop.permute.xlu0 %954
      %956 = vrot.lane.b32.xlu0 %v936, 16
      %v957 = vpop.permute.xlu0 %956
      %958 = vrot.lane.b32.xlu0 %v937, 16
      %v959 = vpop.permute.xlu0 %958
      %960 = vrot.lane.b32.xlu0 %v938, 16
      %v961 = vpop.permute.xlu0 %960
      %962 = vrot.lane.b32.xlu0 %v939, 16
      %v963 = vpop.permute.xlu0 %962
      %vm972 = vcmask 261248
      %973 = vst.msk [vmem:[#allocation4] sm:$0xff] %vm972, %v949
      %974 = vst.msk [vmem:[#allocation4 + $0x10] sm:$0xff] %vm972, %v951
      %975 = vst.msk [vmem:[#allocation4 + $0x20] sm:$0xff] %vm972, %v953
      %976 = vst.msk [vmem:[#allocation4 + $0x30] sm:$0xff] %vm972, %v955
      %977 = vst.msk [vmem:[#allocation4 + $0x40] sm:$0xff] %vm972, %v957
      %978 = vst.msk [vmem:[#allocation4 + $0x50] sm:$0xff] %vm972, %v959
      %979 = vst.msk [vmem:[#allocation4 + $0x60] sm:$0xff] %vm972, %v961
      %980 = vst.msk [vmem:[#allocation4 + $0x70] sm:$0xff] %vm972, %v963
      %v981 = vld [vmem:[#allocation2 + $0x2] sm:$0xff]
      %v982 = vld [vmem:[#allocation2 + $0x12] sm:$0xff]
      %v983 = vld [vmem:[#allocation2 + $0x22] sm:$0xff]
      %v984 = vld [vmem:[#allocation2 + $0x32] sm:$0xff]
      %v985 = vld [vmem:[#allocation2 + $0x42] sm:$0xff]
      %v986 = vld [vmem:[#allocation2 + $0x52] sm:$0xff]
      %v987 = vld [vmem:[#allocation2 + $0x62] sm:$0xff]
      %v988 = vld [vmem:[#allocation2 + $0x72] sm:$0xff]
      %v989 = vld [vmem:[#allocation2 + $0xa2] sm:$0xff]
      %v990 = vld [vmem:[#allocation2 + $0xb2] sm:$0xff]
      %v991 = vld [vmem:[#allocation2 + $0xc2] sm:$0xff]
      %v992 = vld [vmem:[#allocation2 + $0xd2] sm:$0xff]
      %v993 = vld [vmem:[#allocation2 + $0xe2] sm:$0xff]
      %v994 = vld [vmem:[#allocation2 + $0xf2] sm:$0xff]
      %v995 = vld [vmem:[#allocation2 + $0x102] sm:$0xff]
      %v996 = vld [vmem:[#allocation2 + $0x112] sm:$0xff]
      %v997 = vpack.c.bf16 %v982, %v981
      %v998 = vpack.c.bf16 %v984, %v983
      %v999 = vpack.c.bf16 %v986, %v985
      %v1000 = vpack.c.bf16 %v988, %v987
      %v1001 = vpack.c.bf16 %v990, %v989
      %v1002 = vpack.c.bf16 %v992, %v991
      %v1003 = vpack.c.bf16 %v994, %v993
      %v1004 = vpack.c.bf16 %v996, %v995
      %1013 = vrot.lane.b32.xlu0 %v997, 32
      %v1014 = vpop.permute.xlu0 %1013
      %1015 = vrot.lane.b32.xlu0 %v998, 32
      %v1016 = vpop.permute.xlu0 %1015
      %1017 = vrot.lane.b32.xlu0 %v999, 32
      %v1018 = vpop.permute.xlu0 %1017
      %1019 = vrot.lane.b32.xlu0 %v1000, 32
      %v1020 = vpop.permute.xlu0 %1019
      %1021 = vrot.lane.b32.xlu0 %v1001, 32
      %v1022 = vpop.permute.xlu0 %1021
      %1023 = vrot.lane.b32.xlu0 %v1002, 32
      %v1024 = vpop.permute.xlu0 %1023
      %1025 = vrot.lane.b32.xlu0 %v1003, 32
      %v1026 = vpop.permute.xlu0 %1025
      %1027 = vrot.lane.b32.xlu0 %v1004, 32
      %v1028 = vpop.permute.xlu0 %1027
      %vm1037 = vcmask 392448
      %1038 = vst.msk [vmem:[#allocation4] sm:$0xff] %vm1037, %v1014
      %1039 = vst.msk [vmem:[#allocation4 + $0x10] sm:$0xff] %vm1037, %v1016
      %1040 = vst.msk [vmem:[#allocation4 + $0x20] sm:$0xff] %vm1037, %v1018
      %1041 = vst.msk [vmem:[#allocation4 + $0x30] sm:$0xff] %vm1037, %v1020
      %1042 = vst.msk [vmem:[#allocation4 + $0x40] sm:$0xff] %vm1037, %v1022
      %1043 = vst.msk [vmem:[#allocation4 + $0x50] sm:$0xff] %vm1037, %v1024
      %1044 = vst.msk [vmem:[#allocation4 + $0x60] sm:$0xff] %vm1037, %v1026
      %1045 = vst.msk [vmem:[#allocation4 + $0x70] sm:$0xff] %vm1037, %v1028
      %v1046 = vld [vmem:[%s845] sm:$0xff]
      %v1047 = vld [vmem:[%s845 + $0x10] sm:$0xff]
      %v1048 = vld [vmem:[%s845 + $0x20] sm:$0xff]
      %v1049 = vld [vmem:[%s845 + $0x30] sm:$0xff]
      %v1050 = vld [vmem:[%s845 + $0x40] sm:$0xff]
      %v1051 = vld [vmem:[%s845 + $0x50] sm:$0xff]
      %v1052 = vld [vmem:[%s845 + $0x60] sm:$0xff]
      %v1053 = vld [vmem:[%s845 + $0x70] sm:$0xff]
      %v1054 = vld [vmem:[%s845 + $0xa0] sm:$0xff]
      %v1055 = vld [vmem:[%s845 + $0xb0] sm:$0xff]
      %v1056 = vld [vmem:[%s845 + $0xc0] sm:$0xff]
      %v1057 = vld [vmem:[%s845 + $0xd0] sm:$0xff]
      %v1058 = vld [vmem:[%s845 + $0xe0] sm:$0xff]
      %v1059 = vld [vmem:[%s845 + $0xf0] sm:$0xff]
      %v1060 = vld [vmem:[%s845 + $0x100] sm:$0xff]
      %v1061 = vld [vmem:[%s845 + $0x110] sm:$0xff]
      %v1062 = vpack.c.bf16 %v1047, %v1046
      %v1063 = vpack.c.bf16 %v1049, %v1048
      %v1064 = vpack.c.bf16 %v1051, %v1050
      %v1065 = vpack.c.bf16 %v1053, %v1052
      %v1066 = vpack.c.bf16 %v1055, %v1054
      %v1067 = vpack.c.bf16 %v1057, %v1056
      %v1068 = vpack.c.bf16 %v1059, %v1058
      %v1069 = vpack.c.bf16 %v1061, %v1060
      %1078 = vrot.lane.b32.xlu0 %v1062, 48
      %v1079 = vpop.permute.xlu0 %1078
      %1080 = vrot.lane.b32.xlu0 %v1063, 48
      %v1081 = vpop.permute.xlu0 %1080
      %1082 = vrot.lane.b32.xlu0 %v1064, 48
      %v1083 = vpop.permute.xlu0 %1082
      %1084 = vrot.lane.b32.xlu0 %v1065, 48
      %v1085 = vpop.permute.xlu0 %1084
      %1086 = vrot.lane.b32.xlu0 %v1066, 48
      %v1087 = vpop.permute.xlu0 %1086
      %1088 = vrot.lane.b32.xlu0 %v1067, 48
      %v1089 = vpop.permute.xlu0 %1088
      %1090 = vrot.lane.b32.xlu0 %v1068, 48
      %v1091 = vpop.permute.xlu0 %1090
      %1092 = vrot.lane.b32.xlu0 %v1069, 48
      %v1093 = vpop.permute.xlu0 %1092
      %vm1102 = vcmask 523648
      %1103 = vst.msk [vmem:[#allocation4] sm:$0xff] %vm1102, %v1079
      %1104 = vst.msk [vmem:[#allocation4 + $0x10] sm:$0xff] %vm1102, %v1081
      %1105 = vst.msk [vmem:[#allocation4 + $0x20] sm:$0xff] %vm1102, %v1083
      %1106 = vst.msk [vmem:[#allocation4 + $0x30] sm:$0xff] %vm1102, %v1085
      %1107 = vst.msk [vmem:[#allocation4 + $0x40] sm:$0xff] %vm1102, %v1087
      %1108 = vst.msk [vmem:[#allocation4 + $0x50] sm:$0xff] %vm1102, %v1089
      %1109 = vst.msk [vmem:[#allocation4 + $0x60] sm:$0xff] %vm1102, %v1091
      %1110 = vst.msk [vmem:[#allocation4 + $0x70] sm:$0xff] %vm1102, %v1093
      %v1111 = vld [vmem:[%s845 + $0x1] sm:$0xff]
      %v1112 = vld [vmem:[%s845 + $0x11] sm:$0xff]
      %v1113 = vld [vmem:[%s845 + $0x21] sm:$0xff]
      %v1114 = vld [vmem:[%s845 + $0x31] sm:$0xff]
      %v1115 = vld [vmem:[%s845 + $0x41] sm:$0xff]
      %v1116 = vld [vmem:[%s845 + $0x51] sm:$0xff]
      %v1117 = vld [vmem:[%s845 + $0x61] sm:$0xff]
      %v1118 = vld [vmem:[%s845 + $0x71] sm:$0xff]
      %v1119 = vld [vmem:[%s845 + $0xa1] sm:$0xff]
      %v1120 = vld [vmem:[%s845 + $0xb1] sm:$0xff]
      %v1121 = vld [vmem:[%s845 + $0xc1] sm:$0xff]
      %v1122 = vld [vmem:[%s845 + $0xd1] sm:$0xff]
      %v1123 = vld [vmem:[%s845 + $0xe1] sm:$0xff]
      %v1124 = vld [vmem:[%s845 + $0xf1] sm:$0xff]
      %v1125 = vld [vmem:[%s845 + $0x101] sm:$0xff]
      %v1126 = vld [vmem:[%s845 + $0x111] sm:$0xff]
      %v1127 = vpack.c.bf16 %v1112, %v1111
      %v1128 = vpack.c.bf16 %v1114, %v1113
      %v1129 = vpack.c.bf16 %v1116, %v1115
      %v1130 = vpack.c.bf16 %v1118, %v1117
      %v1131 = vpack.c.bf16 %v1120, %v1119
      %v1132 = vpack.c.bf16 %v1122, %v1121
      %v1133 = vpack.c.bf16 %v1124, %v1123
      %v1134 = vpack.c.bf16 %v1126, %v1125
      %1143 = vrot.lane.b32.xlu0 %v1127, 64
      %v1144 = vpop.permute.xlu0 %1143
      %1145 = vrot.lane.b32.xlu0 %v1128, 64
      %v1146 = vpop.permute.xlu0 %1145
      %1147 = vrot.lane.b32.xlu0 %v1129, 64
      %v1148 = vpop.permute.xlu0 %1147
      %1149 = vrot.lane.b32.xlu0 %v1130, 64
      %v1150 = vpop.permute.xlu0 %1149
      %1151 = vrot.lane.b32.xlu0 %v1131, 64
      %v1152 = vpop.permute.xlu0 %1151
      %1153 = vrot.lane.b32.xlu0 %v1132, 64
      %v1154 = vpop.permute.xlu0 %1153
      %1155 = vrot.lane.b32.xlu0 %v1133, 64
      %v1156 = vpop.permute.xlu0 %1155
      %1157 = vrot.lane.b32.xlu0 %v1134, 64
      %v1158 = vpop.permute.xlu0 %1157
      %vm1167 = vcmask 654848
      %1168 = vst.msk [vmem:[#allocation4] sm:$0xff] %vm1167, %v1144
      %1169 = vst.msk [vmem:[#allocation4 + $0x10] sm:$0xff] %vm1167, %v1146
      %1170 = vst.msk [vmem:[#allocation4 + $0x20] sm:$0xff] %vm1167, %v1148
      %1171 = vst.msk [vmem:[#allocation4 + $0x30] sm:$0xff] %vm1167, %v1150
      %1172 = vst.msk [vmem:[#allocation4 + $0x40] sm:$0xff] %vm1167, %v1152
      %1173 = vst.msk [vmem:[#allocation4 + $0x50] sm:$0xff] %vm1167, %v1154
      %1174 = vst.msk [vmem:[#allocation4 + $0x60] sm:$0xff] %vm1167, %v1156
      %1175 = vst.msk [vmem:[#allocation4 + $0x70] sm:$0xff] %vm1167, %v1158
      %v1176 = vld [vmem:[%s845 + $0x2] sm:$0xff]
      %v1177 = vld [vmem:[%s845 + $0x12] sm:$0xff]
      %v1178 = vld [vmem:[%s845 + $0x22] sm:$0xff]
      %v1179 = vld [vmem:[%s845 + $0x32] sm:$0xff]
      %v1180 = vld [vmem:[%s845 + $0x42] sm:$0xff]
      %v1181 = vld [vmem:[%s845 + $0x52] sm:$0xff]
      %v1182 = vld [vmem:[%s845 + $0x62] sm:$0xff]
      %v1183 = vld [vmem:[%s845 + $0x72] sm:$0xff]
      %v1184 = vld [vmem:[%s845 + $0xa2] sm:$0xff]
      %v1185 = vld [vmem:[%s845 + $0xb2] sm:$0xff]
      %v1186 = vld [vmem:[%s845 + $0xc2] sm:$0xff]
      %v1187 = vld [vmem:[%s845 + $0xd2] sm:$0xff]
      %v1188 = vld [vmem:[%s845 + $0xe2] sm:$0xff]
      %v1189 = vld [vmem:[%s845 + $0xf2] sm:$0xff]
      %v1190 = vld [vmem:[%s845 + $0x102] sm:$0xff]
      %v1191 = vld [vmem:[%s845 + $0x112] sm:$0xff]
      %v1192 = vpack.c.bf16 %v1177, %v1176
      %v1193 = vpack.c.bf16 %v1179, %v1178
      %v1194 = vpack.c.bf16 %v1181, %v1180
      %v1195 = vpack.c.bf16 %v1183, %v1182
      %v1196 = vpack.c.bf16 %v1185, %v1184
      %v1197 = vpack.c.bf16 %v1187, %v1186
      %v1198 = vpack.c.bf16 %v1189, %v1188
      %v1199 = vpack.c.bf16 %v1191, %v1190
      %1208 = vrot.lane.b32.xlu0 %v1192, 80
      %v1209 = vpop.permute.xlu0 %1208
      %1210 = vrot.lane.b32.xlu0 %v1193, 80
      %v1211 = vpop.permute.xlu0 %1210
      %1212 = vrot.lane.b32.xlu0 %v1194, 80
      %v1213 = vpop.permute.xlu0 %1212
      %1214 = vrot.lane.b32.xlu0 %v1195, 80
      %v1215 = vpop.permute.xlu0 %1214
      %1216 = vrot.lane.b32.xlu0 %v1196, 80
      %v1217 = vpop.permute.xlu0 %1216
      %1218 = vrot.lane.b32.xlu0 %v1197, 80
      %v1219 = vpop.permute.xlu0 %1218
      %1220 = vrot.lane.b32.xlu0 %v1198, 80
      %v1221 = vpop.permute.xlu0 %1220
      %1222 = vrot.lane.b32.xlu0 %v1199, 80
      %v1223 = vpop.permute.xlu0 %1222
      %vm1232 = vcmask 786048
      %1233 = vst.msk [vmem:[#allocation4] sm:$0xff] %vm1232, %v1209
      %1234 = vst.msk [vmem:[#allocation4 + $0x10] sm:$0xff] %vm1232, %v1211
      %1235 = vst.msk [vmem:[#allocation4 + $0x20] sm:$0xff] %vm1232, %v1213
      %1236 = vst.msk [vmem:[#allocation4 + $0x30] sm:$0xff] %vm1232, %v1215
      %1237 = vst.msk [vmem:[#allocation4 + $0x40] sm:$0xff] %vm1232, %v1217
      %1238 = vst.msk [vmem:[#allocation4 + $0x50] sm:$0xff] %vm1232, %v1219
      %1239 = vst.msk [vmem:[#allocation4 + $0x60] sm:$0xff] %vm1232, %v1221
      %1240 = vst.msk [vmem:[#allocation4 + $0x70] sm:$0xff] %vm1232, %v1223
      %s1241 = scalar_lea.vmem [#allocation2], 32
      %v1242 = vld [vmem:[%s1241] sm:$0xff]
      %v1243 = vld [vmem:[%s1241 + $0x10] sm:$0xff]
      %v1244 = vld [vmem:[%s1241 + $0x20] sm:$0xff]
      %v1245 = vld [vmem:[%s1241 + $0x30] sm:$0xff]
      %v1246 = vld [vmem:[%s1241 + $0x40] sm:$0xff]
      %v1247 = vld [vmem:[%s1241 + $0x50] sm:$0xff]
      %v1248 = vld [vmem:[%s1241 + $0x60] sm:$0xff]
      %v1249 = vld [vmem:[%s1241 + $0x70] sm:$0xff]
      %v1250 = vld [vmem:[%s1241 + $0xa0] sm:$0xff]
      %v1251 = vld [vmem:[%s1241 + $0xb0] sm:$0xff]
      %v1252 = vld [vmem:[%s1241 + $0xc0] sm:$0xff]
      %v1253 = vld [vmem:[%s1241 + $0xd0] sm:$0xff]
      %v1254 = vld [vmem:[%s1241 + $0xe0] sm:$0xff]
      %v1255 = vld [vmem:[%s1241 + $0xf0] sm:$0xff]
      %v1256 = vld [vmem:[%s1241 + $0x100] sm:$0xff]
      %v1257 = vld [vmem:[%s1241 + $0x110] sm:$0xff]
      %v1258 = vpack.c.bf16 %v1243, %v1242
      %v1259 = vpack.c.bf16 %v1245, %v1244
      %v1260 = vpack.c.bf16 %v1247, %v1246
      %v1261 = vpack.c.bf16 %v1249, %v1248
      %v1262 = vpack.c.bf16 %v1251, %v1250
      %v1263 = vpack.c.bf16 %v1253, %v1252
      %v1264 = vpack.c.bf16 %v1255, %v1254
      %v1265 = vpack.c.bf16 %v1257, %v1256
      %1274 = vrot.lane.b32.xlu0 %v1258, 96
      %v1275 = vpop.permute.xlu0 %1274
      %1276 = vrot.lane.b32.xlu0 %v1259, 96
      %v1277 = vpop.permute.xlu0 %1276
      %1278 = vrot.lane.b32.xlu0 %v1260, 96
      %v1279 = vpop.permute.xlu0 %1278
      %1280 = vrot.lane.b32.xlu0 %v1261, 96
      %v1281 = vpop.permute.xlu0 %1280
      %1282 = vrot.lane.b32.xlu0 %v1262, 96
      %v1283 = vpop.permute.xlu0 %1282
      %1284 = vrot.lane.b32.xlu0 %v1263, 96
      %v1285 = vpop.permute.xlu0 %1284
      %1286 = vrot.lane.b32.xlu0 %v1264, 96
      %v1287 = vpop.permute.xlu0 %1286
      %1288 = vrot.lane.b32.xlu0 %v1265, 96
      %v1289 = vpop.permute.xlu0 %1288
      %vm1298 = vcmask 917248
      %1299 = vst.msk [vmem:[#allocation4] sm:$0xff] %vm1298, %v1275
      %1300 = vst.msk [vmem:[#allocation4 + $0x10] sm:$0xff] %vm1298, %v1277
      %1301 = vst.msk [vmem:[#allocation4 + $0x20] sm:$0xff] %vm1298, %v1279
      %1302 = vst.msk [vmem:[#allocation4 + $0x30] sm:$0xff] %vm1298, %v1281
      %1303 = vst.msk [vmem:[#allocation4 + $0x40] sm:$0xff] %vm1298, %v1283
      %1304 = vst.msk [vmem:[#allocation4 + $0x50] sm:$0xff] %vm1298, %v1285
      %1305 = vst.msk [vmem:[#allocation4 + $0x60] sm:$0xff] %vm1298, %v1287
      %1306 = vst.msk [vmem:[#allocation4 + $0x70] sm:$0xff] %vm1298, %v1289
      %v1307 = vld [vmem:[%s1241 + $0x1] sm:$0xff]
      %v1308 = vld [vmem:[%s1241 + $0x11] sm:$0xff]
      %v1309 = vld [vmem:[%s1241 + $0x21] sm:$0xff]
      %v1310 = vld [vmem:[%s1241 + $0x31] sm:$0xff]
      %v1311 = vld [vmem:[%s1241 + $0x41] sm:$0xff]
      %v1312 = vld [vmem:[%s1241 + $0x51] sm:$0xff]
      %v1313 = vld [vmem:[%s1241 + $0x61] sm:$0xff]
      %v1314 = vld [vmem:[%s1241 + $0x71] sm:$0xff]
      %v1315 = vld [vmem:[%s1241 + $0xa1] sm:$0xff]
      %v1316 = vld [vmem:[%s1241 + $0xb1] sm:$0xff]
      %v1317 = vld [vmem:[%s1241 + $0xc1] sm:$0xff]
      %v1318 = vld [vmem:[%s1241 + $0xd1] sm:$0xff]
      %v1319 = vld [vmem:[%s1241 + $0xe1] sm:$0xff]
      %v1320 = vld [vmem:[%s1241 + $0xf1] sm:$0xff]
      %v1321 = vld [vmem:[%s1241 + $0x101] sm:$0xff]
      %v1322 = vld [vmem:[%s1241 + $0x111] sm:$0xff]
      %v1323 = vpack.c.bf16 %v1308, %v1307
      %v1324 = vpack.c.bf16 %v1310, %v1309
      %v1325 = vpack.c.bf16 %v1312, %v1311
      %v1326 = vpack.c.bf16 %v1314, %v1313
      %v1327 = vpack.c.bf16 %v1316, %v1315
      %v1328 = vpack.c.bf16 %v1318, %v1317
      %v1329 = vpack.c.bf16 %v1320, %v1319
      %v1330 = vpack.c.bf16 %v1322, %v1321
      %1339 = vrot.lane.b32.xlu0 %v1323, 112
      %v1340 = vpop.permute.xlu0 %1339
      %1341 = vrot.lane.b32.xlu0 %v1324, 112
      %v1342 = vpop.permute.xlu0 %1341
      %1343 = vrot.lane.b32.xlu0 %v1325, 112
      %v1344 = vpop.permute.xlu0 %1343
      %1345 = vrot.lane.b32.xlu0 %v1326, 112
      %v1346 = vpop.permute.xlu0 %1345
      %1347 = vrot.lane.b32.xlu0 %v1327, 112
      %v1348 = vpop.permute.xlu0 %1347
      %1349 = vrot.lane.b32.xlu0 %v1328, 112
      %v1350 = vpop.permute.xlu0 %1349
      %1351 = vrot.lane.b32.xlu0 %v1329, 112
      %v1352 = vpop.permute.xlu0 %1351
      %1353 = vrot.lane.b32.xlu0 %v1330, 112
      %v1354 = vpop.permute.xlu0 %1353
      %vm1363 = vcmask 1048448
      %1364 = vst.msk [vmem:[#allocation4] sm:$0xff] %vm1363, %v1340
      %1365 = vst.msk [vmem:[#allocation4 + $0x10] sm:$0xff] %vm1363, %v1342
      %1366 = vst.msk [vmem:[#allocation4 + $0x20] sm:$0xff] %vm1363, %v1344
      %1367 = vst.msk [vmem:[#allocation4 + $0x30] sm:$0xff] %vm1363, %v1346
      %1368 = vst.msk [vmem:[#allocation4 + $0x40] sm:$0xff] %vm1363, %v1348
      %1369 = vst.msk [vmem:[#allocation4 + $0x50] sm:$0xff] %vm1363, %v1350
      %1370 = vst.msk [vmem:[#allocation4 + $0x60] sm:$0xff] %vm1363, %v1352
      %1371 = vst.msk [vmem:[#allocation4 + $0x70] sm:$0xff] %vm1363, %v1354
      %v1372 = vld [vmem:[%s1241 + $0x2] sm:$0xff]
      %v1373 = vld [vmem:[%s1241 + $0x12] sm:$0xff]
      %v1374 = vld [vmem:[%s1241 + $0x22] sm:$0xff]
      %v1375 = vld [vmem:[%s1241 + $0x32] sm:$0xff]
      %v1376 = vld [vmem:[%s1241 + $0x42] sm:$0xff]
      %v1377 = vld [vmem:[%s1241 + $0x52] sm:$0xff]
      %v1378 = vld [vmem:[%s1241 + $0x62] sm:$0xff]
      %v1379 = vld [vmem:[%s1241 + $0x72] sm:$0xff]
      %v1380 = vld [vmem:[%s1241 + $0xa2] sm:$0xff]
      %v1381 = vld [vmem:[%s1241 + $0xb2] sm:$0xff]
      %v1382 = vld [vmem:[%s1241 + $0xc2] sm:$0xff]
      %v1383 = vld [vmem:[%s1241 + $0xd2] sm:$0xff]
      %v1384 = vld [vmem:[%s1241 + $0xe2] sm:$0xff]
      %v1385 = vld [vmem:[%s1241 + $0xf2] sm:$0xff]
      %v1386 = vld [vmem:[%s1241 + $0x102] sm:$0xff]
      %v1387 = vld [vmem:[%s1241 + $0x112] sm:$0xff]
      %v1388 = vpack.c.bf16 %v1373, %v1372
      %v1389 = vpack.c.bf16 %v1375, %v1374
      %v1390 = vpack.c.bf16 %v1377, %v1376
      %v1391 = vpack.c.bf16 %v1379, %v1378
      %v1392 = vpack.c.bf16 %v1381, %v1380
      %v1393 = vpack.c.bf16 %v1383, %v1382
      %v1394 = vpack.c.bf16 %v1385, %v1384
      %v1395 = vpack.c.bf16 %v1387, %v1386
      %1396 = vst.msk [vmem:[#allocation4 + $0x8] sm:$0xff] %vm61, %v1388
      %1397 = vst.msk [vmem:[#allocation4 + $0x18] sm:$0xff] %vm61, %v1389
      %1398 = vst.msk [vmem:[#allocation4 + $0x28] sm:$0xff] %vm61, %v1390
      %1399 = vst.msk [vmem:[#allocation4 + $0x38] sm:$0xff] %vm61, %v1391
      %1400 = vst.msk [vmem:[#allocation4 + $0x48] sm:$0xff] %vm61, %v1392
      %1401 = vst.msk [vmem:[#allocation4 + $0x58] sm:$0xff] %vm61, %v1393
      %1402 = vst.msk [vmem:[#allocation4 + $0x68] sm:$0xff] %vm61, %v1394
      %1403 = vst.msk [vmem:[#allocation4 + $0x78] sm:$0xff] %vm61, %v1395
      %v1404 = vld [vmem:[#allocation4] sm:$0xff]
      %v1405 = vld [vmem:[#allocation4 + $0x8] sm:$0xff]
      %v1406 = vld [vmem:[#allocation4 + $0x10] sm:$0xff]
      %v1407 = vld [vmem:[#allocation4 + $0x18] sm:$0xff]
      %v1408 = vld [vmem:[#allocation4 + $0x20] sm:$0xff]
      %v1409 = vld [vmem:[#allocation4 + $0x28] sm:$0xff]
      %v1410 = vld [vmem:[#allocation4 + $0x30] sm:$0xff]
      %v1411 = vld [vmem:[#allocation4 + $0x38] sm:$0xff]
      %v1412 = vld [vmem:[#allocation4 + $0x40] sm:$0xff]
      %v1413 = vld [vmem:[#allocation4 + $0x48] sm:$0xff]
      %v1414 = vld [vmem:[#allocation4 + $0x50] sm:$0xff]
      %v1415 = vld [vmem:[#allocation4 + $0x58] sm:$0xff]
      %v1416 = vld [vmem:[#allocation4 + $0x60] sm:$0xff]
      %v1417 = vld [vmem:[#allocation4 + $0x68] sm:$0xff]
      %v1418 = vld [vmem:[#allocation4 + $0x70] sm:$0xff]
      %v1419 = vld [vmem:[#allocation4 + $0x78] sm:$0xff]
      %s1420 = smul.u32 %s863, 18
      %s1421 = smul.addr %s1420, 4
      %s1422 = scalar_lea.vmem %s3, %s1421
      %v1423 = vld [vmem:[%s1422] sm:$0xf]
      %v1424 = vld [vmem:[%s1422 + $0x4] sm:$0xf]
      %v1425 = vld [vmem:[%s1422 + $0x8] sm:$0xf]
      %v1426 = vld [vmem:[%s1422 + $0xc] sm:$0xf]
      %v1427 = vld [vmem:[%s1422 + $0x10] sm:$0xf]
      %v1428 = vld [vmem:[%s1422 + $0x14] sm:$0xf]
      %v1429 = vld [vmem:[%s1422 + $0x18] sm:$0xf]
      %v1430 = vld [vmem:[%s1422 + $0x1c] sm:$0xf]
      %v1431 = vld [vmem:[%s1422 + $0x20] sm:$0xf]
      %v1432 = vld [vmem:[%s1422 + $0x24] sm:$0xf]
      %v1433 = vld [vmem:[%s1422 + $0x28] sm:$0xf]
      %v1434 = vld [vmem:[%s1422 + $0x2c] sm:$0xf]
      %v1435 = vld [vmem:[%s1422 + $0x30] sm:$0xf]
      %v1436 = vld [vmem:[%s1422 + $0x34] sm:$0xf]
      %v1437 = vld [vmem:[%s1422 + $0x38] sm:$0xf]
      %v1438 = vld [vmem:[%s1422 + $0x3c] sm:$0xf]
      %v1439 = vld [vmem:[%s1422 + $0x40] sm:$0xf]
      %v1440 = vld [vmem:[%s1422 + $0x44] sm:$0xf]
      %s1441 = scalar_lea.vmem %s4, %s863
      %v1442 = vld [vmem:[%s1441] sm:$0x1]
      %v1444 = vlaneseq
      %v1445 = vshrl.u32 %v1444, 7
      %v1446 = vsub.s32 0, %v1445
      %v1447 = vrot.slane %v1442, %v1446
      %v1467 = vunpack.c.l.b16 %v1423
      %v1468 = vunpack.c.l.b16 %v1424
      %v1469 = vunpack.c.l.b16 %v1425
      %v1470 = vunpack.c.l.b16 %v1426
      %v1471 = vunpack.c.l.b16 %v1427
      %v1472 = vunpack.c.l.b16 %v1428
      %v1473 = vunpack.c.l.b16 %v1429
      %v1474 = vunpack.c.l.b16 %v1430
      %v1475 = vunpack.c.l.b16 %v1431
      %v1476 = vunpack.c.l.b16 %v1432
      %v1477 = vunpack.c.l.b16 %v1433
      %v1478 = vunpack.c.l.b16 %v1434
      %v1479 = vunpack.c.l.b16 %v1435
      %v1480 = vunpack.c.l.b16 %v1436
      %v1481 = vunpack.c.l.b16 %v1437
      %v1482 = vunpack.c.l.b16 %v1438
      %v1483 = vunpack.c.l.b16 %v1439
      %v1484 = vunpack.c.l.b16 %v1440
      %v1485 = vpack.c.b16 %v1468, %v1467
      %v1486 = vpack.c.b16 %v1470, %v1469
      %v1487 = vpack.c.b16 %v1472, %v1471
      %v1488 = vpack.c.b16 %v1474, %v1473
      %v1489 = vpack.c.b16 %v1476, %v1475
      %v1490 = vpack.c.b16 %v1478, %v1477
      %v1491 = vpack.c.b16 %v1480, %v1479
      %v1492 = vpack.c.b16 %v1482, %v1481
      %v1493 = vpack.c.b16 %v1484, %v1483
      %v1504 = vsel %vm61, %v1405, 0
      %v1507 = vsel %vm61, %v1407, 0
      %v1510 = vsel %vm61, %v1409, 0
      %v1513 = vsel %vm61, %v1411, 0
      %v1516 = vsel %vm61, %v1413, 0
      %v1519 = vsel %vm61, %v1415, 0
      %v1522 = vsel %vm61, %v1417, 0
      %v1525 = vsel %vm61, %v1419, 0
      %1527 = vmatprep.subr.bf16.mxu0 0
      %1528 = vmatpush1.bf16.msra.mxu0 %v1485
      %1529 = vmatprep.subr.bf16.mxu0 0
      %1530 = vmatpush1.bf16.msra.mxu0 %v1486
      %1531 = vmatprep.subr.bf16.mxu0 0
      %1532 = vmatpush1.bf16.msra.mxu0 %v1487
      %1533 = vmatprep.subr.bf16.mxu0 0
      %1534 = vmatpush1.bf16.msra.mxu0 %v1488
      %1535 = vmatprep.subr.bf16.mxu0 0
      %1536 = vmatpush1.bf16.msra.mxu0 %v1489
      %1537 = vmatprep.subr.bf16.mxu0 0
      %1538 = vmatpush1.bf16.msra.mxu0 %v1490
      %1539 = vmatprep.subr.bf16.mxu0 0
      %1540 = vmatpush1.bf16.msra.mxu0 %v1491
      %1541 = vmatprep.subr.bf16.mxu0 0
      %1542 = vmatpush1.bf16.msra.mxu0 %v1492
      %1543 = vmatprep.subr.bf16.mxu0 0
      %1544 = vmatpush1.bf16.msra.mxu0 %v1493
      %1545 = vmatprep.subr.bf16.mxu0 0
      %1546 = vmatpush1.bf16.msra.mxu0 0
      %1547 = vmatprep.subr.bf16.mxu0 0
      %1548 = vmatpush1.bf16.msra.mxu0 0
      %1549 = vmatprep.subr.bf16.mxu0 0
      %1550 = vmatpush1.bf16.msra.mxu0 0
      %1551 = vmatprep.subr.bf16.mxu0 0
      %1552 = vmatpush1.bf16.msra.mxu0 0
      %1553 = vmatprep.subr.bf16.mxu0 0
      %1554 = vmatpush1.bf16.msra.mxu0 0
      %1555 = vmatprep.subr.bf16.mxu0 0
      %1556 = vmatpush1.bf16.msra.mxu0 0
      %1557 = vmatprep.subr.bf16.mxu0 0
      %1558 = vmatpush1.bf16.msra.mxu0 0
      %1559 = vmatprep.mubr.bf16.mxu0 %v1504
      %1560 = vmatmul.mubr.bf16.gmra.mrb[0].mxu0 %v1404
      %v1561 = vpop.f32.mrb[0].mxu0
      %v1562 = vadd.f32 %v1447, %v1561
      %v1563 = vpop.f32.mrb[0].mxu0
      %v1564 = vpop.f32.mrb[0].mxu0
      %v1565 = vadd.f32 %v1447, %v1564
      %v1566 = vpop.f32.mrb[0].mxu0
      %1567 = vmatprep.mubr.bf16.mxu0 %v1507
      %1568 = vmatmul.mubr.bf16.gmra.mrb[0].mxu0 %v1406
      %v1569 = vpop.f32.mrb[0].mxu0
      %v1570 = vadd.f32 %v1447, %v1569
      %v1571 = vpop.f32.mrb[0].mxu0
      %v1572 = vpop.f32.mrb[0].mxu0
      %v1573 = vadd.f32 %v1447, %v1572
      %v1574 = vpop.f32.mrb[0].mxu0
      %1575 = vmatprep.mubr.bf16.mxu0 %v1510
      %1576 = vmatmul.mubr.bf16.gmra.mrb[0].mxu0 %v1408
      %v1577 = vpop.f32.mrb[0].mxu0
      %v1578 = vadd.f32 %v1447, %v1577
      %v1579 = vpop.f32.mrb[0].mxu0
      %v1580 = vpop.f32.mrb[0].mxu0
      %v1581 = vadd.f32 %v1447, %v1580
      %v1582 = vpop.f32.mrb[0].mxu0
      %1583 = vmatprep.mubr.bf16.mxu0 %v1513
      %1584 = vmatmul.mubr.bf16.gmra.mrb[0].mxu0 %v1410
      %v1585 = vpop.f32.mrb[0].mxu0
      %v1586 = vadd.f32 %v1447, %v1585
      %v1587 = vpop.f32.mrb[0].mxu0
      %v1588 = vpop.f32.mrb[0].mxu0
      %v1589 = vadd.f32 %v1447, %v1588
      %v1590 = vpop.f32.mrb[0].mxu0
      %1591 = vmatprep.mubr.bf16.mxu0 %v1516
      %1592 = vmatmul.mubr.bf16.gmra.mrb[0].mxu0 %v1412
      %v1593 = vpop.f32.mrb[0].mxu0
      %v1594 = vadd.f32 %v1447, %v1593
      %v1595 = vpop.f32.mrb[0].mxu0
      %v1596 = vpop.f32.mrb[0].mxu0
      %v1597 = vadd.f32 %v1447, %v1596
      %v1598 = vpop.f32.mrb[0].mxu0
      %1599 = vmatprep.mubr.bf16.mxu0 %v1519
      %1600 = vmatmul.mubr.bf16.gmra.mrb[0].mxu0 %v1414
      %v1601 = vpop.f32.mrb[0].mxu0
      %v1602 = vadd.f32 %v1447, %v1601
      %v1603 = vpop.f32.mrb[0].mxu0
      %v1604 = vpop.f32.mrb[0].mxu0
      %v1605 = vadd.f32 %v1447, %v1604
      %v1606 = vpop.f32.mrb[0].mxu0
      %1607 = vmatprep.mubr.bf16.mxu0 %v1522
      %1608 = vmatmul.mubr.bf16.gmra.mrb[0].mxu0 %v1416
      %v1609 = vpop.f32.mrb[0].mxu0
      %v1610 = vadd.f32 %v1447, %v1609
      %v1611 = vpop.f32.mrb[0].mxu0
      %v1612 = vpop.f32.mrb[0].mxu0
      %v1613 = vadd.f32 %v1447, %v1612
      %v1614 = vpop.f32.mrb[0].mxu0
      %1615 = vmatprep.mubr.bf16.mxu0 %v1525
      %1616 = vmatmul.mubr.bf16.gmra.mrb[0].mxu0 %v1418
      %v1617 = vpop.f32.mrb[0].mxu0
      %v1618 = vadd.f32 %v1447, %v1617
      %v1619 = vpop.f32.mrb[0].mxu0
      %v1620 = vpop.f32.mrb[0].mxu0
      %v1621 = vadd.f32 %v1447, %v1620
      %v1622 = vpop.f32.mrb[0].mxu0
      %1623 = vdwg.mxu0
      %v1624 = vmax.f32 %v1562, 0.0
      %v1625 = vmax.f32 %v1565, 0.0
      %v1626 = vmax.f32 %v1570, 0.0
      %v1627 = vmax.f32 %v1573, 0.0
      %v1628 = vmax.f32 %v1578, 0.0
      %v1629 = vmax.f32 %v1581, 0.0
      %v1630 = vmax.f32 %v1586, 0.0
      %v1631 = vmax.f32 %v1589, 0.0
      %v1632 = vmax.f32 %v1594, 0.0
      %v1633 = vmax.f32 %v1597, 0.0
      %v1634 = vmax.f32 %v1602, 0.0
      %v1635 = vmax.f32 %v1605, 0.0
      %v1636 = vmax.f32 %v1610, 0.0
      %v1637 = vmax.f32 %v1613, 0.0
      %v1638 = vmax.f32 %v1618, 0.0
      %v1639 = vmax.f32 %v1621, 0.0
      %1640 = vst.msk [vmem:[%s845 + $0x1] sm:$0xff] %vm61, %v1624
      %1641 = vst.msk [vmem:[%s845 + $0x11] sm:$0xff] %vm61, %v1625
      %1642 = vst.msk [vmem:[%s845 + $0x21] sm:$0xff] %vm61, %v1626
      %1643 = vst.msk [vmem:[%s845 + $0x31] sm:$0xff] %vm61, %v1627
      %1644 = vst.msk [vmem:[%s845 + $0x41] sm:$0xff] %vm61, %v1628
      %1645 = vst.msk [vmem:[%s845 + $0x51] sm:$0xff] %vm61, %v1629
      %1646 = vst.msk [vmem:[%s845 + $0x61] sm:$0xff] %vm61, %v1630
      %1647 = vst.msk [vmem:[%s845 + $0x71] sm:$0xff] %vm61, %v1631
      %1648 = vst.msk [vmem:[%s845 + $0xa1] sm:$0xff] %vm61, %v1632
      %1649 = vst.msk [vmem:[%s845 + $0xb1] sm:$0xff] %vm61, %v1633
      %1650 = vst.msk [vmem:[%s845 + $0xc1] sm:$0xff] %vm61, %v1634
      %1651 = vst.msk [vmem:[%s845 + $0xd1] sm:$0xff] %vm61, %v1635
      %1652 = vst.msk [vmem:[%s845 + $0xe1] sm:$0xff] %vm61, %v1636
      %1653 = vst.msk [vmem:[%s845 + $0xf1] sm:$0xff] %vm61, %v1637
      %1654 = vst.msk [vmem:[%s845 + $0x101] sm:$0xff] %vm61, %v1638
      %1655 = vst.msk [vmem:[%s845 + $0x111] sm:$0xff] %vm61, %v1639
      %v1656 = vld [vmem:[#allocation2] sm:$0xff]
      %v1657 = vld [vmem:[#allocation2 + $0x10] sm:$0xff]
      %v1658 = vld [vmem:[#allocation2 + $0x20] sm:$0xff]
      %v1659 = vld [vmem:[#allocation2 + $0x30] sm:$0xff]
      %v1660 = vld [vmem:[#allocation2 + $0x40] sm:$0xff]
      %v1661 = vld [vmem:[#allocation2 + $0x50] sm:$0xff]
      %v1662 = vld [vmem:[#allocation2 + $0x60] sm:$0xff]
      %v1663 = vld [vmem:[#allocation2 + $0x70] sm:$0xff]
      %v1664 = vld [vmem:[#allocation2 + $0xa0] sm:$0xff]
      %v1665 = vld [vmem:[#allocation2 + $0xb0] sm:$0xff]
      %v1666 = vld [vmem:[#allocation2 + $0xc0] sm:$0xff]
      %v1667 = vld [vmem:[#allocation2 + $0xd0] sm:$0xff]
      %v1668 = vld [vmem:[#allocation2 + $0xe0] sm:$0xff]
      %v1669 = vld [vmem:[#allocation2 + $0xf0] sm:$0xff]
      %v1670 = vld [vmem:[#allocation2 + $0x100] sm:$0xff]
      %v1671 = vld [vmem:[#allocation2 + $0x110] sm:$0xff]
      %v1672 = vpack.c.bf16 %v1657, %v1656
      %v1673 = vpack.c.bf16 %v1659, %v1658
      %v1674 = vpack.c.bf16 %v1661, %v1660
      %v1675 = vpack.c.bf16 %v1663, %v1662
      %v1676 = vpack.c.bf16 %v1665, %v1664
      %v1677 = vpack.c.bf16 %v1667, %v1666
      %v1678 = vpack.c.bf16 %v1669, %v1668
      %v1679 = vpack.c.bf16 %v1671, %v1670
      %1680 = vst.msk [vmem:[#allocation4] sm:$0xff] %vm61, %v1672
      %1681 = vst.msk [vmem:[#allocation4 + $0x10] sm:$0xff] %vm61, %v1673
      %1682 = vst.msk [vmem:[#allocation4 + $0x20] sm:$0xff] %vm61, %v1674
      %1683 = vst.msk [vmem:[#allocation4 + $0x30] sm:$0xff] %vm61, %v1675
      %1684 = vst.msk [vmem:[#allocation4 + $0x40] sm:$0xff] %vm61, %v1676
      %1685 = vst.msk [vmem:[#allocation4 + $0x50] sm:$0xff] %vm61, %v1677
      %1686 = vst.msk [vmem:[#allocation4 + $0x60] sm:$0xff] %vm61, %v1678
      %1687 = vst.msk [vmem:[#allocation4 + $0x70] sm:$0xff] %vm61, %v1679
      %v1688 = vld [vmem:[#allocation2 + $0x1] sm:$0xff]
      %v1689 = vld [vmem:[#allocation2 + $0x11] sm:$0xff]
      %v1690 = vld [vmem:[#allocation2 + $0x21] sm:$0xff]
      %v1691 = vld [vmem:[#allocation2 + $0x31] sm:$0xff]
      %v1692 = vld [vmem:[#allocation2 + $0x41] sm:$0xff]
      %v1693 = vld [vmem:[#allocation2 + $0x51] sm:$0xff]
      %v1694 = vld [vmem:[#allocation2 + $0x61] sm:$0xff]
      %v1695 = vld [vmem:[#allocation2 + $0x71] sm:$0xff]
      %v1696 = vld [vmem:[#allocation2 + $0xa1] sm:$0xff]
      %v1697 = vld [vmem:[#allocation2 + $0xb1] sm:$0xff]
      %v1698 = vld [vmem:[#allocation2 + $0xc1] sm:$0xff]
      %v1699 = vld [vmem:[#allocation2 + $0xd1] sm:$0xff]
      %v1700 = vld [vmem:[#allocation2 + $0xe1] sm:$0xff]
      %v1701 = vld [vmem:[#allocation2 + $0xf1] sm:$0xff]
      %v1702 = vld [vmem:[#allocation2 + $0x101] sm:$0xff]
      %v1703 = vld [vmem:[#allocation2 + $0x111] sm:$0xff]
      %v1704 = vpack.c.bf16 %v1689, %v1688
      %v1705 = vpack.c.bf16 %v1691, %v1690
      %v1706 = vpack.c.bf16 %v1693, %v1692
      %v1707 = vpack.c.bf16 %v1695, %v1694
      %v1708 = vpack.c.bf16 %v1697, %v1696
      %v1709 = vpack.c.bf16 %v1699, %v1698
      %v1710 = vpack.c.bf16 %v1701, %v1700
      %v1711 = vpack.c.bf16 %v1703, %v1702
      %1720 = vrot.lane.b32.xlu0 %v1704, 16
      %v1721 = vpop.permute.xlu0 %1720
      %1722 = vrot.lane.b32.xlu0 %v1705, 16
      %v1723 = vpop.permute.xlu0 %1722
      %1724 = vrot.lane.b32.xlu0 %v1706, 16
      %v1725 = vpop.permute.xlu0 %1724
      %1726 = vrot.lane.b32.xlu0 %v1707, 16
      %v1727 = vpop.permute.xlu0 %1726
      %1728 = vrot.lane.b32.xlu0 %v1708, 16
      %v1729 = vpop.permute.xlu0 %1728
      %1730 = vrot.lane.b32.xlu0 %v1709, 16
      %v1731 = vpop.permute.xlu0 %1730
      %1732 = vrot.lane.b32.xlu0 %v1710, 16
      %v1733 = vpop.permute.xlu0 %1732
      %1734 = vrot.lane.b32.xlu0 %v1711, 16
      %v1735 = vpop.permute.xlu0 %1734
      %1744 = vst.msk [vmem:[#allocation4] sm:$0xff] %vm972, %v1721
      %1745 = vst.msk [vmem:[#allocation4 + $0x10] sm:$0xff] %vm972, %v1723
      %1746 = vst.msk [vmem:[#allocation4 + $0x20] sm:$0xff] %vm972, %v1725
      %1747 = vst.msk [vmem:[#allocation4 + $0x30] sm:$0xff] %vm972, %v1727
      %1748 = vst.msk [vmem:[#allocation4 + $0x40] sm:$0xff] %vm972, %v1729
      %1749 = vst.msk [vmem:[#allocation4 + $0x50] sm:$0xff] %vm972, %v1731
      %1750 = vst.msk [vmem:[#allocation4 + $0x60] sm:$0xff] %vm972, %v1733
      %1751 = vst.msk [vmem:[#allocation4 + $0x70] sm:$0xff] %vm972, %v1735
      %v1752 = vld [vmem:[#allocation2 + $0x2] sm:$0xff]
      %v1753 = vld [vmem:[#allocation2 + $0x12] sm:$0xff]
      %v1754 = vld [vmem:[#allocation2 + $0x22] sm:$0xff]
      %v1755 = vld [vmem:[#allocation2 + $0x32] sm:$0xff]
      %v1756 = vld [vmem:[#allocation2 + $0x42] sm:$0xff]
      %v1757 = vld [vmem:[#allocation2 + $0x52] sm:$0xff]
      %v1758 = vld [vmem:[#allocation2 + $0x62] sm:$0xff]
      %v1759 = vld [vmem:[#allocation2 + $0x72] sm:$0xff]
      %v1760 = vld [vmem:[#allocation2 + $0xa2] sm:$0xff]
      %v1761 = vld [vmem:[#allocation2 + $0xb2] sm:$0xff]
      %v1762 = vld [vmem:[#allocation2 + $0xc2] sm:$0xff]
      %v1763 = vld [vmem:[#allocation2 + $0xd2] sm:$0xff]
      %v1764 = vld [vmem:[#allocation2 + $0xe2] sm:$0xff]
      %v1765 = vld [vmem:[#allocation2 + $0xf2] sm:$0xff]
      %v1766 = vld [vmem:[#allocation2 + $0x102] sm:$0xff]
      %v1767 = vld [vmem:[#allocation2 + $0x112] sm:$0xff]
      %v1768 = vpack.c.bf16 %v1753, %v1752
      %v1769 = vpack.c.bf16 %v1755, %v1754
      %v1770 = vpack.c.bf16 %v1757, %v1756
      %v1771 = vpack.c.bf16 %v1759, %v1758
      %v1772 = vpack.c.bf16 %v1761, %v1760
      %v1773 = vpack.c.bf16 %v1763, %v1762
      %v1774 = vpack.c.bf16 %v1765, %v1764
      %v1775 = vpack.c.bf16 %v1767, %v1766
      %1784 = vrot.lane.b32.xlu0 %v1768, 32
      %v1785 = vpop.permute.xlu0 %1784
      %1786 = vrot.lane.b32.xlu0 %v1769, 32
      %v1787 = vpop.permute.xlu0 %1786
      %1788 = vrot.lane.b32.xlu0 %v1770, 32
      %v1789 = vpop.permute.xlu0 %1788
      %1790 = vrot.lane.b32.xlu0 %v1771, 32
      %v1791 = vpop.permute.xlu0 %1790
      %1792 = vrot.lane.b32.xlu0 %v1772, 32
      %v1793 = vpop.permute.xlu0 %1792
      %1794 = vrot.lane.b32.xlu0 %v1773, 32
      %v1795 = vpop.permute.xlu0 %1794
      %1796 = vrot.lane.b32.xlu0 %v1774, 32
      %v1797 = vpop.permute.xlu0 %1796
      %1798 = vrot.lane.b32.xlu0 %v1775, 32
      %v1799 = vpop.permute.xlu0 %1798
      %1808 = vst.msk [vmem:[#allocation4] sm:$0xff] %vm1037, %v1785
      %1809 = vst.msk [vmem:[#allocation4 + $0x10] sm:$0xff] %vm1037, %v1787
      %1810 = vst.msk [vmem:[#allocation4 + $0x20] sm:$0xff] %vm1037, %v1789
      %1811 = vst.msk [vmem:[#allocation4 + $0x30] sm:$0xff] %vm1037, %v1791
      %1812 = vst.msk [vmem:[#allocation4 + $0x40] sm:$0xff] %vm1037, %v1793
      %1813 = vst.msk [vmem:[#allocation4 + $0x50] sm:$0xff] %vm1037, %v1795
      %1814 = vst.msk [vmem:[#allocation4 + $0x60] sm:$0xff] %vm1037, %v1797
      %1815 = vst.msk [vmem:[#allocation4 + $0x70] sm:$0xff] %vm1037, %v1799
      %v1816 = vld [vmem:[%s845] sm:$0xff]
      %v1817 = vld [vmem:[%s845 + $0x10] sm:$0xff]
      %v1818 = vld [vmem:[%s845 + $0x20] sm:$0xff]
      %v1819 = vld [vmem:[%s845 + $0x30] sm:$0xff]
      %v1820 = vld [vmem:[%s845 + $0x40] sm:$0xff]
      %v1821 = vld [vmem:[%s845 + $0x50] sm:$0xff]
      %v1822 = vld [vmem:[%s845 + $0x60] sm:$0xff]
      %v1823 = vld [vmem:[%s845 + $0x70] sm:$0xff]
      %v1824 = vld [vmem:[%s845 + $0xa0] sm:$0xff]
      %v1825 = vld [vmem:[%s845 + $0xb0] sm:$0xff]
      %v1826 = vld [vmem:[%s845 + $0xc0] sm:$0xff]
      %v1827 = vld [vmem:[%s845 + $0xd0] sm:$0xff]
      %v1828 = vld [vmem:[%s845 + $0xe0] sm:$0xff]
      %v1829 = vld [vmem:[%s845 + $0xf0] sm:$0xff]
      %v1830 = vld [vmem:[%s845 + $0x100] sm:$0xff]
      %v1831 = vld [vmem:[%s845 + $0x110] sm:$0xff]
      %v1832 = vpack.c.bf16 %v1817, %v1816
      %v1833 = vpack.c.bf16 %v1819, %v1818
      %v1834 = vpack.c.bf16 %v1821, %v1820
      %v1835 = vpack.c.bf16 %v1823, %v1822
      %v1836 = vpack.c.bf16 %v1825, %v1824
      %v1837 = vpack.c.bf16 %v1827, %v1826
      %v1838 = vpack.c.bf16 %v1829, %v1828
      %v1839 = vpack.c.bf16 %v1831, %v1830
      %1848 = vrot.lane.b32.xlu0 %v1832, 48
      %v1849 = vpop.permute.xlu0 %1848
      %1850 = vrot.lane.b32.xlu0 %v1833, 48
      %v1851 = vpop.permute.xlu0 %1850
      %1852 = vrot.lane.b32.xlu0 %v1834, 48
      %v1853 = vpop.permute.xlu0 %1852
      %1854 = vrot.lane.b32.xlu0 %v1835, 48
      %v1855 = vpop.permute.xlu0 %1854
      %1856 = vrot.lane.b32.xlu0 %v1836, 48
      %v1857 = vpop.permute.xlu0 %1856
      %1858 = vrot.lane.b32.xlu0 %v1837, 48
      %v1859 = vpop.permute.xlu0 %1858
      %1860 = vrot.lane.b32.xlu0 %v1838, 48
      %v1861 = vpop.permute.xlu0 %1860
      %1862 = vrot.lane.b32.xlu0 %v1839, 48
      %v1863 = vpop.permute.xlu0 %1862
      %1872 = vst.msk [vmem:[#allocation4] sm:$0xff] %vm1102, %v1849
      %1873 = vst.msk [vmem:[#allocation4 + $0x10] sm:$0xff] %vm1102, %v1851
      %1874 = vst.msk [vmem:[#allocation4 + $0x20] sm:$0xff] %vm1102, %v1853
      %1875 = vst.msk [vmem:[#allocation4 + $0x30] sm:$0xff] %vm1102, %v1855
      %1876 = vst.msk [vmem:[#allocation4 + $0x40] sm:$0xff] %vm1102, %v1857
      %1877 = vst.msk [vmem:[#allocation4 + $0x50] sm:$0xff] %vm1102, %v1859
      %1878 = vst.msk [vmem:[#allocation4 + $0x60] sm:$0xff] %vm1102, %v1861
      %1879 = vst.msk [vmem:[#allocation4 + $0x70] sm:$0xff] %vm1102, %v1863
      %v1880 = vld [vmem:[%s845 + $0x1] sm:$0xff]
      %v1881 = vld [vmem:[%s845 + $0x11] sm:$0xff]
      %v1882 = vld [vmem:[%s845 + $0x21] sm:$0xff]
      %v1883 = vld [vmem:[%s845 + $0x31] sm:$0xff]
      %v1884 = vld [vmem:[%s845 + $0x41] sm:$0xff]
      %v1885 = vld [vmem:[%s845 + $0x51] sm:$0xff]
      %v1886 = vld [vmem:[%s845 + $0x61] sm:$0xff]
      %v1887 = vld [vmem:[%s845 + $0x71] sm:$0xff]
      %v1888 = vld [vmem:[%s845 + $0xa1] sm:$0xff]
      %v1889 = vld [vmem:[%s845 + $0xb1] sm:$0xff]
      %v1890 = vld [vmem:[%s845 + $0xc1] sm:$0xff]
      %v1891 = vld [vmem:[%s845 + $0xd1] sm:$0xff]
      %v1892 = vld [vmem:[%s845 + $0xe1] sm:$0xff]
      %v1893 = vld [vmem:[%s845 + $0xf1] sm:$0xff]
      %v1894 = vld [vmem:[%s845 + $0x101] sm:$0xff]
      %v1895 = vld [vmem:[%s845 + $0x111] sm:$0xff]
      %v1896 = vpack.c.bf16 %v1881, %v1880
      %v1897 = vpack.c.bf16 %v1883, %v1882
      %v1898 = vpack.c.bf16 %v1885, %v1884
      %v1899 = vpack.c.bf16 %v1887, %v1886
      %v1900 = vpack.c.bf16 %v1889, %v1888
      %v1901 = vpack.c.bf16 %v1891, %v1890
      %v1902 = vpack.c.bf16 %v1893, %v1892
      %v1903 = vpack.c.bf16 %v1895, %v1894
      %1912 = vrot.lane.b32.xlu0 %v1896, 64
      %v1913 = vpop.permute.xlu0 %1912
      %1914 = vrot.lane.b32.xlu0 %v1897, 64
      %v1915 = vpop.permute.xlu0 %1914
      %1916 = vrot.lane.b32.xlu0 %v1898, 64
      %v1917 = vpop.permute.xlu0 %1916
      %1918 = vrot.lane.b32.xlu0 %v1899, 64
      %v1919 = vpop.permute.xlu0 %1918
      %1920 = vrot.lane.b32.xlu0 %v1900, 64
      %v1921 = vpop.permute.xlu0 %1920
      %1922 = vrot.lane.b32.xlu0 %v1901, 64
      %v1923 = vpop.permute.xlu0 %1922
      %1924 = vrot.lane.b32.xlu0 %v1902, 64
      %v1925 = vpop.permute.xlu0 %1924
      %1926 = vrot.lane.b32.xlu0 %v1903, 64
      %v1927 = vpop.permute.xlu0 %1926
      %1936 = vst.msk [vmem:[#allocation4] sm:$0xff] %vm1167, %v1913
      %1937 = vst.msk [vmem:[#allocation4 + $0x10] sm:$0xff] %vm1167, %v1915
      %1938 = vst.msk [vmem:[#allocation4 + $0x20] sm:$0xff] %vm1167, %v1917
      %1939 = vst.msk [vmem:[#allocation4 + $0x30] sm:$0xff] %vm1167, %v1919
      %1940 = vst.msk [vmem:[#allocation4 + $0x40] sm:$0xff] %vm1167, %v1921
      %1941 = vst.msk [vmem:[#allocation4 + $0x50] sm:$0xff] %vm1167, %v1923
      %1942 = vst.msk [vmem:[#allocation4 + $0x60] sm:$0xff] %vm1167, %v1925
      %1943 = vst.msk [vmem:[#allocation4 + $0x70] sm:$0xff] %vm1167, %v1927
      %v1944 = vld [vmem:[%s845 + $0x2] sm:$0xff]
      %v1945 = vld [vmem:[%s845 + $0x12] sm:$0xff]
      %v1946 = vld [vmem:[%s845 + $0x22] sm:$0xff]
      %v1947 = vld [vmem:[%s845 + $0x32] sm:$0xff]
      %v1948 = vld [vmem:[%s845 + $0x42] sm:$0xff]
      %v1949 = vld [vmem:[%s845 + $0x52] sm:$0xff]
      %v1950 = vld [vmem:[%s845 + $0x62] sm:$0xff]
      %v1951 = vld [vmem:[%s845 + $0x72] sm:$0xff]
      %v1952 = vld [vmem:[%s845 + $0xa2] sm:$0xff]
      %v1953 = vld [vmem:[%s845 + $0xb2] sm:$0xff]
      %v1954 = vld [vmem:[%s845 + $0xc2] sm:$0xff]
      %v1955 = vld [vmem:[%s845 + $0xd2] sm:$0xff]
      %v1956 = vld [vmem:[%s845 + $0xe2] sm:$0xff]
      %v1957 = vld [vmem:[%s845 + $0xf2] sm:$0xff]
      %v1958 = vld [vmem:[%s845 + $0x102] sm:$0xff]
      %v1959 = vld [vmem:[%s845 + $0x112] sm:$0xff]
      %v1960 = vpack.c.bf16 %v1945, %v1944
      %v1961 = vpack.c.bf16 %v1947, %v1946
      %v1962 = vpack.c.bf16 %v1949, %v1948
      %v1963 = vpack.c.bf16 %v1951, %v1950
      %v1964 = vpack.c.bf16 %v1953, %v1952
      %v1965 = vpack.c.bf16 %v1955, %v1954
      %v1966 = vpack.c.bf16 %v1957, %v1956
      %v1967 = vpack.c.bf16 %v1959, %v1958
      %1976 = vrot.lane.b32.xlu0 %v1960, 80
      %v1977 = vpop.permute.xlu0 %1976
      %1978 = vrot.lane.b32.xlu0 %v1961, 80
      %v1979 = vpop.permute.xlu0 %1978
      %1980 = vrot.lane.b32.xlu0 %v1962, 80
      %v1981 = vpop.permute.xlu0 %1980
      %1982 = vrot.lane.b32.xlu0 %v1963, 80
      %v1983 = vpop.permute.xlu0 %1982
      %1984 = vrot.lane.b32.xlu0 %v1964, 80
      %v1985 = vpop.permute.xlu0 %1984
      %1986 = vrot.lane.b32.xlu0 %v1965, 80
      %v1987 = vpop.permute.xlu0 %1986
      %1988 = vrot.lane.b32.xlu0 %v1966, 80
      %v1989 = vpop.permute.xlu0 %1988
      %1990 = vrot.lane.b32.xlu0 %v1967, 80
      %v1991 = vpop.permute.xlu0 %1990
      %2000 = vst.msk [vmem:[#allocation4] sm:$0xff] %vm1232, %v1977
      %2001 = vst.msk [vmem:[#allocation4 + $0x10] sm:$0xff] %vm1232, %v1979
      %2002 = vst.msk [vmem:[#allocation4 + $0x20] sm:$0xff] %vm1232, %v1981
      %2003 = vst.msk [vmem:[#allocation4 + $0x30] sm:$0xff] %vm1232, %v1983
      %2004 = vst.msk [vmem:[#allocation4 + $0x40] sm:$0xff] %vm1232, %v1985
      %2005 = vst.msk [vmem:[#allocation4 + $0x50] sm:$0xff] %vm1232, %v1987
      %2006 = vst.msk [vmem:[#allocation4 + $0x60] sm:$0xff] %vm1232, %v1989
      %2007 = vst.msk [vmem:[#allocation4 + $0x70] sm:$0xff] %vm1232, %v1991
      %v2008 = vld [vmem:[%s1241] sm:$0xff]
      %v2009 = vld [vmem:[%s1241 + $0x10] sm:$0xff]
      %v2010 = vld [vmem:[%s1241 + $0x20] sm:$0xff]
      %v2011 = vld [vmem:[%s1241 + $0x30] sm:$0xff]
      %v2012 = vld [vmem:[%s1241 + $0x40] sm:$0xff]
      %v2013 = vld [vmem:[%s1241 + $0x50] sm:$0xff]
      %v2014 = vld [vmem:[%s1241 + $0x60] sm:$0xff]
      %v2015 = vld [vmem:[%s1241 + $0x70] sm:$0xff]
      %v2016 = vld [vmem:[%s1241 + $0xa0] sm:$0xff]
      %v2017 = vld [vmem:[%s1241 + $0xb0] sm:$0xff]
      %v2018 = vld [vmem:[%s1241 + $0xc0] sm:$0xff]
      %v2019 = vld [vmem:[%s1241 + $0xd0] sm:$0xff]
      %v2020 = vld [vmem:[%s1241 + $0xe0] sm:$0xff]
      %v2021 = vld [vmem:[%s1241 + $0xf0] sm:$0xff]
      %v2022 = vld [vmem:[%s1241 + $0x100] sm:$0xff]
      %v2023 = vld [vmem:[%s1241 + $0x110] sm:$0xff]
      %v2024 = vpack.c.bf16 %v2009, %v2008
      %v2025 = vpack.c.bf16 %v2011, %v2010
      %v2026 = vpack.c.bf16 %v2013, %v2012
      %v2027 = vpack.c.bf16 %v2015, %v2014
      %v2028 = vpack.c.bf16 %v2017, %v2016
      %v2029 = vpack.c.bf16 %v2019, %v2018
      %v2030 = vpack.c.bf16 %v2021, %v2020
      %v2031 = vpack.c.bf16 %v2023, %v2022
      %2040 = vrot.lane.b32.xlu0 %v2024, 96
      %v2041 = vpop.permute.xlu0 %2040
      %2042 = vrot.lane.b32.xlu0 %v2025, 96
      %v2043 = vpop.permute.xlu0 %2042
      %2044 = vrot.lane.b32.xlu0 %v2026, 96
      %v2045 = vpop.permute.xlu0 %2044
      %2046 = vrot.lane.b32.xlu0 %v2027, 96
      %v2047 = vpop.permute.xlu0 %2046
      %2048 = vrot.lane.b32.xlu0 %v2028, 96
      %v2049 = vpop.permute.xlu0 %2048
      %2050 = vrot.lane.b32.xlu0 %v2029, 96
      %v2051 = vpop.permute.xlu0 %2050
      %2052 = vrot.lane.b32.xlu0 %v2030, 96
      %v2053 = vpop.permute.xlu0 %2052
      %2054 = vrot.lane.b32.xlu0 %v2031, 96
      %v2055 = vpop.permute.xlu0 %2054
      %2064 = vst.msk [vmem:[#allocation4] sm:$0xff] %vm1298, %v2041
      %2065 = vst.msk [vmem:[#allocation4 + $0x10] sm:$0xff] %vm1298, %v2043
      %2066 = vst.msk [vmem:[#allocation4 + $0x20] sm:$0xff] %vm1298, %v2045
      %2067 = vst.msk [vmem:[#allocation4 + $0x30] sm:$0xff] %vm1298, %v2047
      %2068 = vst.msk [vmem:[#allocation4 + $0x40] sm:$0xff] %vm1298, %v2049
      %2069 = vst.msk [vmem:[#allocation4 + $0x50] sm:$0xff] %vm1298, %v2051
      %2070 = vst.msk [vmem:[#allocation4 + $0x60] sm:$0xff] %vm1298, %v2053
      %2071 = vst.msk [vmem:[#allocation4 + $0x70] sm:$0xff] %vm1298, %v2055
      %v2072 = vld [vmem:[%s1241 + $0x1] sm:$0xff]
      %v2073 = vld [vmem:[%s1241 + $0x11] sm:$0xff]
      %v2074 = vld [vmem:[%s1241 + $0x21] sm:$0xff]
      %v2075 = vld [vmem:[%s1241 + $0x31] sm:$0xff]
      %v2076 = vld [vmem:[%s1241 + $0x41] sm:$0xff]
      %v2077 = vld [vmem:[%s1241 + $0x51] sm:$0xff]
      %v2078 = vld [vmem:[%s1241 + $0x61] sm:$0xff]
      %v2079 = vld [vmem:[%s1241 + $0x71] sm:$0xff]
      %v2080 = vld [vmem:[%s1241 + $0xa1] sm:$0xff]
      %v2081 = vld [vmem:[%s1241 + $0xb1] sm:$0xff]
      %v2082 = vld [vmem:[%s1241 + $0xc1] sm:$0xff]
      %v2083 = vld [vmem:[%s1241 + $0xd1] sm:$0xff]
      %v2084 = vld [vmem:[%s1241 + $0xe1] sm:$0xff]
      %v2085 = vld [vmem:[%s1241 + $0xf1] sm:$0xff]
      %v2086 = vld [vmem:[%s1241 + $0x101] sm:$0xff]
      %v2087 = vld [vmem:[%s1241 + $0x111] sm:$0xff]
      %v2088 = vpack.c.bf16 %v2073, %v2072
      %v2089 = vpack.c.bf16 %v2075, %v2074
      %v2090 = vpack.c.bf16 %v2077, %v2076
      %v2091 = vpack.c.bf16 %v2079, %v2078
      %v2092 = vpack.c.bf16 %v2081, %v2080
      %v2093 = vpack.c.bf16 %v2083, %v2082
      %v2094 = vpack.c.bf16 %v2085, %v2084
      %v2095 = vpack.c.bf16 %v2087, %v2086
      %2104 = vrot.lane.b32.xlu0 %v2088, 112
      %v2105 = vpop.permute.xlu0 %2104
      %2106 = vrot.lane.b32.xlu0 %v2089, 112
      %v2107 = vpop.permute.xlu0 %2106
      %2108 = vrot.lane.b32.xlu0 %v2090, 112
      %v2109 = vpop.permute.xlu0 %2108
      %2110 = vrot.lane.b32.xlu0 %v2091, 112
      %v2111 = vpop.permute.xlu0 %2110
      %2112 = vrot.lane.b32.xlu0 %v2092, 112
      %v2113 = vpop.permute.xlu0 %2112
      %2114 = vrot.lane.b32.xlu0 %v2093, 112
      %v2115 = vpop.permute.xlu0 %2114
      %2116 = vrot.lane.b32.xlu0 %v2094, 112
      %v2117 = vpop.permute.xlu0 %2116
      %2118 = vrot.lane.b32.xlu0 %v2095, 112
      %v2119 = vpop.permute.xlu0 %2118
      %2128 = vst.msk [vmem:[#allocation4] sm:$0xff] %vm1363, %v2105
      %2129 = vst.msk [vmem:[#allocation4 + $0x10] sm:$0xff] %vm1363, %v2107
      %2130 = vst.msk [vmem:[#allocation4 + $0x20] sm:$0xff] %vm1363, %v2109
      %2131 = vst.msk [vmem:[#allocation4 + $0x30] sm:$0xff] %vm1363, %v2111
      %2132 = vst.msk [vmem:[#allocation4 + $0x40] sm:$0xff] %vm1363, %v2113
      %2133 = vst.msk [vmem:[#allocation4 + $0x50] sm:$0xff] %vm1363, %v2115
      %2134 = vst.msk [vmem:[#allocation4 + $0x60] sm:$0xff] %vm1363, %v2117
      %2135 = vst.msk [vmem:[#allocation4 + $0x70] sm:$0xff] %vm1363, %v2119
      %v2136 = vld [vmem:[%s1241 + $0x2] sm:$0xff]
      %v2137 = vld [vmem:[%s1241 + $0x12] sm:$0xff]
      %v2138 = vld [vmem:[%s1241 + $0x22] sm:$0xff]
      %v2139 = vld [vmem:[%s1241 + $0x32] sm:$0xff]
      %v2140 = vld [vmem:[%s1241 + $0x42] sm:$0xff]
      %v2141 = vld [vmem:[%s1241 + $0x52] sm:$0xff]
      %v2142 = vld [vmem:[%s1241 + $0x62] sm:$0xff]
      %v2143 = vld [vmem:[%s1241 + $0x72] sm:$0xff]
      %v2144 = vld [vmem:[%s1241 + $0xa2] sm:$0xff]
      %v2145 = vld [vmem:[%s1241 + $0xb2] sm:$0xff]
      %v2146 = vld [vmem:[%s1241 + $0xc2] sm:$0xff]
      %v2147 = vld [vmem:[%s1241 + $0xd2] sm:$0xff]
      %v2148 = vld [vmem:[%s1241 + $0xe2] sm:$0xff]
      %v2149 = vld [vmem:[%s1241 + $0xf2] sm:$0xff]
      %v2150 = vld [vmem:[%s1241 + $0x102] sm:$0xff]
      %v2151 = vld [vmem:[%s1241 + $0x112] sm:$0xff]
      %v2152 = vpack.c.bf16 %v2137, %v2136
      %v2153 = vpack.c.bf16 %v2139, %v2138
      %v2154 = vpack.c.bf16 %v2141, %v2140
      %v2155 = vpack.c.bf16 %v2143, %v2142
      %v2156 = vpack.c.bf16 %v2145, %v2144
      %v2157 = vpack.c.bf16 %v2147, %v2146
      %v2158 = vpack.c.bf16 %v2149, %v2148
      %v2159 = vpack.c.bf16 %v2151, %v2150
      %2160 = vst.msk [vmem:[#allocation4 + $0x8] sm:$0xff] %vm61, %v2152
      %2161 = vst.msk [vmem:[#allocation4 + $0x18] sm:$0xff] %vm61, %v2153
      %2162 = vst.msk [vmem:[#allocation4 + $0x28] sm:$0xff] %vm61, %v2154
      %2163 = vst.msk [vmem:[#allocation4 + $0x38] sm:$0xff] %vm61, %v2155
      %2164 = vst.msk [vmem:[#allocation4 + $0x48] sm:$0xff] %vm61, %v2156
      %2165 = vst.msk [vmem:[#allocation4 + $0x58] sm:$0xff] %vm61, %v2157
      %2166 = vst.msk [vmem:[#allocation4 + $0x68] sm:$0xff] %vm61, %v2158
      %2167 = vst.msk [vmem:[#allocation4 + $0x78] sm:$0xff] %vm61, %v2159
      %v2168 = vld [vmem:[#allocation4] sm:$0xff]
      %v2169 = vld [vmem:[#allocation4 + $0x8] sm:$0xff]
      %v2170 = vld [vmem:[#allocation4 + $0x10] sm:$0xff]
      %v2171 = vld [vmem:[#allocation4 + $0x18] sm:$0xff]
      %v2172 = vld [vmem:[#allocation4 + $0x20] sm:$0xff]
      %v2173 = vld [vmem:[#allocation4 + $0x28] sm:$0xff]
      %v2174 = vld [vmem:[#allocation4 + $0x30] sm:$0xff]
      %v2175 = vld [vmem:[#allocation4 + $0x38] sm:$0xff]
      %v2176 = vld [vmem:[#allocation4 + $0x40] sm:$0xff]
      %v2177 = vld [vmem:[#allocation4 + $0x48] sm:$0xff]
      %v2178 = vld [vmem:[#allocation4 + $0x50] sm:$0xff]
      %v2179 = vld [vmem:[#allocation4 + $0x58] sm:$0xff]
      %v2180 = vld [vmem:[#allocation4 + $0x60] sm:$0xff]
      %v2181 = vld [vmem:[#allocation4 + $0x68] sm:$0xff]
      %v2182 = vld [vmem:[#allocation4 + $0x70] sm:$0xff]
      %v2183 = vld [vmem:[#allocation4 + $0x78] sm:$0xff]
      %s2184 = smul.addr %s1420, 4
      %s2185 = scalar_lea.vmem %s5, %s2184
      %v2186 = vld [vmem:[%s2185] sm:$0xf]
      %v2187 = vld [vmem:[%s2185 + $0x4] sm:$0xf]
      %v2188 = vld [vmem:[%s2185 + $0x8] sm:$0xf]
      %v2189 = vld [vmem:[%s2185 + $0xc] sm:$0xf]
      %v2190 = vld [vmem:[%s2185 + $0x10] sm:$0xf]
      %v2191 = vld [vmem:[%s2185 + $0x14] sm:$0xf]
      %v2192 = vld [vmem:[%s2185 + $0x18] sm:$0xf]
      %v2193 = vld [vmem:[%s2185 + $0x1c] sm:$0xf]
      %v2194 = vld [vmem:[%s2185 + $0x20] sm:$0xf]
      %v2195 = vld [vmem:[%s2185 + $0x24] sm:$0xf]
      %v2196 = vld [vmem:[%s2185 + $0x28] sm:$0xf]
      %v2197 = vld [vmem:[%s2185 + $0x2c] sm:$0xf]
      %v2198 = vld [vmem:[%s2185 + $0x30] sm:$0xf]
      %v2199 = vld [vmem:[%s2185 + $0x34] sm:$0xf]
      %v2200 = vld [vmem:[%s2185 + $0x38] sm:$0xf]
      %v2201 = vld [vmem:[%s2185 + $0x3c] sm:$0xf]
      %v2202 = vld [vmem:[%s2185 + $0x40] sm:$0xf]
      %v2203 = vld [vmem:[%s2185 + $0x44] sm:$0xf]
      %s2204 = scalar_lea.vmem %s6, %s863
      %v2205 = vld [vmem:[%s2204] sm:$0x1]
      %v2207 = vlaneseq
      %v2208 = vshrl.u32 %v2207, 7
      %v2209 = vsub.s32 0, %v2208
      %v2210 = vrot.slane %v2205, %v2209
      %v2230 = vunpack.c.l.b16 %v2186
      %v2231 = vunpack.c.l.b16 %v2187
      %v2232 = vunpack.c.l.b16 %v2188
      %v2233 = vunpack.c.l.b16 %v2189
      %v2234 = vunpack.c.l.b16 %v2190
      %v2235 = vunpack.c.l.b16 %v2191
      %v2236 = vunpack.c.l.b16 %v2192
      %v2237 = vunpack.c.l.b16 %v2193
      %v2238 = vunpack.c.l.b16 %v2194
      %v2239 = vunpack.c.l.b16 %v2195
      %v2240 = vunpack.c.l.b16 %v2196
      %v2241 = vunpack.c.l.b16 %v2197
      %v2242 = vunpack.c.l.b16 %v2198
      %v2243 = vunpack.c.l.b16 %v2199
      %v2244 = vunpack.c.l.b16 %v2200
      %v2245 = vunpack.c.l.b16 %v2201
      %v2246 = vunpack.c.l.b16 %v2202
      %v2247 = vunpack.c.l.b16 %v2203
      %v2248 = vpack.c.b16 %v2231, %v2230
      %v2249 = vpack.c.b16 %v2233, %v2232
      %v2250 = vpack.c.b16 %v2235, %v2234
      %v2251 = vpack.c.b16 %v2237, %v2236
      %v2252 = vpack.c.b16 %v2239, %v2238
      %v2253 = vpack.c.b16 %v2241, %v2240
      %v2254 = vpack.c.b16 %v2243, %v2242
      %v2255 = vpack.c.b16 %v2245, %v2244
      %v2256 = vpack.c.b16 %v2247, %v2246
      %v2267 = vsel %vm61, %v2169, 0
      %v2270 = vsel %vm61, %v2171, 0
      %v2273 = vsel %vm61, %v2173, 0
      %v2276 = vsel %vm61, %v2175, 0
      %v2279 = vsel %vm61, %v2177, 0
      %v2282 = vsel %vm61, %v2179, 0
      %v2285 = vsel %vm61, %v2181, 0
      %v2288 = vsel %vm61, %v2183, 0
      %2290 = vmatprep.subr.bf16.mxu0 0
      %2291 = vmatpush1.bf16.msra.mxu0 %v2248
      %2292 = vmatprep.subr.bf16.mxu0 0
      %2293 = vmatpush1.bf16.msra.mxu0 %v2249
      %2294 = vmatprep.subr.bf16.mxu0 0
      %2295 = vmatpush1.bf16.msra.mxu0 %v2250
      %2296 = vmatprep.subr.bf16.mxu0 0
      %2297 = vmatpush1.bf16.msra.mxu0 %v2251
      %2298 = vmatprep.subr.bf16.mxu0 0
      %2299 = vmatpush1.bf16.msra.mxu0 %v2252
      %2300 = vmatprep.subr.bf16.mxu0 0
      %2301 = vmatpush1.bf16.msra.mxu0 %v2253
      %2302 = vmatprep.subr.bf16.mxu0 0
      %2303 = vmatpush1.bf16.msra.mxu0 %v2254
      %2304 = vmatprep.subr.bf16.mxu0 0
      %2305 = vmatpush1.bf16.msra.mxu0 %v2255
      %2306 = vmatprep.subr.bf16.mxu0 0
      %2307 = vmatpush1.bf16.msra.mxu0 %v2256
      %2308 = vmatprep.subr.bf16.mxu0 0
      %2309 = vmatpush1.bf16.msra.mxu0 0
      %2310 = vmatprep.subr.bf16.mxu0 0
      %2311 = vmatpush1.bf16.msra.mxu0 0
      %2312 = vmatprep.subr.bf16.mxu0 0
      %2313 = vmatpush1.bf16.msra.mxu0 0
      %2314 = vmatprep.subr.bf16.mxu0 0
      %2315 = vmatpush1.bf16.msra.mxu0 0
      %2316 = vmatprep.subr.bf16.mxu0 0
      %2317 = vmatpush1.bf16.msra.mxu0 0
      %2318 = vmatprep.subr.bf16.mxu0 0
      %2319 = vmatpush1.bf16.msra.mxu0 0
      %2320 = vmatprep.subr.bf16.mxu0 0
      %2321 = vmatpush1.bf16.msra.mxu0 0
      %2322 = vmatprep.mubr.bf16.mxu0 %v2267
      %2323 = vmatmul.mubr.bf16.gmra.mrb[0].mxu0 %v2168
      %v2324 = vpop.f32.mrb[0].mxu0
      %v2325 = vadd.f32 %v2210, %v2324
      %v2326 = vpop.f32.mrb[0].mxu0
      %v2327 = vpop.f32.mrb[0].mxu0
      %v2328 = vadd.f32 %v2210, %v2327
      %v2329 = vpop.f32.mrb[0].mxu0
      %2330 = vmatprep.mubr.bf16.mxu0 %v2270
      %2331 = vmatmul.mubr.bf16.gmra.mrb[0].mxu0 %v2170
      %v2332 = vpop.f32.mrb[0].mxu0
      %v2333 = vadd.f32 %v2210, %v2332
      %v2334 = vpop.f32.mrb[0].mxu0
      %v2335 = vpop.f32.mrb[0].mxu0
      %v2336 = vadd.f32 %v2210, %v2335
      %v2337 = vpop.f32.mrb[0].mxu0
      %2338 = vmatprep.mubr.bf16.mxu0 %v2273
      %2339 = vmatmul.mubr.bf16.gmra.mrb[0].mxu0 %v2172
      %v2340 = vpop.f32.mrb[0].mxu0
      %v2341 = vadd.f32 %v2210, %v2340
      %v2342 = vpop.f32.mrb[0].mxu0
      %v2343 = vpop.f32.mrb[0].mxu0
      %v2344 = vadd.f32 %v2210, %v2343
      %v2345 = vpop.f32.mrb[0].mxu0
      %2346 = vmatprep.mubr.bf16.mxu0 %v2276
      %2347 = vmatmul.mubr.bf16.gmra.mrb[0].mxu0 %v2174
      %v2348 = vpop.f32.mrb[0].mxu0
      %v2349 = vadd.f32 %v2210, %v2348
      %v2350 = vpop.f32.mrb[0].mxu0
      %v2351 = vpop.f32.mrb[0].mxu0
      %v2352 = vadd.f32 %v2210, %v2351
      %v2353 = vpop.f32.mrb[0].mxu0
      %2354 = vmatprep.mubr.bf16.mxu0 %v2279
      %2355 = vmatmul.mubr.bf16.gmra.mrb[0].mxu0 %v2176
      %v2356 = vpop.f32.mrb[0].mxu0
      %v2357 = vadd.f32 %v2210, %v2356
      %v2358 = vpop.f32.mrb[0].mxu0
      %v2359 = vpop.f32.mrb[0].mxu0
      %v2360 = vadd.f32 %v2210, %v2359
      %v2361 = vpop.f32.mrb[0].mxu0
      %2362 = vmatprep.mubr.bf16.mxu0 %v2282
      %2363 = vmatmul.mubr.bf16.gmra.mrb[0].mxu0 %v2178
      %v2364 = vpop.f32.mrb[0].mxu0
      %v2365 = vadd.f32 %v2210, %v2364
      %v2366 = vpop.f32.mrb[0].mxu0
      %v2367 = vpop.f32.mrb[0].mxu0
      %v2368 = vadd.f32 %v2210, %v2367
      %v2369 = vpop.f32.mrb[0].mxu0
      %2370 = vmatprep.mubr.bf16.mxu0 %v2285
      %2371 = vmatmul.mubr.bf16.gmra.mrb[0].mxu0 %v2180
      %v2372 = vpop.f32.mrb[0].mxu0
      %v2373 = vadd.f32 %v2210, %v2372
      %v2374 = vpop.f32.mrb[0].mxu0
      %v2375 = vpop.f32.mrb[0].mxu0
      %v2376 = vadd.f32 %v2210, %v2375
      %v2377 = vpop.f32.mrb[0].mxu0
      %2378 = vmatprep.mubr.bf16.mxu0 %v2288
      %2379 = vmatmul.mubr.bf16.gmra.mrb[0].mxu0 %v2182
      %v2380 = vpop.f32.mrb[0].mxu0
      %v2381 = vadd.f32 %v2210, %v2380
      %v2382 = vpop.f32.mrb[0].mxu0
      %v2383 = vpop.f32.mrb[0].mxu0
      %v2384 = vadd.f32 %v2210, %v2383
      %v2385 = vpop.f32.mrb[0].mxu0
      %2386 = vdwg.mxu0
      %v2387 = vadd.f32 %v2325, %v868
      %v2388 = vadd.f32 %v2328, %v869
      %v2389 = vadd.f32 %v2333, %v870
      %v2390 = vadd.f32 %v2336, %v871
      %v2391 = vadd.f32 %v2341, %v872
      %v2392 = vadd.f32 %v2344, %v873
      %v2393 = vadd.f32 %v2349, %v874
      %v2394 = vadd.f32 %v2352, %v875
      %v2395 = vadd.f32 %v2357, %v876
      %v2396 = vadd.f32 %v2360, %v877
      %v2397 = vadd.f32 %v2365, %v878
      %v2398 = vadd.f32 %v2368, %v879
      %v2399 = vadd.f32 %v2373, %v880
      %v2400 = vadd.f32 %v2376, %v881
      %v2401 = vadd.f32 %v2381, %v882
      %v2402 = vadd.f32 %v2384, %v883
      %v2403 = vmax.f32 %v2387, 0.0
      %v2404 = vmax.f32 %v2388, 0.0
      %v2405 = vmax.f32 %v2389, 0.0
      %v2406 = vmax.f32 %v2390, 0.0
      %v2407 = vmax.f32 %v2391, 0.0
      %v2408 = vmax.f32 %v2392, 0.0
      %v2409 = vmax.f32 %v2393, 0.0
      %v2410 = vmax.f32 %v2394, 0.0
      %v2411 = vmax.f32 %v2395, 0.0
      %v2412 = vmax.f32 %v2396, 0.0
      %v2413 = vmax.f32 %v2397, 0.0
      %v2414 = vmax.f32 %v2398, 0.0
      %v2415 = vmax.f32 %v2399, 0.0
      %v2416 = vmax.f32 %v2400, 0.0
      %v2417 = vmax.f32 %v2401, 0.0
      %v2418 = vmax.f32 %v2402, 0.0
      %2419 = vst.msk [vmem:[%s845 + $0x1] sm:$0xff] %vm61, %v2403
      %2420 = vst.msk [vmem:[%s845 + $0x11] sm:$0xff] %vm61, %v2404
      %2421 = vst.msk [vmem:[%s845 + $0x21] sm:$0xff] %vm61, %v2405
      %2422 = vst.msk [vmem:[%s845 + $0x31] sm:$0xff] %vm61, %v2406
      %2423 = vst.msk [vmem:[%s845 + $0x41] sm:$0xff] %vm61, %v2407
      %2424 = vst.msk [vmem:[%s845 + $0x51] sm:$0xff] %vm61, %v2408
      %2425 = vst.msk [vmem:[%s845 + $0x61] sm:$0xff] %vm61, %v2409
      %2426 = vst.msk [vmem:[%s845 + $0x71] sm:$0xff] %vm61, %v2410
      %2427 = vst.msk [vmem:[%s845 + $0xa1] sm:$0xff] %vm61, %v2411
      %2428 = vst.msk [vmem:[%s845 + $0xb1] sm:$0xff] %vm61, %v2412
      %2429 = vst.msk [vmem:[%s845 + $0xc1] sm:$0xff] %vm61, %v2413
      %2430 = vst.msk [vmem:[%s845 + $0xd1] sm:$0xff] %vm61, %v2414
      %2431 = vst.msk [vmem:[%s845 + $0xe1] sm:$0xff] %vm61, %v2415
      %2432 = vst.msk [vmem:[%s845 + $0xf1] sm:$0xff] %vm61, %v2416
      %2433 = vst.msk [vmem:[%s845 + $0x101] sm:$0xff] %vm61, %v2417
      %2434 = vst.msk [vmem:[%s845 + $0x111] sm:$0xff] %vm61, %v2418
    $region70: #{_lambda_.1} parent=1 // loop_footer
      %s867 = sadd.s32 1, %s863
    $region71: #{_lambda_.1} parent=1 // loop_footer_branch
      %862 = sbr.rel target = $region67
    $region72: #{_lambda_.1} parent=1 // loop_exit
      _
    %v2435 = vpack.c.bf16 %v869, %v868
    %v2436 = vpack.c.bf16 %v871, %v870
    %v2437 = vpack.c.bf16 %v873, %v872
    %v2438 = vpack.c.bf16 %v875, %v874
    %v2439 = vpack.c.bf16 %v877, %v876
    %v2440 = vpack.c.bf16 %v879, %v878
    %v2441 = vpack.c.bf16 %v881, %v880
    %v2442 = vpack.c.bf16 %v883, %v882
    %v2443 = vld [vmem:[%s7] sm:$0xf]
    %v2444 = vld [vmem:[%s7 + $0x4] sm:$0xf]
    %v2445 = vld [vmem:[%s8] sm:$0x1]
    %v2447 = vlaneseq
    %v2448 = vshrl.u32 %v2447, 7
    %v2449 = vsub.s32 0, %v2448
    %v2450 = vrot.slane %v2445, %v2449
    %v2454 = vunpack.c.l.b16 %v2443
    %v2455 = vunpack.c.l.b16 %v2444
    %v2456 = vpack.c.b16 %v2455, %v2454
    %v2459 = vsel %vm61, %v2435, 0
    %v2462 = vsel %vm61, %v2436, 0
    %v2465 = vsel %vm61, %v2437, 0
    %v2468 = vsel %vm61, %v2438, 0
    %v2471 = vsel %vm61, %v2439, 0
    %v2474 = vsel %vm61, %v2440, 0
    %v2477 = vsel %vm61, %v2441, 0
    %v2480 = vsel %vm61, %v2442, 0
    %2482 = vmatprep.subr.bf16.mxu0 0
    %2483 = vmatpush1.bf16.msra.mxu0 %v2456
    %2484 = vmatprep.subr.bf16.mxu0 0
    %2485 = vmatpush1.bf16.msra.mxu0 0
    %2486 = vmatprep.subr.bf16.mxu0 0
    %2487 = vmatpush1.bf16.msra.mxu0 0
    %2488 = vmatprep.subr.bf16.mxu0 0
    %2489 = vmatpush1.bf16.msra.mxu0 0
    %2490 = vmatprep.subr.bf16.mxu0 0
    %2491 = vmatpush1.bf16.msra.mxu0 0
    %2492 = vmatprep.subr.bf16.mxu0 0
    %2493 = vmatpush1.bf16.msra.mxu0 0
    %2494 = vmatprep.subr.bf16.mxu0 0
    %2495 = vmatpush1.bf16.msra.mxu0 0
    %2496 = vmatprep.subr.bf16.mxu0 0
    %2497 = vmatpush1.bf16.msra.mxu0 0
    %2498 = vmatprep.subr.bf16.mxu0 0
    %2499 = vmatpush1.bf16.msra.mxu0 0
    %2500 = vmatprep.subr.bf16.mxu0 0
    %2501 = vmatpush1.bf16.msra.mxu0 0
    %2502 = vmatprep.subr.bf16.mxu0 0
    %2503 = vmatpush1.bf16.msra.mxu0 0
    %2504 = vmatprep.subr.bf16.mxu0 0
    %2505 = vmatpush1.bf16.msra.mxu0 0
    %2506 = vmatprep.subr.bf16.mxu0 0
    %2507 = vmatpush1.bf16.msra.mxu0 0
    %2508 = vmatprep.subr.bf16.mxu0 0
    %2509 = vmatpush1.bf16.msra.mxu0 0
    %2510 = vmatprep.subr.bf16.mxu0 0
    %2511 = vmatpush1.bf16.msra.mxu0 0
    %2512 = vmatprep.subr.bf16.mxu0 0
    %2513 = vmatpush1.bf16.msra.mxu0 0
    %2514 = vmatprep.mubr.bf16.mxu0 0
    %2515 = vmatmul.mubr.bf16.gmra.mrb[0].mxu0 %v2459
    %v2516 = vpop.f32.mrb[0].mxu0
    %v2517 = vadd.f32 %v2450, %v2516
    %v2518 = vpop.f32.mrb[0].mxu0
    %v2519 = vpop.f32.mrb[0].mxu0
    %v2520 = vadd.f32 %v2450, %v2519
    %v2521 = vpop.f32.mrb[0].mxu0
    %2522 = vmatprep.mubr.bf16.mxu0 0
    %2523 = vmatmul.mubr.bf16.gmra.mrb[0].mxu0 %v2462
    %v2524 = vpop.f32.mrb[0].mxu0
    %v2525 = vadd.f32 %v2450, %v2524
    %v2526 = vpop.f32.mrb[0].mxu0
    %v2527 = vpop.f32.mrb[0].mxu0
    %v2528 = vadd.f32 %v2450, %v2527
    %v2529 = vpop.f32.mrb[0].mxu0
    %2530 = vmatprep.mubr.bf16.mxu0 0
    %2531 = vmatmul.mubr.bf16.gmra.mrb[0].mxu0 %v2465
    %v2532 = vpop.f32.mrb[0].mxu0
    %v2533 = vadd.f32 %v2450, %v2532
    %v2534 = vpop.f32.mrb[0].mxu0
    %v2535 = vpop.f32.mrb[0].mxu0
    %v2536 = vadd.f32 %v2450, %v2535
    %v2537 = vpop.f32.mrb[0].mxu0
    %2538 = vmatprep.mubr.bf16.mxu0 0
    %2539 = vmatmul.mubr.bf16.gmra.mrb[0].mxu0 %v2468
    %v2540 = vpop.f32.mrb[0].mxu0
    %v2541 = vadd.f32 %v2450, %v2540
    %v2542 = vpop.f32.mrb[0].mxu0
    %v2543 = vpop.f32.mrb[0].mxu0
    %v2544 = vadd.f32 %v2450, %v2543
    %v2545 = vpop.f32.mrb[0].mxu0
    %2546 = vmatprep.mubr.bf16.mxu0 0
    %2547 = vmatmul.mubr.bf16.gmra.mrb[0].mxu0 %v2471
    %v2548 = vpop.f32.mrb[0].mxu0
    %v2549 = vadd.f32 %v2450, %v2548
    %v2550 = vpop.f32.mrb[0].mxu0
    %v2551 = vpop.f32.mrb[0].mxu0
    %v2552 = vadd.f32 %v2450, %v2551
    %v2553 = vpop.f32.mrb[0].mxu0
    %2554 = vmatprep.mubr.bf16.mxu0 0
    %2555 = vmatmul.mubr.bf16.gmra.mrb[0].mxu0 %v2474
    %v2556 = vpop.f32.mrb[0].mxu0
    %v2557 = vadd.f32 %v2450, %v2556
    %v2558 = vpop.f32.mrb[0].mxu0
    %v2559 = vpop.f32.mrb[0].mxu0
    %v2560 = vadd.f32 %v2450, %v2559
    %v2561 = vpop.f32.mrb[0].mxu0
    %2562 = vmatprep.mubr.bf16.mxu0 0
    %2563 = vmatmul.mubr.bf16.gmra.mrb[0].mxu0 %v2477
    %v2564 = vpop.f32.mrb[0].mxu0
    %v2565 = vadd.f32 %v2450, %v2564
    %v2566 = vpop.f32.mrb[0].mxu0
    %v2567 = vpop.f32.mrb[0].mxu0
    %v2568 = vadd.f32 %v2450, %v2567
    %v2569 = vpop.f32.mrb[0].mxu0
    %2570 = vmatprep.mubr.bf16.mxu0 0
    %2571 = vmatmul.mubr.bf16.gmra.mrb[0].mxu0 %v2480
    %v2572 = vpop.f32.mrb[0].mxu0
    %v2573 = vadd.f32 %v2450, %v2572
    %v2574 = vpop.f32.mrb[0].mxu0
    %v2575 = vpop.f32.mrb[0].mxu0
    %v2576 = vadd.f32 %v2450, %v2575
    %v2577 = vpop.f32.mrb[0].mxu0
    %2578 = vdwg.mxu0
    %v2579 = vmax.f32 %v2517, 0.0
    %v2580 = vmax.f32 %v2520, 0.0
    %v2581 = vmax.f32 %v2525, 0.0
    %v2582 = vmax.f32 %v2528, 0.0
    %v2583 = vmax.f32 %v2533, 0.0
    %v2584 = vmax.f32 %v2536, 0.0
    %v2585 = vmax.f32 %v2541, 0.0
    %v2586 = vmax.f32 %v2544, 0.0
    %v2587 = vmax.f32 %v2549, 0.0
    %v2588 = vmax.f32 %v2552, 0.0
    %v2589 = vmax.f32 %v2557, 0.0
    %v2590 = vmax.f32 %v2560, 0.0
    %v2591 = vmax.f32 %v2565, 0.0
    %v2592 = vmax.f32 %v2568, 0.0
    %v2593 = vmax.f32 %v2573, 0.0
    %v2594 = vmax.f32 %v2576, 0.0
    %v2595 = vpack.c.bf16 %v2580, %v2579
    %v2596 = vpack.c.bf16 %v2582, %v2581
    %v2597 = vpack.c.bf16 %v2584, %v2583
    %v2598 = vpack.c.bf16 %v2586, %v2585
    %v2599 = vpack.c.bf16 %v2588, %v2587
    %v2600 = vpack.c.bf16 %v2590, %v2589
    %v2601 = vpack.c.bf16 %v2592, %v2591
    %v2602 = vpack.c.bf16 %v2594, %v2593
    %v2603 = vunpack.c.l.bf16 %v2595
    %v2604 = vunpack.c.h.bf16 %v2595
    %v2605 = vunpack.c.l.bf16 %v2596
    %v2606 = vunpack.c.h.bf16 %v2596
    %v2607 = vunpack.c.l.bf16 %v2597
    %v2608 = vunpack.c.h.bf16 %v2597
    %v2609 = vunpack.c.l.bf16 %v2598
    %v2610 = vunpack.c.h.bf16 %v2598
    %v2611 = vunpack.c.l.bf16 %v2599
    %v2612 = vunpack.c.h.bf16 %v2599
    %v2613 = vunpack.c.l.bf16 %v2600
    %v2614 = vunpack.c.h.bf16 %v2600
    %v2615 = vunpack.c.l.bf16 %v2601
    %v2616 = vunpack.c.h.bf16 %v2601
    %v2617 = vunpack.c.l.bf16 %v2602
    %v2618 = vunpack.c.h.bf16 %v2602
    %v2619 = vld [vmem:[%s9] sm:$0xf]
    %v2620 = vld [vmem:[%s9 + $0x4] sm:$0xf]
    %v2621 = vld [vmem:[%s9 + $0x8] sm:$0xf]
    %v2622 = vld [vmem:[%s9 + $0xc] sm:$0xf]
    %v2623 = vld [vmem:[%s9 + $0x10] sm:$0xf]
    %v2624 = vld [vmem:[%s9 + $0x14] sm:$0xf]
    %v2625 = vld [vmem:[%s9 + $0x18] sm:$0xf]
    %v2626 = vld [vmem:[%s9 + $0x1c] sm:$0xf]
    %v2627 = vld [vmem:[%s9 + $0x20] sm:$0xf]
    %v2628 = vld [vmem:[%s9 + $0x24] sm:$0xf]
    %v2629 = vld [vmem:[%s9 + $0x28] sm:$0xf]
    %v2630 = vld [vmem:[%s9 + $0x2c] sm:$0xf]
    %v2631 = vld [vmem:[%s9 + $0x30] sm:$0xf]
    %v2632 = vld [vmem:[%s9 + $0x34] sm:$0xf]
    %v2633 = vld [vmem:[%s9 + $0x38] sm:$0xf]
    %v2634 = vld [vmem:[%s9 + $0x3c] sm:$0xf]
    %v2635 = vunpack.c.l.bf16 %v2619
    %v2636 = vunpack.c.l.bf16 %v2620
    %v2637 = vunpack.c.l.bf16 %v2621
    %v2638 = vunpack.c.l.bf16 %v2622
    %v2639 = vunpack.c.l.bf16 %v2623
    %v2640 = vunpack.c.l.bf16 %v2624
    %v2641 = vunpack.c.l.bf16 %v2625
    %v2642 = vunpack.c.l.bf16 %v2626
    %v2643 = vunpack.c.l.bf16 %v2627
    %v2644 = vunpack.c.l.bf16 %v2628
    %v2645 = vunpack.c.l.bf16 %v2629
    %v2646 = vunpack.c.l.bf16 %v2630
    %v2647 = vunpack.c.l.bf16 %v2631
    %v2648 = vunpack.c.l.bf16 %v2632
    %v2649 = vunpack.c.l.bf16 %v2633
    %v2650 = vunpack.c.l.bf16 %v2634
    %2652 = vset.pattern.permute.xlu0 0
    %2653 = vperm.xlu0 %2652, %v2603
    %v2654 = vpop.permute.xlu0 %2653
    %2657 = vset.pattern.permute.xlu0 0
    %2658 = vperm.xlu0 %2657, %v2604
    %v2659 = vpop.permute.xlu0 %2658
    %2662 = vset.pattern.permute.xlu0 0
    %2663 = vperm.xlu0 %2662, %v2605
    %v2664 = vpop.permute.xlu0 %2663
    %2667 = vset.pattern.permute.xlu0 0
    %2668 = vperm.xlu0 %2667, %v2606
    %v2669 = vpop.permute.xlu0 %2668
    %2672 = vset.pattern.permute.xlu0 0
    %2673 = vperm.xlu0 %2672, %v2607
    %v2674 = vpop.permute.xlu0 %2673
    %2677 = vset.pattern.permute.xlu0 0
    %2678 = vperm.xlu0 %2677, %v2608
    %v2679 = vpop.permute.xlu0 %2678
    %2682 = vset.pattern.permute.xlu0 0
    %2683 = vperm.xlu0 %2682, %v2609
    %v2684 = vpop.permute.xlu0 %2683
    %2687 = vset.pattern.permute.xlu0 0
    %2688 = vperm.xlu0 %2687, %v2610
    %v2689 = vpop.permute.xlu0 %2688
    %2692 = vset.pattern.permute.xlu0 0
    %2693 = vperm.xlu0 %2692, %v2611
    %v2694 = vpop.permute.xlu0 %2693
    %2697 = vset.pattern.permute.xlu0 0
    %2698 = vperm.xlu0 %2697, %v2612
    %v2699 = vpop.permute.xlu0 %2698
    %2702 = vset.pattern.permute.xlu0 0
    %2703 = vperm.xlu0 %2702, %v2613
    %v2704 = vpop.permute.xlu0 %2703
    %2707 = vset.pattern.permute.xlu0 0
    %2708 = vperm.xlu0 %2707, %v2614
    %v2709 = vpop.permute.xlu0 %2708
    %2712 = vset.pattern.permute.xlu0 0
    %2713 = vperm.xlu0 %2712, %v2615
    %v2714 = vpop.permute.xlu0 %2713
    %2717 = vset.pattern.permute.xlu0 0
    %2718 = vperm.xlu0 %2717, %v2616
    %v2719 = vpop.permute.xlu0 %2718
    %2722 = vset.pattern.permute.xlu0 0
    %2723 = vperm.xlu0 %2722, %v2617
    %v2724 = vpop.permute.xlu0 %2723
    %2727 = vset.pattern.permute.xlu0 0
    %2728 = vperm.xlu0 %2727, %v2618
    %v2729 = vpop.permute.xlu0 %2728
    %v2731 = vmul.f32 %v2654, %v2635
    %v2732 = vmul.f32 %v2659, %v2636
    %v2733 = vmul.f32 %v2664, %v2637
    %v2734 = vmul.f32 %v2669, %v2638
    %v2735 = vmul.f32 %v2674, %v2639
    %v2736 = vmul.f32 %v2679, %v2640
    %v2737 = vmul.f32 %v2684, %v2641
    %v2738 = vmul.f32 %v2689, %v2642
    %v2739 = vmul.f32 %v2694, %v2643
    %v2740 = vmul.f32 %v2699, %v2644
    %v2741 = vmul.f32 %v2704, %v2645
    %v2742 = vmul.f32 %v2709, %v2646
    %v2743 = vmul.f32 %v2714, %v2647
    %v2744 = vmul.f32 %v2719, %v2648
    %v2745 = vmul.f32 %v2724, %v2649
    %v2746 = vmul.f32 %v2729, %v2650
    %v2747 = vld [vmem:[%s10] sm:$0xf]
    %v2748 = vld [vmem:[%s10 + $0x4] sm:$0xf]
    %v2749 = vld [vmem:[%s10 + $0x8] sm:$0xf]
    %v2750 = vld [vmem:[%s10 + $0xc] sm:$0xf]
    %v2751 = vld [vmem:[%s10 + $0x10] sm:$0xf]
    %v2752 = vld [vmem:[%s10 + $0x14] sm:$0xf]
    %v2753 = vld [vmem:[%s10 + $0x18] sm:$0xf]
    %v2754 = vld [vmem:[%s10 + $0x1c] sm:$0xf]
    %v2755 = vld [vmem:[%s10 + $0x20] sm:$0xf]
    %v2756 = vld [vmem:[%s10 + $0x24] sm:$0xf]
    %v2757 = vld [vmem:[%s10 + $0x28] sm:$0xf]
    %v2758 = vld [vmem:[%s10 + $0x2c] sm:$0xf]
    %v2759 = vld [vmem:[%s10 + $0x30] sm:$0xf]
    %v2760 = vld [vmem:[%s10 + $0x34] sm:$0xf]
    %v2761 = vld [vmem:[%s10 + $0x38] sm:$0xf]
    %v2762 = vld [vmem:[%s10 + $0x3c] sm:$0xf]
    %v2763 = vunpack.c.l.bf16 %v2747
    %v2764 = vunpack.c.l.bf16 %v2748
    %v2765 = vunpack.c.l.bf16 %v2749
    %v2766 = vunpack.c.l.bf16 %v2750
    %v2767 = vunpack.c.l.bf16 %v2751
    %v2768 = vunpack.c.l.bf16 %v2752
    %v2769 = vunpack.c.l.bf16 %v2753
    %v2770 = vunpack.c.l.bf16 %v2754
    %v2771 = vunpack.c.l.bf16 %v2755
    %v2772 = vunpack.c.l.bf16 %v2756
    %v2773 = vunpack.c.l.bf16 %v2757
    %v2774 = vunpack.c.l.bf16 %v2758
    %v2775 = vunpack.c.l.bf16 %v2759
    %v2776 = vunpack.c.l.bf16 %v2760
    %v2777 = vunpack.c.l.bf16 %v2761
    %v2778 = vunpack.c.l.bf16 %v2762
    %2779 = vset.pattern.permute.xlu0 1
    %2780 = vperm.xlu0 %2779, %v2603
    %v2781 = vpop.permute.xlu0 %2780
    %2783 = vset.pattern.permute.xlu0 1
    %2784 = vperm.xlu0 %2783, %v2604
    %v2785 = vpop.permute.xlu0 %2784
    %2787 = vset.pattern.permute.xlu0 1
    %2788 = vperm.xlu0 %2787, %v2605
    %v2789 = vpop.permute.xlu0 %2788
    %2791 = vset.pattern.permute.xlu0 1
    %2792 = vperm.xlu0 %2791, %v2606
    %v2793 = vpop.permute.xlu0 %2792
    %2795 = vset.pattern.permute.xlu0 1
    %2796 = vperm.xlu0 %2795, %v2607
    %v2797 = vpop.permute.xlu0 %2796
    %2799 = vset.pattern.permute.xlu0 1
    %2800 = vperm.xlu0 %2799, %v2608
    %v2801 = vpop.permute.xlu0 %2800
    %2803 = vset.pattern.permute.xlu0 1
    %2804 = vperm.xlu0 %2803, %v2609
    %v2805 = vpop.permute.xlu0 %2804
    %2807 = vset.pattern.permute.xlu0 1
    %2808 = vperm.xlu0 %2807, %v2610
    %v2809 = vpop.permute.xlu0 %2808
    %2811 = vset.pattern.permute.xlu0 1
    %2812 = vperm.xlu0 %2811, %v2611
    %v2813 = vpop.permute.xlu0 %2812
    %2815 = vset.pattern.permute.xlu0 1
    %2816 = vperm.xlu0 %2815, %v2612
    %v2817 = vpop.permute.xlu0 %2816
    %2819 = vset.pattern.permute.xlu0 1
    %2820 = vperm.xlu0 %2819, %v2613
    %v2821 = vpop.permute.xlu0 %2820
    %2823 = vset.pattern.permute.xlu0 1
    %2824 = vperm.xlu0 %2823, %v2614
    %v2825 = vpop.permute.xlu0 %2824
    %2827 = vset.pattern.permute.xlu0 1
    %2828 = vperm.xlu0 %2827, %v2615
    %v2829 = vpop.permute.xlu0 %2828
    %2831 = vset.pattern.permute.xlu0 1
    %2832 = vperm.xlu0 %2831, %v2616
    %v2833 = vpop.permute.xlu0 %2832
    %2835 = vset.pattern.permute.xlu0 1
    %2836 = vperm.xlu0 %2835, %v2617
    %v2837 = vpop.permute.xlu0 %2836
    %2839 = vset.pattern.permute.xlu0 1
    %2840 = vperm.xlu0 %2839, %v2618
    %v2841 = vpop.permute.xlu0 %2840
    %v2843 = vmul.f32 %v2781, %v2763
    %v2844 = vmul.f32 %v2785, %v2764
    %v2845 = vmul.f32 %v2789, %v2765
    %v2846 = vmul.f32 %v2793, %v2766
    %v2847 = vmul.f32 %v2797, %v2767
    %v2848 = vmul.f32 %v2801, %v2768
    %v2849 = vmul.f32 %v2805, %v2769
    %v2850 = vmul.f32 %v2809, %v2770
    %v2851 = vmul.f32 %v2813, %v2771
    %v2852 = vmul.f32 %v2817, %v2772
    %v2853 = vmul.f32 %v2821, %v2773
    %v2854 = vmul.f32 %v2825, %v2774
    %v2855 = vmul.f32 %v2829, %v2775
    %v2856 = vmul.f32 %v2833, %v2776
    %v2857 = vmul.f32 %v2837, %v2777
    %v2858 = vmul.f32 %v2841, %v2778
    %v2859 = vadd.f32 %v2731, %v2843
    %v2860 = vadd.f32 %v2732, %v2844
    %v2861 = vadd.f32 %v2733, %v2845
    %v2862 = vadd.f32 %v2734, %v2846
    %v2863 = vadd.f32 %v2735, %v2847
    %v2864 = vadd.f32 %v2736, %v2848
    %v2865 = vadd.f32 %v2737, %v2849
    %v2866 = vadd.f32 %v2738, %v2850
    %v2867 = vadd.f32 %v2739, %v2851
    %v2868 = vadd.f32 %v2740, %v2852
    %v2869 = vadd.f32 %v2741, %v2853
    %v2870 = vadd.f32 %v2742, %v2854
    %v2871 = vadd.f32 %v2743, %v2855
    %v2872 = vadd.f32 %v2744, %v2856
    %v2873 = vadd.f32 %v2745, %v2857
    %v2874 = vadd.f32 %v2746, %v2858
    %v2875 = vld [vmem:[%s12] sm:$0xf]
    %v2876 = vld [vmem:[%s12 + $0x4] sm:$0xf]
    %v2877 = vld [vmem:[%s12 + $0x8] sm:$0xf]
    %v2878 = vld [vmem:[%s12 + $0xc] sm:$0xf]
    %v2879 = vld [vmem:[%s12 + $0x10] sm:$0xf]
    %v2880 = vld [vmem:[%s12 + $0x14] sm:$0xf]
    %v2881 = vld [vmem:[%s12 + $0x18] sm:$0xf]
    %v2882 = vld [vmem:[%s12 + $0x1c] sm:$0xf]
    %v2883 = vld [vmem:[%s12 + $0x20] sm:$0xf]
    %v2884 = vld [vmem:[%s12 + $0x24] sm:$0xf]
    %v2885 = vld [vmem:[%s12 + $0x28] sm:$0xf]
    %v2886 = vld [vmem:[%s12 + $0x2c] sm:$0xf]
    %v2887 = vld [vmem:[%s12 + $0x30] sm:$0xf]
    %v2888 = vld [vmem:[%s12 + $0x34] sm:$0xf]
    %v2889 = vld [vmem:[%s12 + $0x38] sm:$0xf]
    %v2890 = vld [vmem:[%s12 + $0x3c] sm:$0xf]
    %v2891 = vunpack.c.l.bf16 %v2875
    %v2892 = vunpack.c.l.bf16 %v2876
    %v2893 = vunpack.c.l.bf16 %v2877
    %v2894 = vunpack.c.l.bf16 %v2878
    %v2895 = vunpack.c.l.bf16 %v2879
    %v2896 = vunpack.c.l.bf16 %v2880
    %v2897 = vunpack.c.l.bf16 %v2881
    %v2898 = vunpack.c.l.bf16 %v2882
    %v2899 = vunpack.c.l.bf16 %v2883
    %v2900 = vunpack.c.l.bf16 %v2884
    %v2901 = vunpack.c.l.bf16 %v2885
    %v2902 = vunpack.c.l.bf16 %v2886
    %v2903 = vunpack.c.l.bf16 %v2887
    %v2904 = vunpack.c.l.bf16 %v2888
    %v2905 = vunpack.c.l.bf16 %v2889
    %v2906 = vunpack.c.l.bf16 %v2890
    %2907 = vset.pattern.permute.xlu0 2
    %2908 = vperm.xlu0 %2907, %v2603
    %v2909 = vpop.permute.xlu0 %2908
    %2911 = vset.pattern.permute.xlu0 2
    %2912 = vperm.xlu0 %2911, %v2604
    %v2913 = vpop.permute.xlu0 %2912
    %2915 = vset.pattern.permute.xlu0 2
    %2916 = vperm.xlu0 %2915, %v2605
    %v2917 = vpop.permute.xlu0 %2916
    %2919 = vset.pattern.permute.xlu0 2
    %2920 = vperm.xlu0 %2919, %v2606
    %v2921 = vpop.permute.xlu0 %2920
    %2923 = vset.pattern.permute.xlu0 2
    %2924 = vperm.xlu0 %2923, %v2607
    %v2925 = vpop.permute.xlu0 %2924
    %2927 = vset.pattern.permute.xlu0 2
    %2928 = vperm.xlu0 %2927, %v2608
    %v2929 = vpop.permute.xlu0 %2928
    %2931 = vset.pattern.permute.xlu0 2
    %2932 = vperm.xlu0 %2931, %v2609
    %v2933 = vpop.permute.xlu0 %2932
    %2935 = vset.pattern.permute.xlu0 2
    %2936 = vperm.xlu0 %2935, %v2610
    %v2937 = vpop.permute.xlu0 %2936
    %2939 = vset.pattern.permute.xlu0 2
    %2940 = vperm.xlu0 %2939, %v2611
    %v2941 = vpop.permute.xlu0 %2940
    %2943 = vset.pattern.permute.xlu0 2
    %2944 = vperm.xlu0 %2943, %v2612
    %v2945 = vpop.permute.xlu0 %2944
    %2947 = vset.pattern.permute.xlu0 2
    %2948 = vperm.xlu0 %2947, %v2613
    %v2949 = vpop.permute.xlu0 %2948
    %2951 = vset.pattern.permute.xlu0 2
    %2952 = vperm.xlu0 %2951, %v2614
    %v2953 = vpop.permute.xlu0 %2952
    %2955 = vset.pattern.permute.xlu0 2
    %2956 = vperm.xlu0 %2955, %v2615
    %v2957 = vpop.permute.xlu0 %2956
    %2959 = vset.pattern.permute.xlu0 2
    %2960 = vperm.xlu0 %2959, %v2616
    %v2961 = vpop.permute.xlu0 %2960
    %2963 = vset.pattern.permute.xlu0 2
    %2964 = vperm.xlu0 %2963, %v2617
    %v2965 = vpop.permute.xlu0 %2964
    %2967 = vset.pattern.permute.xlu0 2
    %2968 = vperm.xlu0 %2967, %v2618
    %v2969 = vpop.permute.xlu0 %2968
    %v2971 = vmul.f32 %v2909, %v2891
    %v2972 = vmul.f32 %v2913, %v2892
    %v2973 = vmul.f32 %v2917, %v2893
    %v2974 = vmul.f32 %v2921, %v2894
    %v2975 = vmul.f32 %v2925, %v2895
    %v2976 = vmul.f32 %v2929, %v2896
    %v2977 = vmul.f32 %v2933, %v2897
    %v2978 = vmul.f32 %v2937, %v2898
    %v2979 = vmul.f32 %v2941, %v2899
    %v2980 = vmul.f32 %v2945, %v2900
    %v2981 = vmul.f32 %v2949, %v2901
    %v2982 = vmul.f32 %v2953, %v2902
    %v2983 = vmul.f32 %v2957, %v2903
    %v2984 = vmul.f32 %v2961, %v2904
    %v2985 = vmul.f32 %v2965, %v2905
    %v2986 = vmul.f32 %v2969, %v2906
    %v2987 = vadd.f32 %v2859, %v2860
    %v2988 = vadd.f32 %v2987, %v2861
    %v2989 = vadd.f32 %v2988, %v2862
    %v2990 = vadd.f32 %v2989, %v2863
    %v2991 = vadd.f32 %v2990, %v2864
    %v2992 = vadd.f32 %v2991, %v2865
    %v2993 = vadd.f32 %v2992, %v2866
    %v2994 = vrot.slane %v2993, 4
    %v2995 = vadd.f32 %v2993, %v2994
    %v2996 = vrot.slane %v2995, 2
    %v2997 = vadd.f32 %v2995, %v2996
    %v2998 = vrot.slane %v2997, 1
    %v2999 = vadd.f32 %v2997, %v2998
    %v3000 = vsel %vm61, %v2971, 0.0
    %v3001 = vsel %vm61, %v2972, 0.0
    %v3002 = vadd.f32 %v3000, %v3001
    %v3003 = vsel %vm61, %v2973, 0.0
    %v3004 = vadd.f32 %v3002, %v3003
    %v3005 = vsel %vm61, %v2974, 0.0
    %v3006 = vadd.f32 %v3004, %v3005
    %v3007 = vsel %vm61, %v2975, 0.0
    %v3008 = vadd.f32 %v3006, %v3007
    %v3009 = vsel %vm61, %v2976, 0.0
    %v3010 = vadd.f32 %v3008, %v3009
    %v3011 = vsel %vm61, %v2977, 0.0
    %v3012 = vadd.f32 %v3010, %v3011
    %v3013 = vsel %vm61, %v2978, 0.0
    %v3014 = vadd.f32 %v3012, %v3013
    %v3015 = vrot.slane %v3014, 4
    %v3016 = vadd.f32 %v3014, %v3015
    %v3017 = vrot.slane %v3016, 2
    %v3018 = vadd.f32 %v3016, %v3017
    %v3019 = vrot.slane %v3018, 1
    %v3020 = vadd.f32 %v3018, %v3019
    %v3021 = vadd.f32 %v2867, %v2868
    %v3022 = vadd.f32 %v3021, %v2869
    %v3023 = vadd.f32 %v3022, %v2870
    %v3024 = vadd.f32 %v3023, %v2871
    %v3025 = vadd.f32 %v3024, %v2872
    %v3026 = vadd.f32 %v3025, %v2873
    %v3027 = vadd.f32 %v3026, %v2874
    %v3028 = vrot.slane %v3027, 4
    %v3029 = vadd.f32 %v3027, %v3028
    %v3030 = vrot.slane %v3029, 2
    %v3031 = vadd.f32 %v3029, %v3030
    %v3032 = vrot.slane %v3031, 1
    %v3033 = vadd.f32 %v3031, %v3032
    %v3034 = vsel %vm61, %v2979, 0.0
    %v3035 = vsel %vm61, %v2980, 0.0
    %v3036 = vadd.f32 %v3034, %v3035
    %v3037 = vsel %vm61, %v2981, 0.0
    %v3038 = vadd.f32 %v3036, %v3037
    %v3039 = vsel %vm61, %v2982, 0.0
    %v3040 = vadd.f32 %v3038, %v3039
    %v3041 = vsel %vm61, %v2983, 0.0
    %v3042 = vadd.f32 %v3040, %v3041
    %v3043 = vsel %vm61, %v2984, 0.0
    %v3044 = vadd.f32 %v3042, %v3043
    %v3045 = vsel %vm61, %v2985, 0.0
    %v3046 = vadd.f32 %v3044, %v3045
    %v3047 = vsel %vm61, %v2986, 0.0
    %v3048 = vadd.f32 %v3046, %v3047
    %v3049 = vrot.slane %v3048, 4
    %v3050 = vadd.f32 %v3048, %v3049
    %v3051 = vrot.slane %v3050, 2
    %v3052 = vadd.f32 %v3050, %v3051
    %v3053 = vrot.slane %v3052, 1
    %v3054 = vadd.f32 %v3052, %v3053
    %vm3055 = vcmask 1040384
    %v3056 = vsel %vm3055, %v2999, %v3033
    %v3057 = vld [vmem:[%s11] sm:$0x1]
    %v3059 = vlaneseq
    %v3060 = vshrl.u32 %v3059, 7
    %v3061 = vsub.s32 0, %v3060
    %v3062 = vrot.slane %v3057, %v3061
    %v3064 = vadd.f32 %v3056, %v3062
    %3065 = vst [vmem:[#allocation6] sm:$0x3] %v3064
    %v3066 = vsel %vm728, %v3064, -inf
    %3067 = vmax.xlane.f32.xlu0 %v3066
    %v3068 = vpop.xlane.xlu0 %3067
    %v3069 = vsub.f32 %v3064, %v3068
    %v3070 = vmul.f32 %v3069, 1.442695
    %v3071 = vpow.pop %v3070
    %v3072 = vsel %vm728, %v3071, 0.0
    %3073 = vadd.xlane.f32.xlu0 %v3072
    %v3074 = vpop.xlane.xlu0 %3073
    %v3075 = vrcp.pop %v3074
    %v3076 = vmul.f32 %v3071, %v3075
    %3077 = vst [vmem:[#allocation8] sm:$0x3] %v3076
    %v3078 = vsel %vm3055, %v3020, %v3054
    %v3079 = vld [vmem:[%s13] sm:$0x1]
    %v3081 = vlaneseq
    %v3082 = vshrl.u32 %v3081, 7
    %v3083 = vsub.s32 0, %v3082
    %v3084 = vrot.slane %v3079, %v3083
    %v3086 = vadd.f32 %v3078, %v3084
    %v3087 = vmax.f32 %v3086, 0.0
    %v3088 = vpack.c.bf16 %v3087, %v3087
    %v3089 = vld [vmem:[%s14] sm:$0xf]
    %v3090 = vld [vmem:[%s14 + $0x4] sm:$0xf]
    %v3091 = vld [vmem:[#allocation5] sm:$0x1]
    %v3093 = vlaneseq
    %v3094 = vshrl.u32 %v3093, 7
    %v3095 = vsub.s32 0, %v3094
    %v3096 = vrot.slane %v3091, %v3095
    %v3100 = vunpack.c.l.b16 %v3089
    %v3101 = vunpack.c.l.b16 %v3090
    %v3102 = vpack.c.b16 %v3101, %v3100
    %v3105 = vsel %vm61, %v3088, 0
    %3107 = vmatprep.subr.bf16.mxu0 0
    %3108 = vmatpush1.bf16.msra.mxu0 %v3102
    %3109 = vmatprep.subr.bf16.mxu0 0
    %3110 = vmatpush1.bf16.msra.mxu0 0
    %3111 = vmatprep.subr.bf16.mxu0 0
    %3112 = vmatpush1.bf16.msra.mxu0 0
    %3113 = vmatprep.subr.bf16.mxu0 0
    %3114 = vmatpush1.bf16.msra.mxu0 0
    %3115 = vmatprep.subr.bf16.mxu0 0
    %3116 = vmatpush1.bf16.msra.mxu0 0
    %3117 = vmatprep.subr.bf16.mxu0 0
    %3118 = vmatpush1.bf16.msra.mxu0 0
    %3119 = vmatprep.subr.bf16.mxu0 0
    %3120 = vmatpush1.bf16.msra.mxu0 0
    %3121 = vmatprep.subr.bf16.mxu0 0
    %3122 = vmatpush1.bf16.msra.mxu0 0
    %3123 = vmatprep.subr.bf16.mxu0 0
    %3124 = vmatpush1.bf16.msra.mxu0 0
    %3125 = vmatprep.subr.bf16.mxu0 0
    %3126 = vmatpush1.bf16.msra.mxu0 0
    %3127 = vmatprep.subr.bf16.mxu0 0
    %3128 = vmatpush1.bf16.msra.mxu0 0
    %3129 = vmatprep.subr.bf16.mxu0 0
    %3130 = vmatpush1.bf16.msra.mxu0 0
    %3131 = vmatprep.subr.bf16.mxu0 0
    %3132 = vmatpush1.bf16.msra.mxu0 0
    %3133 = vmatprep.subr.bf16.mxu0 0
    %3134 = vmatpush1.bf16.msra.mxu0 0
    %3135 = vmatprep.subr.bf16.mxu0 0
    %3136 = vmatpush1.bf16.msra.mxu0 0
    %3137 = vmatprep.subr.bf16.mxu0 0
    %3138 = vmatpush1.bf16.msra.mxu0 0
    %3139 = vmatprep.mubr.bf16.mxu0 0
    %3140 = vmatmul.mubr.bf16.gmra.mrb[0].mxu0 %v3105
    %v3141 = vpop.f32.mrb[0].mxu0
    %v3142 = vadd.f32 %v3096, %v3141
    %v3143 = vpop.f32.mrb[0].mxu0
    %v3144 = vpop.f32.mrb[0].mxu0
    %v3145 = vpop.f32.mrb[0].mxu0
    %3146 = vdwg.mxu0
    %v3147 = vtanh.pop %v3142
    %vm3148 = vcmask 1024
    %3149 = vst.msk [vmem:[%s18] sm:$0x3] %vm3148, %v3147
    // Predicated region
    $region73: #{_lambda_.1} parent=1 // pred_check
      _
    $region74: #{_lambda_.1} parent=1 // pred_check_branch
      %3151 = sbr.rel (0) target = $region76
    $region75: #{_lambda_.1} parent=1 // pred_region
      %s3153 = ssub.s32 32, 32
      %3154 = vsyncadd [#allocation7], %s3153
      %s3156 = sshll.u32 [#allocation6], 4
      %s3157 = int_to_ptr.vmem [resolvable:$true] %s3156
      %3159 = dma.vmem_to_hbm [thread:$0]  %s3157, 32, %s16, [#allocation7]
    $region76: #{_lambda_.1} parent=1 // pred_fallthru
      _
    // Predicated region
    $region77: #{_lambda_.1} parent=1 // pred_check
      _
    $region78: #{_lambda_.1} parent=1 // pred_check_branch
      %3161 = sbr.rel (0) target = $region80
    $region79: #{_lambda_.1} parent=1 // pred_region
      %s3163 = ssub.s32 32, 32
      %3164 = vsyncadd [#allocation9], %s3163
      %s3166 = sshll.u32 [#allocation8], 4
      %s3167 = int_to_ptr.vmem [resolvable:$true] %s3166
      %3169 = dma.vmem_to_hbm [thread:$0]  %s3167, 32, %s17, [#allocation9]
    $region80: #{_lambda_.1} parent=1 // pred_fallthru
      _
    // Predicated region
    $region81: #{_lambda_.1} parent=1 // pred_check
      _
    $region82: #{_lambda_.1} parent=1 // pred_check_branch
      %3171 = sbr.rel (0) target = $region84
    $region83: #{_lambda_.1} parent=1 // pred_region
      _
    $region84: #{_lambda_.1} parent=1 // pred_fallthru
      _
    // Predicated region
    $region85: #{_lambda_.1} parent=1 // pred_check
      _
    $region86: #{_lambda_.1} parent=1 // pred_check_branch
      %3173 = sbr.rel (0) target = $region88
    $region87: #{_lambda_.1} parent=1 // pred_region
      %3174 = dma.done [#allocation7], 32
    $region88: #{_lambda_.1} parent=1 // pred_fallthru
      _
    // Predicated region
    $region89: #{_lambda_.1} parent=1 // pred_check
      _
    $region90: #{_lambda_.1} parent=1 // pred_check_branch
      %3176 = sbr.rel (0) target = $region92
    $region91: #{_lambda_.1} parent=1 // pred_region
      %3177 = dma.done [#allocation9], 32
    $region92: #{_lambda_.1} parent=1 // pred_fallthru
      _
    // Predicated region
    $region93: #{_lambda_.1} parent=1 // pred_check
      _
    $region94: #{_lambda_.1} parent=1 // pred_check_branch
      %3179 = sbr.rel (0) target = $region96
    $region95: #{_lambda_.1} parent=1 // pred_region
      _
    $region96: #{_lambda_.1} parent=1 // pred_fallthru
      _
    %3180 = vsyncpa [#allocation7], 1
    %3181 = vsyncpa [#allocation9], 1

</llo_original>
